<compile_context>
chip_gen: v5e
topology: v5e:2x2
jax: 0.10.0
libtpu: 0.0.40
codegen_flags: <defaults>
</compile_context>

<pallas_src>
import functools
import math

import jax
import jax.numpy as jnp
import numpy as np
from jax.experimental import pallas as pl
from jax.experimental.pallas import tpu as pltpu

_BN_EPS = 1e-5
_VMEM = pl.BlockSpec(memory_space=pltpu.MemorySpace.VMEM)
_TAPS = tuple((oy, ox) for oy in (-1, 0, 1) for ox in (-1, 0, 1))


def _round_up(x, k):
    return (x + k - 1) // k * k


# --------------------------- tap edge masks (host) ----------------------------

@functools.lru_cache(maxsize=None)
def _tap_masks_np(n, h, w):
    """mask[k, 0, m] = 1 iff lane m = (img, y, x) has a valid (dy, dx) neighbour
    inside the same image for tap k (zero padding elsewhere)."""
    m = n * h * w
    r = np.arange(m)
    y = (r // w) % h
    x = r % w
    out = np.zeros((9, 1, m), np.float32)
    for k, (oy, ox) in enumerate(_TAPS):
        valid = (y + oy >= 0) & (y + oy < h) & (x + ox >= 0) & (x + ox < w)
        out[k, 0, valid] = 1.0
    return out


# ------------------------------- Pallas kernels --------------------------------

def _bn_act(z, g, b, relu, eps, residual=None):
    # Training-mode BatchNorm: per-channel (row) stats over all N*H*W lanes,
    # computed in a single pass (two independent lane reductions).
    inv_m = 1.0 / z.shape[1]
    mean = jnp.sum(z, axis=1, keepdims=True) * inv_m
    ex2 = jnp.sum(z * z, axis=1, keepdims=True) * inv_m
    var = jnp.maximum(ex2 - mean * mean, 0.0)          # biased, as PyTorch
    y = g * (z - mean) * jax.lax.rsqrt(var + eps) + b
    if residual is not None:
        y = y + residual
    if relu:
        y = jnp.maximum(y, 0.0)
    return y


def _trunk_kernel(*refs, res_num, eps, w):
    """First conv + res_num residual blocks + fused policy/value 1x1 head conv.

    Activation layout: (C, M) with M = N*H*W on lanes.
    refs = (masks, x0, first_w, first_g, first_b,
            [c1_w, c1_g, c1_b, c2_w, c2_g, c2_b, c3_w, c3_g, c3_b] * res_num,
            head_w, head_g, head_b, out)
    """
    mask_ref, x_ref, fw_ref, fg_ref, fb_ref = refs[:5]
    res_refs = refs[5:5 + 9 * res_num]
    hw_ref, hg_ref, hb_ref, out_ref = refs[5 + 9 * res_num:]

    m = x_ref.shape[1]

    def im2col(x):
        # x: (Cin, M) f32 -> (9*Cin, M) bf16, taps folded into the K dimension.
        pieces = []
        for k, (oy, ox) in enumerate(_TAPS):
            d = oy * w + ox
            shifted = x if d == 0 else pltpu.roll(x, shift=(-d) % m, axis=1)
            pieces.append(shifted * mask_ref[k])       # (1, M) 0/1 edge mask
        return jnp.concatenate(pieces, axis=0).astype(jnp.bfloat16)

    def conv3x3_bn(x, w_r, g_r, b_r, relu, residual=None):
        z = jnp.dot(w_r[...], im2col(x), preferred_element_type=jnp.float32)
        return _bn_act(z, g_r[...], b_r[...], relu, eps, residual)

    # first conv + BN + ReLU
    x = conv3x3_bn(x_ref[...], fw_ref, fg_ref, fb_ref, relu=True)

    # residual blocks: y = relu(BN(conv(x))); y = BN(conv(y)) + x; x = relu(BN(conv(y)))
    for r in range(res_num):
        blk = res_refs[9 * r: 9 * (r + 1)]
        y = conv3x3_bn(x, blk[0], blk[1], blk[2], relu=True)
        y = conv3x3_bn(y, blk[3], blk[4], blk[5], relu=False, residual=x)
        x = conv3x3_bn(y, blk[6], blk[7], blk[8], relu=True)

    # Fused 1x1 policy(2ch) + value(1ch) conv + BN + ReLU (per-channel BN stats
    # are independent, so fusing the two heads' convs/BNs is exact).
    z = jnp.dot(hw_ref[...], x.astype(jnp.bfloat16),
                preferred_element_type=jnp.float32)
    out_ref[...] = _bn_act(z, hg_ref[...], hb_ref[...], relu=True, eps=eps)


def _heads_kernel(pm_ref, vm_ref,
                  pw1_ref, pb1_ref, pw2_ref, pb2_ref,
                  vw1_ref, vb1_ref, vw2_ref, vb2_ref, vw3_ref, vb3_ref,
                  p_out_ref, v_out_ref):
    def fc(x, w_ref, b_ref):
        return jnp.dot(x.astype(jnp.bfloat16), w_ref[...],
                       preferred_element_type=jnp.float32) + b_ref[...]

    # Policy head: Linear -> ReLU -> Linear
    p = jnp.maximum(fc(pm_ref[...], pw1_ref, pb1_ref), 0.0)
    p_out_ref[...] = fc(p, pw2_ref, pb2_ref)

    # Value head: Linear -> ReLU -> Linear -> ReLU -> Linear -> Tanh
    v = jnp.maximum(fc(vm_ref[...], vw1_ref, vb1_ref), 0.0)
    v = jnp.maximum(fc(v, vw2_ref, vb2_ref), 0.0)
    v_out_ref[...] = jnp.tanh(fc(v, vw3_ref, vb3_ref))


# ------------------------------ kernel wrappers --------------------------------

def _trunk_forward(masks, x0, params, w):
    res_num = len(params["res"])
    m = x0.shape[1]
    cout_head = params["head_conv"]["w"].shape[0]
    args = [masks, x0,
            params["first"]["w"], params["first"]["gamma"], params["first"]["beta"]]
    for rp in params["res"]:
        for name in ("c1", "c2", "c3"):
            args += [rp[name]["w"], rp[name]["gamma"], rp[name]["beta"]]
    hc = params["head_conv"]
    args += [hc["w"], hc["gamma"], hc["beta"]]
    return pl.pallas_call(
        functools.partial(_trunk_kernel, res_num=res_num, eps=_BN_EPS, w=w),
        out_shape=jax.ShapeDtypeStruct((cout_head, m), jnp.float32),
        in_specs=[_VMEM] * len(args),
        out_specs=_VMEM,
    )(*args)


def _heads_forward(pm, vm, params):
    n = pm.shape[0]
    p_dim = params["pfc2"]["w"].shape[1]
    args = [pm, vm,
            params["pfc1"]["w"], params["pfc1"]["b"],
            params["pfc2"]["w"], params["pfc2"]["b"],
            params["vfc1"]["w"], params["vfc1"]["b"],
            params["vfc2"]["w"], params["vfc2"]["b"],
            params["vfc3"]["w"], params["vfc3"]["b"]]
    return pl.pallas_call(
        _heads_kernel,
        out_shape=(jax.ShapeDtypeStruct((n, p_dim), jnp.float32),
                   jax.ShapeDtypeStruct((n, 1), jnp.float32)),
        in_specs=[_VMEM] * len(args),
        out_specs=(_VMEM, _VMEM),
    )(*args)


# -------------------------------- parameters -----------------------------------

def init_conv3x3_bn(key, cin, cout, cin_pad=None):
    """3x3 conv (bias omitted: a per-channel constant cancels under train-mode BN)
    + BatchNorm, stored as a (cout, 9*cin_pad) bf16 operand with the 9 taps folded
    into the contraction dim (tap-major, channel-minor)."""
    kw, kg, kb = jax.random.split(key, 3)
    cin_pad = cin if cin_pad is None else cin_pad
    s = 1.0 / math.sqrt(cin * 9)
    wgt = jax.random.uniform(kw, (3, 3, cin, cout), jnp.float32, -s, s)
    wgt = jnp.pad(wgt, ((0, 0), (0, 0), (0, cin_pad - cin), (0, 0)))
    wgt = wgt.reshape(9 * cin_pad, cout).T            # (cout, 9*cin_pad)
    return dict(
        w=wgt.astype(jnp.bfloat16),
        gamma=1.0 + 0.1 * jax.random.normal(kg, (cout, 1), jnp.float32),
        beta=0.1 * jax.random.normal(kb, (cout, 1), jnp.float32))


def init_conv1x1_bn(key, cin, cout):
    kw, kg, kb = jax.random.split(key, 3)
    s = 1.0 / math.sqrt(cin)
    return dict(
        w=jax.random.uniform(kw, (cout, cin), jnp.float32, -s, s).astype(jnp.bfloat16),
        gamma=1.0 + 0.1 * jax.random.normal(kg, (cout, 1), jnp.float32),
        beta=0.1 * jax.random.normal(kb, (cout, 1), jnp.float32))


def init_linear(key, fin, fout):
    kw, kb = jax.random.split(key)
    s = 1.0 / math.sqrt(fin)
    return dict(
        w=jax.random.uniform(kw, (fin, fout), jnp.float32, -s, s).astype(jnp.bfloat16),
        b=jax.random.uniform(kb, (1, fout), jnp.float32, -s, s))


def init_net(key, res_num, hidden, width):
    assert hidden % 8 == 0, "hidden must be a multiple of 8 for aligned im2col"
    keys = iter(jax.random.split(key, 3 * res_num + 8))
    cin_pad = _round_up(3, 8)
    params = {"first": init_conv3x3_bn(next(keys), 3, hidden, cin_pad=cin_pad),
              "res": []}
    for _ in range(res_num):
        params["res"].append(dict(
            c1=init_conv3x3_bn(next(keys), hidden, hidden),
            c2=init_conv3x3_bn(next(keys), hidden, hidden),
            c3=init_conv3x3_bn(next(keys), hidden, hidden)))
    # Fuse policy (2 ch) and value (1 ch) 1x1 convs + BNs into one 3-channel op.
    pconv = init_conv1x1_bn(next(keys), hidden, 2)
    vconv = init_conv1x1_bn(next(keys), hidden, 1)
    params["head_conv"] = dict(
        w=jnp.concatenate([pconv["w"], vconv["w"]], axis=0),
        gamma=jnp.concatenate([pconv["gamma"], vconv["gamma"]], axis=0),
        beta=jnp.concatenate([pconv["beta"], vconv["beta"]], axis=0))
    params["pfc1"] = init_linear(next(keys), width * width * 2, 722)
    params["pfc2"] = init_linear(next(keys), 722, width ** 2 + 1)
    params["vfc1"] = init_linear(next(keys), width * width, 361)
    params["vfc2"] = init_linear(next(keys), 361, 256)
    params["vfc3"] = init_linear(next(keys), 256, 1)
    return params


# ----------------------------------- forward -----------------------------------

def net_forward(params, x_nchw):
    n, cin, h, w = x_nchw.shape
    m = n * h * w
    cin_pad = _round_up(cin, 8)

    # NCHW -> (C, N*H*W): channels on sublanes, rows (img, y, x) on lanes.
    x0 = jnp.transpose(x_nchw, (1, 0, 2, 3)).reshape(cin, m).astype(jnp.float32)
    x0 = jnp.pad(x0, ((0, cin_pad - cin), (0, 0)))
    masks = jnp.asarray(_tap_masks_np(n, h, w))

    head_map = _trunk_forward(masks, x0, params, w)        # (3, n*h*w) f32

    # PyTorch nn.Flatten on NCHW => channel-major features (tiny XLA glue).
    s = h * w
    pm = head_map[0:2].reshape(2, n, s).transpose(1, 0, 2).reshape(n, 2 * s)
    vm = head_map[2:3].reshape(n, s)                       # 1 channel: plain reshape
    return _heads_forward(pm, vm, params)


# ------------------------------------- main -------------------------------------

if __name__ == "__main__":
    RES_NUM, HIDDEN, WIDTH, BATCH = 2, 32, 8, 2
    key = jax.random.PRNGKey(0)
    k_param, k_x = jax.random.split(key)
    params = init_net(k_param, RES_NUM, HIDDEN, WIDTH)
    x = jax.random.normal(k_x, (BATCH, 3, WIDTH, WIDTH), jnp.float32)   # NCHW

    fwd = jax.jit(net_forward)
    p_out, v_out = fwd(params, x)
    p_out = jax.block_until_ready(p_out)
    v_out = jax.block_until_ready(v_out)

    assert p_out.shape == (BATCH, WIDTH ** 2 + 1), p_out.shape
    assert v_out.shape == (BATCH, 1), v_out.shape
    assert bool(jnp.all(jnp.isfinite(p_out))) and bool(jnp.all(jnp.isfinite(v_out)))
    print("KERNEL_OK")
</pallas_src>

<mosaic_0001>
module attributes {stable_mosaic.version = 11 : i64} {
  func.func @_trunk_kernel(%arg0: memref<9x1x128xf32, #tpu.memory_space<vmem>>, %arg1: memref<8x128xf32, #tpu.memory_space<vmem>>, %arg2: memref<32x72xbf16, #tpu.memory_space<vmem>>, %arg3: memref<32x1xf32, #tpu.memory_space<vmem>>, %arg4: memref<32x1xf32, #tpu.memory_space<vmem>>, %arg5: memref<32x288xbf16, #tpu.memory_space<vmem>>, %arg6: memref<32x1xf32, #tpu.memory_space<vmem>>, %arg7: memref<32x1xf32, #tpu.memory_space<vmem>>, %arg8: memref<32x288xbf16, #tpu.memory_space<vmem>>, %arg9: memref<32x1xf32, #tpu.memory_space<vmem>>, %arg10: memref<32x1xf32, #tpu.memory_space<vmem>>, %arg11: memref<32x288xbf16, #tpu.memory_space<vmem>>, %arg12: memref<32x1xf32, #tpu.memory_space<vmem>>, %arg13: memref<32x1xf32, #tpu.memory_space<vmem>>, %arg14: memref<32x288xbf16, #tpu.memory_space<vmem>>, %arg15: memref<32x1xf32, #tpu.memory_space<vmem>>, %arg16: memref<32x1xf32, #tpu.memory_space<vmem>>, %arg17: memref<32x288xbf16, #tpu.memory_space<vmem>>, %arg18: memref<32x1xf32, #tpu.memory_space<vmem>>, %arg19: memref<32x1xf32, #tpu.memory_space<vmem>>, %arg20: memref<32x288xbf16, #tpu.memory_space<vmem>>, %arg21: memref<32x1xf32, #tpu.memory_space<vmem>>, %arg22: memref<32x1xf32, #tpu.memory_space<vmem>>, %arg23: memref<3x32xbf16, #tpu.memory_space<vmem>>, %arg24: memref<3x1xf32, #tpu.memory_space<vmem>>, %arg25: memref<3x1xf32, #tpu.memory_space<vmem>>, %arg26: memref<3x128xf32, #tpu.memory_space<vmem>>) attributes {dimension_semantics = [], scalar_prefetch = 0 : i64, scratch_operands = 0 : i64, tpu.core_type = #tpu.core_type<tc>} {
    %c0 = arith.constant 0 : index
    %c0_0 = arith.constant 0 : index
    %0 = vector.load %arg1[%c0, %c0_0] : memref<8x128xf32, #tpu.memory_space<vmem>>, vector<8x128xf32>
    %c0_1 = arith.constant 0 : index
    %c0_2 = arith.constant 0 : index
    %1 = vector.load %arg2[%c0_1, %c0_2] : memref<32x72xbf16, #tpu.memory_space<vmem>>, vector<32x72xbf16>
    %c9_i32 = arith.constant 9 : i32
    %2 = tpu.dynamic_rotate %0 by %c9_i32 dim 1 : vector<8x128xf32>, i32 -> vector<8x128xf32>
    %c0_3 = arith.constant 0 : index
    %c0_4 = arith.constant 0 : index
    %c0_5 = arith.constant 0 : index
    %3 = vector.load %arg0[%c0_3, %c0_4, %c0_5] : memref<9x1x128xf32, #tpu.memory_space<vmem>>, vector<1x1x128xf32>
    %4 = vector.shape_cast %3 : vector<1x1x128xf32> to vector<1x128xf32>
    %5 = vector.broadcast %4 : vector<1x128xf32> to vector<8x128xf32>
    %6 = arith.mulf %2, %5 : vector<8x128xf32>
    %c8_i32 = arith.constant 8 : i32
    %7 = tpu.dynamic_rotate %0 by %c8_i32 dim 1 : vector<8x128xf32>, i32 -> vector<8x128xf32>
    %c1 = arith.constant 1 : index
    %c0_6 = arith.constant 0 : index
    %c0_7 = arith.constant 0 : index
    %8 = vector.load %arg0[%c1, %c0_6, %c0_7] : memref<9x1x128xf32, #tpu.memory_space<vmem>>, vector<1x1x128xf32>
    %9 = vector.shape_cast %8 : vector<1x1x128xf32> to vector<1x128xf32>
    %10 = vector.broadcast %9 : vector<1x128xf32> to vector<8x128xf32>
    %11 = arith.mulf %7, %10 : vector<8x128xf32>
    %c7_i32 = arith.constant 7 : i32
    %12 = tpu.dynamic_rotate %0 by %c7_i32 dim 1 : vector<8x128xf32>, i32 -> vector<8x128xf32>
    %c2 = arith.constant 2 : index
    %c0_8 = arith.constant 0 : index
    %c0_9 = arith.constant 0 : index
    %13 = vector.load %arg0[%c2, %c0_8, %c0_9] : memref<9x1x128xf32, #tpu.memory_space<vmem>>, vector<1x1x128xf32>
    %14 = vector.shape_cast %13 : vector<1x1x128xf32> to vector<1x128xf32>
    %15 = vector.broadcast %14 : vector<1x128xf32> to vector<8x128xf32>
    %16 = arith.mulf %12, %15 : vector<8x128xf32>
    %c1_i32 = arith.constant 1 : i32
    %17 = tpu.dynamic_rotate %0 by %c1_i32 dim 1 : vector<8x128xf32>, i32 -> vector<8x128xf32>
    %c3 = arith.constant 3 : index
    %c0_10 = arith.constant 0 : index
    %c0_11 = arith.constant 0 : index
    %18 = vector.load %arg0[%c3, %c0_10, %c0_11] : memref<9x1x128xf32, #tpu.memory_space<vmem>>, vector<1x1x128xf32>
    %19 = vector.shape_cast %18 : vector<1x1x128xf32> to vector<1x128xf32>
    %20 = vector.broadcast %19 : vector<1x128xf32> to vector<8x128xf32>
    %21 = arith.mulf %17, %20 : vector<8x128xf32>
    %c4 = arith.constant 4 : index
    %c0_12 = arith.constant 0 : index
    %c0_13 = arith.constant 0 : index
    %22 = vector.load %arg0[%c4, %c0_12, %c0_13] : memref<9x1x128xf32, #tpu.memory_space<vmem>>, vector<1x1x128xf32>
    %23 = vector.shape_cast %22 : vector<1x1x128xf32> to vector<1x128xf32>
    %24 = vector.broadcast %23 : vector<1x128xf32> to vector<8x128xf32>
    %25 = arith.mulf %0, %24 : vector<8x128xf32>
    %c127_i32 = arith.constant 127 : i32
    %26 = tpu.dynamic_rotate %0 by %c127_i32 dim 1 : vector<8x128xf32>, i32 -> vector<8x128xf32>
    %c5 = arith.constant 5 : index
    %c0_14 = arith.constant 0 : index
    %c0_15 = arith.constant 0 : index
    %27 = vector.load %arg0[%c5, %c0_14, %c0_15] : memref<9x1x128xf32, #tpu.memory_space<vmem>>, vector<1x1x128xf32>
    %28 = vector.shape_cast %27 : vector<1x1x128xf32> to vector<1x128xf32>
    %29 = vector.broadcast %28 : vector<1x128xf32> to vector<8x128xf32>
    %30 = arith.mulf %26, %29 : vector<8x128xf32>
    %c121_i32 = arith.constant 121 : i32
    %31 = tpu.dynamic_rotate %0 by %c121_i32 dim 1 : vector<8x128xf32>, i32 -> vector<8x128xf32>
    %c6 = arith.constant 6 : index
    %c0_16 = arith.constant 0 : index
    %c0_17 = arith.constant 0 : index
    %32 = vector.load %arg0[%c6, %c0_16, %c0_17] : memref<9x1x128xf32, #tpu.memory_space<vmem>>, vector<1x1x128xf32>
    %33 = vector.shape_cast %32 : vector<1x1x128xf32> to vector<1x128xf32>
    %34 = vector.broadcast %33 : vector<1x128xf32> to vector<8x128xf32>
    %35 = arith.mulf %31, %34 : vector<8x128xf32>
    %c120_i32 = arith.constant 120 : i32
    %36 = tpu.dynamic_rotate %0 by %c120_i32 dim 1 : vector<8x128xf32>, i32 -> vector<8x128xf32>
    %c7 = arith.constant 7 : index
    %c0_18 = arith.constant 0 : index
    %c0_19 = arith.constant 0 : index
    %37 = vector.load %arg0[%c7, %c0_18, %c0_19] : memref<9x1x128xf32, #tpu.memory_space<vmem>>, vector<1x1x128xf32>
    %38 = vector.shape_cast %37 : vector<1x1x128xf32> to vector<1x128xf32>
    %39 = vector.broadcast %38 : vector<1x128xf32> to vector<8x128xf32>
    %40 = arith.mulf %36, %39 : vector<8x128xf32>
    %c119_i32 = arith.constant 119 : i32
    %41 = tpu.dynamic_rotate %0 by %c119_i32 dim 1 : vector<8x128xf32>, i32 -> vector<8x128xf32>
    %c8 = arith.constant 8 : index
    %c0_20 = arith.constant 0 : index
    %c0_21 = arith.constant 0 : index
    %42 = vector.load %arg0[%c8, %c0_20, %c0_21] : memref<9x1x128xf32, #tpu.memory_space<vmem>>, vector<1x1x128xf32>
    %43 = vector.shape_cast %42 : vector<1x1x128xf32> to vector<1x128xf32>
    %44 = vector.broadcast %43 : vector<1x128xf32> to vector<8x128xf32>
    %45 = arith.mulf %41, %44 : vector<8x128xf32>
    %46 = tpu.concatenate %6, %11, %16, %21, %25, %30, %35, %40, %45 in 0 : vector<8x128xf32>, vector<8x128xf32>, vector<8x128xf32>, vector<8x128xf32>, vector<8x128xf32>, vector<8x128xf32>, vector<8x128xf32>, vector<8x128xf32>, vector<8x128xf32> -> vector<72x128xf32>
    %47 = arith.truncf %46 : vector<72x128xf32> to vector<72x128xbf16>
    %cst = arith.constant dense<0.000000e+00> : vector<32x128xf32>
    %48 = tpu.matmul %1, %47, %cst {dimension_numbers = #tpu.dot_dimension_numbers<[1], [0], [0], [1], [0, 0, 1, 1], [], []>} : vector<32x72xbf16>, vector<72x128xbf16>, vector<32x128xf32> -> vector<32x128xf32>
    %c0_22 = arith.constant 0 : index
    %c0_23 = arith.constant 0 : index
    %49 = vector.load %arg3[%c0_22, %c0_23] : memref<32x1xf32, #tpu.memory_space<vmem>>, vector<32x1xf32>
    %c0_24 = arith.constant 0 : index
    %c0_25 = arith.constant 0 : index
    %50 = vector.load %arg4[%c0_24, %c0_25] : memref<32x1xf32, #tpu.memory_space<vmem>>, vector<32x1xf32>
    %cst_26 = arith.constant dense<0.000000e+00> : vector<32xf32>
    %51 = vector.multi_reduction <add>, %48, %cst_26 [1] : vector<32x128xf32> to vector<32xf32>
    %52 = vector.shape_cast %51 : vector<32xf32> to vector<32x1xf32>
    %cst_27 = arith.constant 7.812500e-03 : f32
    %53 = vector.broadcast %cst_27 : f32 to vector<32x1xf32>
    %54 = arith.mulf %52, %53 : vector<32x1xf32>
    %55 = arith.mulf %48, %48 : vector<32x128xf32>
    %cst_28 = arith.constant dense<0.000000e+00> : vector<32xf32>
    %56 = vector.multi_reduction <add>, %55, %cst_28 [1] : vector<32x128xf32> to vector<32xf32>
    %57 = vector.shape_cast %56 : vector<32xf32> to vector<32x1xf32>
    %cst_29 = arith.constant 7.812500e-03 : f32
    %58 = vector.broadcast %cst_29 : f32 to vector<32x1xf32>
    %59 = arith.mulf %57, %58 : vector<32x1xf32>
    %60 = arith.mulf %54, %54 : vector<32x1xf32>
    %61 = arith.subf %59, %60 : vector<32x1xf32>
    %cst_30 = arith.constant 0.000000e+00 : f32
    %62 = vector.broadcast %cst_30 : f32 to vector<32x1xf32>
    %63 = arith.maximumf %61, %62 : vector<32x1xf32>
    %64 = vector.broadcast %54 : vector<32x1xf32> to vector<32x128xf32>
    %65 = arith.subf %48, %64 : vector<32x128xf32>
    %66 = vector.broadcast %49 : vector<32x1xf32> to vector<32x128xf32>
    %67 = arith.mulf %66, %65 : vector<32x128xf32>
    %cst_31 = arith.constant 9.99999974E-6 : f32
    %68 = vector.broadcast %cst_31 : f32 to vector<32x1xf32>
    %69 = arith.addf %63, %68 : vector<32x1xf32>
    %70 = math.rsqrt %69 : vector<32x1xf32>
    %71 = vector.broadcast %70 : vector<32x1xf32> to vector<32x128xf32>
    %72 = arith.mulf %67, %71 : vector<32x128xf32>
    %73 = vector.broadcast %50 : vector<32x1xf32> to vector<32x128xf32>
    %74 = arith.addf %72, %73 : vector<32x128xf32>
    %cst_32 = arith.constant 0.000000e+00 : f32
    %75 = vector.broadcast %cst_32 : f32 to vector<32x128xf32>
    %76 = arith.maximumf %74, %75 : vector<32x128xf32>
    %c0_33 = arith.constant 0 : index
    %c0_34 = arith.constant 0 : index
    %77 = vector.load %arg5[%c0_33, %c0_34] : memref<32x288xbf16, #tpu.memory_space<vmem>>, vector<32x288xbf16>
    %c9_i32_35 = arith.constant 9 : i32
    %78 = tpu.dynamic_rotate %76 by %c9_i32_35 dim 1 : vector<32x128xf32>, i32 -> vector<32x128xf32>
    %c0_36 = arith.constant 0 : index
    %c0_37 = arith.constant 0 : index
    %c0_38 = arith.constant 0 : index
    %79 = vector.load %arg0[%c0_36, %c0_37, %c0_38] : memref<9x1x128xf32, #tpu.memory_space<vmem>>, vector<1x1x128xf32>
    %80 = vector.shape_cast %79 : vector<1x1x128xf32> to vector<1x128xf32>
    %81 = vector.broadcast %80 : vector<1x128xf32> to vector<32x128xf32>
    %82 = arith.mulf %78, %81 : vector<32x128xf32>
    %c8_i32_39 = arith.constant 8 : i32
    %83 = tpu.dynamic_rotate %76 by %c8_i32_39 dim 1 : vector<32x128xf32>, i32 -> vector<32x128xf32>
    %c1_40 = arith.constant 1 : index
    %c0_41 = arith.constant 0 : index
    %c0_42 = arith.constant 0 : index
    %84 = vector.load %arg0[%c1_40, %c0_41, %c0_42] : memref<9x1x128xf32, #tpu.memory_space<vmem>>, vector<1x1x128xf32>
    %85 = vector.shape_cast %84 : vector<1x1x128xf32> to vector<1x128xf32>
    %86 = vector.broadcast %85 : vector<1x128xf32> to vector<32x128xf32>
    %87 = arith.mulf %83, %86 : vector<32x128xf32>
    %c7_i32_43 = arith.constant 7 : i32
    %88 = tpu.dynamic_rotate %76 by %c7_i32_43 dim 1 : vector<32x128xf32>, i32 -> vector<32x128xf32>
    %c2_44 = arith.constant 2 : index
    %c0_45 = arith.constant 0 : index
    %c0_46 = arith.constant 0 : index
    %89 = vector.load %arg0[%c2_44, %c0_45, %c0_46] : memref<9x1x128xf32, #tpu.memory_space<vmem>>, vector<1x1x128xf32>
    %90 = vector.shape_cast %89 : vector<1x1x128xf32> to vector<1x128xf32>
    %91 = vector.broadcast %90 : vector<1x128xf32> to vector<32x128xf32>
    %92 = arith.mulf %88, %91 : vector<32x128xf32>
    %c1_i32_47 = arith.constant 1 : i32
    %93 = tpu.dynamic_rotate %76 by %c1_i32_47 dim 1 : vector<32x128xf32>, i32 -> vector<32x128xf32>
    %c3_48 = arith.constant 3 : index
    %c0_49 = arith.constant 0 : index
    %c0_50 = arith.constant 0 : index
    %94 = vector.load %arg0[%c3_48, %c0_49, %c0_50] : memref<9x1x128xf32, #tpu.memory_space<vmem>>, vector<1x1x128xf32>
    %95 = vector.shape_cast %94 : vector<1x1x128xf32> to vector<1x128xf32>
    %96 = vector.broadcast %95 : vector<1x128xf32> to vector<32x128xf32>
    %97 = arith.mulf %93, %96 : vector<32x128xf32>
    %c4_51 = arith.constant 4 : index
    %c0_52 = arith.constant 0 : index
    %c0_53 = arith.constant 0 : index
    %98 = vector.load %arg0[%c4_51, %c0_52, %c0_53] : memref<9x1x128xf32, #tpu.memory_space<vmem>>, vector<1x1x128xf32>
    %99 = vector.shape_cast %98 : vector<1x1x128xf32> to vector<1x128xf32>
    %100 = vector.broadcast %99 : vector<1x128xf32> to vector<32x128xf32>
    %101 = arith.mulf %76, %100 : vector<32x128xf32>
    %c127_i32_54 = arith.constant 127 : i32
    %102 = tpu.dynamic_rotate %76 by %c127_i32_54 dim 1 : vector<32x128xf32>, i32 -> vector<32x128xf32>
    %c5_55 = arith.constant 5 : index
    %c0_56 = arith.constant 0 : index
    %c0_57 = arith.constant 0 : index
    %103 = vector.load %arg0[%c5_55, %c0_56, %c0_57] : memref<9x1x128xf32, #tpu.memory_space<vmem>>, vector<1x1x128xf32>
    %104 = vector.shape_cast %103 : vector<1x1x128xf32> to vector<1x128xf32>
    %105 = vector.broadcast %104 : vector<1x128xf32> to vector<32x128xf32>
    %106 = arith.mulf %102, %105 : vector<32x128xf32>
    %c121_i32_58 = arith.constant 121 : i32
    %107 = tpu.dynamic_rotate %76 by %c121_i32_58 dim 1 : vector<32x128xf32>, i32 -> vector<32x128xf32>
    %c6_59 = arith.constant 6 : index
    %c0_60 = arith.constant 0 : index
    %c0_61 = arith.constant 0 : index
    %108 = vector.load %arg0[%c6_59, %c0_60, %c0_61] : memref<9x1x128xf32, #tpu.memory_space<vmem>>, vector<1x1x128xf32>
    %109 = vector.shape_cast %108 : vector<1x1x128xf32> to vector<1x128xf32>
    %110 = vector.broadcast %109 : vector<1x128xf32> to vector<32x128xf32>
    %111 = arith.mulf %107, %110 : vector<32x128xf32>
    %c120_i32_62 = arith.constant 120 : i32
    %112 = tpu.dynamic_rotate %76 by %c120_i32_62 dim 1 : vector<32x128xf32>, i32 -> vector<32x128xf32>
    %c7_63 = arith.constant 7 : index
    %c0_64 = arith.constant 0 : index
    %c0_65 = arith.constant 0 : index
    %113 = vector.load %arg0[%c7_63, %c0_64, %c0_65] : memref<9x1x128xf32, #tpu.memory_space<vmem>>, vector<1x1x128xf32>
    %114 = vector.shape_cast %113 : vector<1x1x128xf32> to vector<1x128xf32>
    %115 = vector.broadcast %114 : vector<1x128xf32> to vector<32x128xf32>
    %116 = arith.mulf %112, %115 : vector<32x128xf32>
    %c119_i32_66 = arith.constant 119 : i32
    %117 = tpu.dynamic_rotate %76 by %c119_i32_66 dim 1 : vector<32x128xf32>, i32 -> vector<32x128xf32>
    %c8_67 = arith.constant 8 : index
    %c0_68 = arith.constant 0 : index
    %c0_69 = arith.constant 0 : index
    %118 = vector.load %arg0[%c8_67, %c0_68, %c0_69] : memref<9x1x128xf32, #tpu.memory_space<vmem>>, vector<1x1x128xf32>
    %119 = vector.shape_cast %118 : vector<1x1x128xf32> to vector<1x128xf32>
    %120 = vector.broadcast %119 : vector<1x128xf32> to vector<32x128xf32>
    %121 = arith.mulf %117, %120 : vector<32x128xf32>
    %122 = tpu.concatenate %82, %87, %92, %97, %101, %106, %111, %116, %121 in 0 : vector<32x128xf32>, vector<32x128xf32>, vector<32x128xf32>, vector<32x128xf32>, vector<32x128xf32>, vector<32x128xf32>, vector<32x128xf32>, vector<32x128xf32>, vector<32x128xf32> -> vector<288x128xf32>
    %123 = arith.truncf %122 : vector<288x128xf32> to vector<288x128xbf16>
    %cst_70 = arith.constant dense<0.000000e+00> : vector<32x128xf32>
    %124 = tpu.matmul %77, %123, %cst_70 {dimension_numbers = #tpu.dot_dimension_numbers<[1], [0], [0], [1], [0, 0, 1, 1], [], []>} : vector<32x288xbf16>, vector<288x128xbf16>, vector<32x128xf32> -> vector<32x128xf32>
    %c0_71 = arith.constant 0 : index
    %c0_72 = arith.constant 0 : index
    %125 = vector.load %arg6[%c0_71, %c0_72] : memref<32x1xf32, #tpu.memory_space<vmem>>, vector<32x1xf32>
    %c0_73 = arith.constant 0 : index
    %c0_74 = arith.constant 0 : index
    %126 = vector.load %arg7[%c0_73, %c0_74] : memref<32x1xf32, #tpu.memory_space<vmem>>, vector<32x1xf32>
    %cst_75 = arith.constant dense<0.000000e+00> : vector<32xf32>
    %127 = vector.multi_reduction <add>, %124, %cst_75 [1] : vector<32x128xf32> to vector<32xf32>
    %128 = vector.shape_cast %127 : vector<32xf32> to vector<32x1xf32>
    %cst_76 = arith.constant 7.812500e-03 : f32
    %129 = vector.broadcast %cst_76 : f32 to vector<32x1xf32>
    %130 = arith.mulf %128, %129 : vector<32x1xf32>
    %131 = arith.mulf %124, %124 : vector<32x128xf32>
    %cst_77 = arith.constant dense<0.000000e+00> : vector<32xf32>
    %132 = vector.multi_reduction <add>, %131, %cst_77 [1] : vector<32x128xf32> to vector<32xf32>
    %133 = vector.shape_cast %132 : vector<32xf32> to vector<32x1xf32>
    %cst_78 = arith.constant 7.812500e-03 : f32
    %134 = vector.broadcast %cst_78 : f32 to vector<32x1xf32>
    %135 = arith.mulf %133, %134 : vector<32x1xf32>
    %136 = arith.mulf %130, %130 : vector<32x1xf32>
    %137 = arith.subf %135, %136 : vector<32x1xf32>
    %cst_79 = arith.constant 0.000000e+00 : f32
    %138 = vector.broadcast %cst_79 : f32 to vector<32x1xf32>
    %139 = arith.maximumf %137, %138 : vector<32x1xf32>
    %140 = vector.broadcast %130 : vector<32x1xf32> to vector<32x128xf32>
    %141 = arith.subf %124, %140 : vector<32x128xf32>
    %142 = vector.broadcast %125 : vector<32x1xf32> to vector<32x128xf32>
    %143 = arith.mulf %142, %141 : vector<32x128xf32>
    %cst_80 = arith.constant 9.99999974E-6 : f32
    %144 = vector.broadcast %cst_80 : f32 to vector<32x1xf32>
    %145 = arith.addf %139, %144 : vector<32x1xf32>
    %146 = math.rsqrt %145 : vector<32x1xf32>
    %147 = vector.broadcast %146 : vector<32x1xf32> to vector<32x128xf32>
    %148 = arith.mulf %143, %147 : vector<32x128xf32>
    %149 = vector.broadcast %126 : vector<32x1xf32> to vector<32x128xf32>
    %150 = arith.addf %148, %149 : vector<32x128xf32>
    %cst_81 = arith.constant 0.000000e+00 : f32
    %151 = vector.broadcast %cst_81 : f32 to vector<32x128xf32>
    %152 = arith.maximumf %150, %151 : vector<32x128xf32>
    %c0_82 = arith.constant 0 : index
    %c0_83 = arith.constant 0 : index
    %153 = vector.load %arg8[%c0_82, %c0_83] : memref<32x288xbf16, #tpu.memory_space<vmem>>, vector<32x288xbf16>
    %c9_i32_84 = arith.constant 9 : i32
    %154 = tpu.dynamic_rotate %152 by %c9_i32_84 dim 1 : vector<32x128xf32>, i32 -> vector<32x128xf32>
    %c0_85 = arith.constant 0 : index
    %c0_86 = arith.constant 0 : index
    %c0_87 = arith.constant 0 : index
    %155 = vector.load %arg0[%c0_85, %c0_86, %c0_87] : memref<9x1x128xf32, #tpu.memory_space<vmem>>, vector<1x1x128xf32>
    %156 = vector.shape_cast %155 : vector<1x1x128xf32> to vector<1x128xf32>
    %157 = vector.broadcast %156 : vector<1x128xf32> to vector<32x128xf32>
    %158 = arith.mulf %154, %157 : vector<32x128xf32>
    %c8_i32_88 = arith.constant 8 : i32
    %159 = tpu.dynamic_rotate %152 by %c8_i32_88 dim 1 : vector<32x128xf32>, i32 -> vector<32x128xf32>
    %c1_89 = arith.constant 1 : index
    %c0_90 = arith.constant 0 : index
    %c0_91 = arith.constant 0 : index
    %160 = vector.load %arg0[%c1_89, %c0_90, %c0_91] : memref<9x1x128xf32, #tpu.memory_space<vmem>>, vector<1x1x128xf32>
    %161 = vector.shape_cast %160 : vector<1x1x128xf32> to vector<1x128xf32>
    %162 = vector.broadcast %161 : vector<1x128xf32> to vector<32x128xf32>
    %163 = arith.mulf %159, %162 : vector<32x128xf32>
    %c7_i32_92 = arith.constant 7 : i32
    %164 = tpu.dynamic_rotate %152 by %c7_i32_92 dim 1 : vector<32x128xf32>, i32 -> vector<32x128xf32>
    %c2_93 = arith.constant 2 : index
    %c0_94 = arith.constant 0 : index
    %c0_95 = arith.constant 0 : index
    %165 = vector.load %arg0[%c2_93, %c0_94, %c0_95] : memref<9x1x128xf32, #tpu.memory_space<vmem>>, vector<1x1x128xf32>
    %166 = vector.shape_cast %165 : vector<1x1x128xf32> to vector<1x128xf32>
    %167 = vector.broadcast %166 : vector<1x128xf32> to vector<32x128xf32>
    %168 = arith.mulf %164, %167 : vector<32x128xf32>
    %c1_i32_96 = arith.constant 1 : i32
    %169 = tpu.dynamic_rotate %152 by %c1_i32_96 dim 1 : vector<32x128xf32>, i32 -> vector<32x128xf32>
    %c3_97 = arith.constant 3 : index
    %c0_98 = arith.constant 0 : index
    %c0_99 = arith.constant 0 : index
    %170 = vector.load %arg0[%c3_97, %c0_98, %c0_99] : memref<9x1x128xf32, #tpu.memory_space<vmem>>, vector<1x1x128xf32>
    %171 = vector.shape_cast %170 : vector<1x1x128xf32> to vector<1x128xf32>
    %172 = vector.broadcast %171 : vector<1x128xf32> to vector<32x128xf32>
    %173 = arith.mulf %169, %172 : vector<32x128xf32>
    %c4_100 = arith.constant 4 : index
    %c0_101 = arith.constant 0 : index
    %c0_102 = arith.constant 0 : index
    %174 = vector.load %arg0[%c4_100, %c0_101, %c0_102] : memref<9x1x128xf32, #tpu.memory_space<vmem>>, vector<1x1x128xf32>
    %175 = vector.shape_cast %174 : vector<1x1x128xf32> to vector<1x128xf32>
    %176 = vector.broadcast %175 : vector<1x128xf32> to vector<32x128xf32>
    %177 = arith.mulf %152, %176 : vector<32x128xf32>
    %c127_i32_103 = arith.constant 127 : i32
    %178 = tpu.dynamic_rotate %152 by %c127_i32_103 dim 1 : vector<32x128xf32>, i32 -> vector<32x128xf32>
    %c5_104 = arith.constant 5 : index
    %c0_105 = arith.constant 0 : index
    %c0_106 = arith.constant 0 : index
    %179 = vector.load %arg0[%c5_104, %c0_105, %c0_106] : memref<9x1x128xf32, #tpu.memory_space<vmem>>, vector<1x1x128xf32>
    %180 = vector.shape_cast %179 : vector<1x1x128xf32> to vector<1x128xf32>
    %181 = vector.broadcast %180 : vector<1x128xf32> to vector<32x128xf32>
    %182 = arith.mulf %178, %181 : vector<32x128xf32>
    %c121_i32_107 = arith.constant 121 : i32
    %183 = tpu.dynamic_rotate %152 by %c121_i32_107 dim 1 : vector<32x128xf32>, i32 -> vector<32x128xf32>
    %c6_108 = arith.constant 6 : index
    %c0_109 = arith.constant 0 : index
    %c0_110 = arith.constant 0 : index
    %184 = vector.load %arg0[%c6_108, %c0_109, %c0_110] : memref<9x1x128xf32, #tpu.memory_space<vmem>>, vector<1x1x128xf32>
    %185 = vector.shape_cast %184 : vector<1x1x128xf32> to vector<1x128xf32>
    %186 = vector.broadcast %185 : vector<1x128xf32> to vector<32x128xf32>
    %187 = arith.mulf %183, %186 : vector<32x128xf32>
    %c120_i32_111 = arith.constant 120 : i32
    %188 = tpu.dynamic_rotate %152 by %c120_i32_111 dim 1 : vector<32x128xf32>, i32 -> vector<32x128xf32>
    %c7_112 = arith.constant 7 : index
    %c0_113 = arith.constant 0 : index
    %c0_114 = arith.constant 0 : index
    %189 = vector.load %arg0[%c7_112, %c0_113, %c0_114] : memref<9x1x128xf32, #tpu.memory_space<vmem>>, vector<1x1x128xf32>
    %190 = vector.shape_cast %189 : vector<1x1x128xf32> to vector<1x128xf32>
    %191 = vector.broadcast %190 : vector<1x128xf32> to vector<32x128xf32>
    %192 = arith.mulf %188, %191 : vector<32x128xf32>
    %c119_i32_115 = arith.constant 119 : i32
    %193 = tpu.dynamic_rotate %152 by %c119_i32_115 dim 1 : vector<32x128xf32>, i32 -> vector<32x128xf32>
    %c8_116 = arith.constant 8 : index
    %c0_117 = arith.constant 0 : index
    %c0_118 = arith.constant 0 : index
    %194 = vector.load %arg0[%c8_116, %c0_117, %c0_118] : memref<9x1x128xf32, #tpu.memory_space<vmem>>, vector<1x1x128xf32>
    %195 = vector.shape_cast %194 : vector<1x1x128xf32> to vector<1x128xf32>
    %196 = vector.broadcast %195 : vector<1x128xf32> to vector<32x128xf32>
    %197 = arith.mulf %193, %196 : vector<32x128xf32>
    %198 = tpu.concatenate %158, %163, %168, %173, %177, %182, %187, %192, %197 in 0 : vector<32x128xf32>, vector<32x128xf32>, vector<32x128xf32>, vector<32x128xf32>, vector<32x128xf32>, vector<32x128xf32>, vector<32x128xf32>, vector<32x128xf32>, vector<32x128xf32> -> vector<288x128xf32>
    %199 = arith.truncf %198 : vector<288x128xf32> to vector<288x128xbf16>
    %cst_119 = arith.constant dense<0.000000e+00> : vector<32x128xf32>
    %200 = tpu.matmul %153, %199, %cst_119 {dimension_numbers = #tpu.dot_dimension_numbers<[1], [0], [0], [1], [0, 0, 1, 1], [], []>} : vector<32x288xbf16>, vector<288x128xbf16>, vector<32x128xf32> -> vector<32x128xf32>
    %c0_120 = arith.constant 0 : index
    %c0_121 = arith.constant 0 : index
    %201 = vector.load %arg9[%c0_120, %c0_121] : memref<32x1xf32, #tpu.memory_space<vmem>>, vector<32x1xf32>
    %c0_122 = arith.constant 0 : index
    %c0_123 = arith.constant 0 : index
    %202 = vector.load %arg10[%c0_122, %c0_123] : memref<32x1xf32, #tpu.memory_space<vmem>>, vector<32x1xf32>
    %cst_124 = arith.constant dense<0.000000e+00> : vector<32xf32>
    %203 = vector.multi_reduction <add>, %200, %cst_124 [1] : vector<32x128xf32> to vector<32xf32>
    %204 = vector.shape_cast %203 : vector<32xf32> to vector<32x1xf32>
    %cst_125 = arith.constant 7.812500e-03 : f32
    %205 = vector.broadcast %cst_125 : f32 to vector<32x1xf32>
    %206 = arith.mulf %204, %205 : vector<32x1xf32>
    %207 = arith.mulf %200, %200 : vector<32x128xf32>
    %cst_126 = arith.constant dense<0.000000e+00> : vector<32xf32>
    %208 = vector.multi_reduction <add>, %207, %cst_126 [1] : vector<32x128xf32> to vector<32xf32>
    %209 = vector.shape_cast %208 : vector<32xf32> to vector<32x1xf32>
    %cst_127 = arith.constant 7.812500e-03 : f32
    %210 = vector.broadcast %cst_127 : f32 to vector<32x1xf32>
    %211 = arith.mulf %209, %210 : vector<32x1xf32>
    %212 = arith.mulf %206, %206 : vector<32x1xf32>
    %213 = arith.subf %211, %212 : vector<32x1xf32>
    %cst_128 = arith.constant 0.000000e+00 : f32
    %214 = vector.broadcast %cst_128 : f32 to vector<32x1xf32>
    %215 = arith.maximumf %213, %214 : vector<32x1xf32>
    %216 = vector.broadcast %206 : vector<32x1xf32> to vector<32x128xf32>
    %217 = arith.subf %200, %216 : vector<32x128xf32>
    %218 = vector.broadcast %201 : vector<32x1xf32> to vector<32x128xf32>
    %219 = arith.mulf %218, %217 : vector<32x128xf32>
    %cst_129 = arith.constant 9.99999974E-6 : f32
    %220 = vector.broadcast %cst_129 : f32 to vector<32x1xf32>
    %221 = arith.addf %215, %220 : vector<32x1xf32>
    %222 = math.rsqrt %221 : vector<32x1xf32>
    %223 = vector.broadcast %222 : vector<32x1xf32> to vector<32x128xf32>
    %224 = arith.mulf %219, %223 : vector<32x128xf32>
    %225 = vector.broadcast %202 : vector<32x1xf32> to vector<32x128xf32>
    %226 = arith.addf %224, %225 : vector<32x128xf32>
    %227 = arith.addf %226, %76 : vector<32x128xf32>
    %c0_130 = arith.constant 0 : index
    %c0_131 = arith.constant 0 : index
    %228 = vector.load %arg11[%c0_130, %c0_131] : memref<32x288xbf16, #tpu.memory_space<vmem>>, vector<32x288xbf16>
    %c9_i32_132 = arith.constant 9 : i32
    %229 = tpu.dynamic_rotate %227 by %c9_i32_132 dim 1 : vector<32x128xf32>, i32 -> vector<32x128xf32>
    %c0_133 = arith.constant 0 : index
    %c0_134 = arith.constant 0 : index
    %c0_135 = arith.constant 0 : index
    %230 = vector.load %arg0[%c0_133, %c0_134, %c0_135] : memref<9x1x128xf32, #tpu.memory_space<vmem>>, vector<1x1x128xf32>
    %231 = vector.shape_cast %230 : vector<1x1x128xf32> to vector<1x128xf32>
    %232 = vector.broadcast %231 : vector<1x128xf32> to vector<32x128xf32>
    %233 = arith.mulf %229, %232 : vector<32x128xf32>
    %c8_i32_136 = arith.constant 8 : i32
    %234 = tpu.dynamic_rotate %227 by %c8_i32_136 dim 1 : vector<32x128xf32>, i32 -> vector<32x128xf32>
    %c1_137 = arith.constant 1 : index
    %c0_138 = arith.constant 0 : index
    %c0_139 = arith.constant 0 : index
    %235 = vector.load %arg0[%c1_137, %c0_138, %c0_139] : memref<9x1x128xf32, #tpu.memory_space<vmem>>, vector<1x1x128xf32>
    %236 = vector.shape_cast %235 : vector<1x1x128xf32> to vector<1x128xf32>
    %237 = vector.broadcast %236 : vector<1x128xf32> to vector<32x128xf32>
    %238 = arith.mulf %234, %237 : vector<32x128xf32>
    %c7_i32_140 = arith.constant 7 : i32
    %239 = tpu.dynamic_rotate %227 by %c7_i32_140 dim 1 : vector<32x128xf32>, i32 -> vector<32x128xf32>
    %c2_141 = arith.constant 2 : index
    %c0_142 = arith.constant 0 : index
    %c0_143 = arith.constant 0 : index
    %240 = vector.load %arg0[%c2_141, %c0_142, %c0_143] : memref<9x1x128xf32, #tpu.memory_space<vmem>>, vector<1x1x128xf32>
    %241 = vector.shape_cast %240 : vector<1x1x128xf32> to vector<1x128xf32>
    %242 = vector.broadcast %241 : vector<1x128xf32> to vector<32x128xf32>
    %243 = arith.mulf %239, %242 : vector<32x128xf32>
    %c1_i32_144 = arith.constant 1 : i32
    %244 = tpu.dynamic_rotate %227 by %c1_i32_144 dim 1 : vector<32x128xf32>, i32 -> vector<32x128xf32>
    %c3_145 = arith.constant 3 : index
    %c0_146 = arith.constant 0 : index
    %c0_147 = arith.constant 0 : index
    %245 = vector.load %arg0[%c3_145, %c0_146, %c0_147] : memref<9x1x128xf32, #tpu.memory_space<vmem>>, vector<1x1x128xf32>
    %246 = vector.shape_cast %245 : vector<1x1x128xf32> to vector<1x128xf32>
    %247 = vector.broadcast %246 : vector<1x128xf32> to vector<32x128xf32>
    %248 = arith.mulf %244, %247 : vector<32x128xf32>
    %c4_148 = arith.constant 4 : index
    %c0_149 = arith.constant 0 : index
    %c0_150 = arith.constant 0 : index
    %249 = vector.load %arg0[%c4_148, %c0_149, %c0_150] : memref<9x1x128xf32, #tpu.memory_space<vmem>>, vector<1x1x128xf32>
    %250 = vector.shape_cast %249 : vector<1x1x128xf32> to vector<1x128xf32>
    %251 = vector.broadcast %250 : vector<1x128xf32> to vector<32x128xf32>
    %252 = arith.mulf %227, %251 : vector<32x128xf32>
    %c127_i32_151 = arith.constant 127 : i32
    %253 = tpu.dynamic_rotate %227 by %c127_i32_151 dim 1 : vector<32x128xf32>, i32 -> vector<32x128xf32>
    %c5_152 = arith.constant 5 : index
    %c0_153 = arith.constant 0 : index
    %c0_154 = arith.constant 0 : index
    %254 = vector.load %arg0[%c5_152, %c0_153, %c0_154] : memref<9x1x128xf32, #tpu.memory_space<vmem>>, vector<1x1x128xf32>
    %255 = vector.shape_cast %254 : vector<1x1x128xf32> to vector<1x128xf32>
    %256 = vector.broadcast %255 : vector<1x128xf32> to vector<32x128xf32>
    %257 = arith.mulf %253, %256 : vector<32x128xf32>
    %c121_i32_155 = arith.constant 121 : i32
    %258 = tpu.dynamic_rotate %227 by %c121_i32_155 dim 1 : vector<32x128xf32>, i32 -> vector<32x128xf32>
    %c6_156 = arith.constant 6 : index
    %c0_157 = arith.constant 0 : index
    %c0_158 = arith.constant 0 : index
    %259 = vector.load %arg0[%c6_156, %c0_157, %c0_158] : memref<9x1x128xf32, #tpu.memory_space<vmem>>, vector<1x1x128xf32>
    %260 = vector.shape_cast %259 : vector<1x1x128xf32> to vector<1x128xf32>
    %261 = vector.broadcast %260 : vector<1x128xf32> to vector<32x128xf32>
    %262 = arith.mulf %258, %261 : vector<32x128xf32>
    %c120_i32_159 = arith.constant 120 : i32
    %263 = tpu.dynamic_rotate %227 by %c120_i32_159 dim 1 : vector<32x128xf32>, i32 -> vector<32x128xf32>
    %c7_160 = arith.constant 7 : index
    %c0_161 = arith.constant 0 : index
    %c0_162 = arith.constant 0 : index
    %264 = vector.load %arg0[%c7_160, %c0_161, %c0_162] : memref<9x1x128xf32, #tpu.memory_space<vmem>>, vector<1x1x128xf32>
    %265 = vector.shape_cast %264 : vector<1x1x128xf32> to vector<1x128xf32>
    %266 = vector.broadcast %265 : vector<1x128xf32> to vector<32x128xf32>
    %267 = arith.mulf %263, %266 : vector<32x128xf32>
    %c119_i32_163 = arith.constant 119 : i32
    %268 = tpu.dynamic_rotate %227 by %c119_i32_163 dim 1 : vector<32x128xf32>, i32 -> vector<32x128xf32>
    %c8_164 = arith.constant 8 : index
    %c0_165 = arith.constant 0 : index
    %c0_166 = arith.constant 0 : index
    %269 = vector.load %arg0[%c8_164, %c0_165, %c0_166] : memref<9x1x128xf32, #tpu.memory_space<vmem>>, vector<1x1x128xf32>
    %270 = vector.shape_cast %269 : vector<1x1x128xf32> to vector<1x128xf32>
    %271 = vector.broadcast %270 : vector<1x128xf32> to vector<32x128xf32>
    %272 = arith.mulf %268, %271 : vector<32x128xf32>
    %273 = tpu.concatenate %233, %238, %243, %248, %252, %257, %262, %267, %272 in 0 : vector<32x128xf32>, vector<32x128xf32>, vector<32x128xf32>, vector<32x128xf32>, vector<32x128xf32>, vector<32x128xf32>, vector<32x128xf32>, vector<32x128xf32>, vector<32x128xf32> -> vector<288x128xf32>
    %274 = arith.truncf %273 : vector<288x128xf32> to vector<288x128xbf16>
    %cst_167 = arith.constant dense<0.000000e+00> : vector<32x128xf32>
    %275 = tpu.matmul %228, %274, %cst_167 {dimension_numbers = #tpu.dot_dimension_numbers<[1], [0], [0], [1], [0, 0, 1, 1], [], []>} : vector<32x288xbf16>, vector<288x128xbf16>, vector<32x128xf32> -> vector<32x128xf32>
    %c0_168 = arith.constant 0 : index
    %c0_169 = arith.constant 0 : index
    %276 = vector.load %arg12[%c0_168, %c0_169] : memref<32x1xf32, #tpu.memory_space<vmem>>, vector<32x1xf32>
    %c0_170 = arith.constant 0 : index
    %c0_171 = arith.constant 0 : index
    %277 = vector.load %arg13[%c0_170, %c0_171] : memref<32x1xf32, #tpu.memory_space<vmem>>, vector<32x1xf32>
    %cst_172 = arith.constant dense<0.000000e+00> : vector<32xf32>
    %278 = vector.multi_reduction <add>, %275, %cst_172 [1] : vector<32x128xf32> to vector<32xf32>
    %279 = vector.shape_cast %278 : vector<32xf32> to vector<32x1xf32>
    %cst_173 = arith.constant 7.812500e-03 : f32
    %280 = vector.broadcast %cst_173 : f32 to vector<32x1xf32>
    %281 = arith.mulf %279, %280 : vector<32x1xf32>
    %282 = arith.mulf %275, %275 : vector<32x128xf32>
    %cst_174 = arith.constant dense<0.000000e+00> : vector<32xf32>
    %283 = vector.multi_reduction <add>, %282, %cst_174 [1] : vector<32x128xf32> to vector<32xf32>
    %284 = vector.shape_cast %283 : vector<32xf32> to vector<32x1xf32>
    %cst_175 = arith.constant 7.812500e-03 : f32
    %285 = vector.broadcast %cst_175 : f32 to vector<32x1xf32>
    %286 = arith.mulf %284, %285 : vector<32x1xf32>
    %287 = arith.mulf %281, %281 : vector<32x1xf32>
    %288 = arith.subf %286, %287 : vector<32x1xf32>
    %cst_176 = arith.constant 0.000000e+00 : f32
    %289 = vector.broadcast %cst_176 : f32 to vector<32x1xf32>
    %290 = arith.maximumf %288, %289 : vector<32x1xf32>
    %291 = vector.broadcast %281 : vector<32x1xf32> to vector<32x128xf32>
    %292 = arith.subf %275, %291 : vector<32x128xf32>
    %293 = vector.broadcast %276 : vector<32x1xf32> to vector<32x128xf32>
    %294 = arith.mulf %293, %292 : vector<32x128xf32>
    %cst_177 = arith.constant 9.99999974E-6 : f32
    %295 = vector.broadcast %cst_177 : f32 to vector<32x1xf32>
    %296 = arith.addf %290, %295 : vector<32x1xf32>
    %297 = math.rsqrt %296 : vector<32x1xf32>
    %298 = vector.broadcast %297 : vector<32x1xf32> to vector<32x128xf32>
    %299 = arith.mulf %294, %298 : vector<32x128xf32>
    %300 = vector.broadcast %277 : vector<32x1xf32> to vector<32x128xf32>
    %301 = arith.addf %299, %300 : vector<32x128xf32>
    %cst_178 = arith.constant 0.000000e+00 : f32
    %302 = vector.broadcast %cst_178 : f32 to vector<32x128xf32>
    %303 = arith.maximumf %301, %302 : vector<32x128xf32>
    %c0_179 = arith.constant 0 : index
    %c0_180 = arith.constant 0 : index
    %304 = vector.load %arg14[%c0_179, %c0_180] : memref<32x288xbf16, #tpu.memory_space<vmem>>, vector<32x288xbf16>
    %c9_i32_181 = arith.constant 9 : i32
    %305 = tpu.dynamic_rotate %303 by %c9_i32_181 dim 1 : vector<32x128xf32>, i32 -> vector<32x128xf32>
    %c0_182 = arith.constant 0 : index
    %c0_183 = arith.constant 0 : index
    %c0_184 = arith.constant 0 : index
    %306 = vector.load %arg0[%c0_182, %c0_183, %c0_184] : memref<9x1x128xf32, #tpu.memory_space<vmem>>, vector<1x1x128xf32>
    %307 = vector.shape_cast %306 : vector<1x1x128xf32> to vector<1x128xf32>
    %308 = vector.broadcast %307 : vector<1x128xf32> to vector<32x128xf32>
    %309 = arith.mulf %305, %308 : vector<32x128xf32>
    %c8_i32_185 = arith.constant 8 : i32
    %310 = tpu.dynamic_rotate %303 by %c8_i32_185 dim 1 : vector<32x128xf32>, i32 -> vector<32x128xf32>
    %c1_186 = arith.constant 1 : index
    %c0_187 = arith.constant 0 : index
    %c0_188 = arith.constant 0 : index
    %311 = vector.load %arg0[%c1_186, %c0_187, %c0_188] : memref<9x1x128xf32, #tpu.memory_space<vmem>>, vector<1x1x128xf32>
    %312 = vector.shape_cast %311 : vector<1x1x128xf32> to vector<1x128xf32>
    %313 = vector.broadcast %312 : vector<1x128xf32> to vector<32x128xf32>
    %314 = arith.mulf %310, %313 : vector<32x128xf32>
    %c7_i32_189 = arith.constant 7 : i32
    %315 = tpu.dynamic_rotate %303 by %c7_i32_189 dim 1 : vector<32x128xf32>, i32 -> vector<32x128xf32>
    %c2_190 = arith.constant 2 : index
    %c0_191 = arith.constant 0 : index
    %c0_192 = arith.constant 0 : index
    %316 = vector.load %arg0[%c2_190, %c0_191, %c0_192] : memref<9x1x128xf32, #tpu.memory_space<vmem>>, vector<1x1x128xf32>
    %317 = vector.shape_cast %316 : vector<1x1x128xf32> to vector<1x128xf32>
    %318 = vector.broadcast %317 : vector<1x128xf32> to vector<32x128xf32>
    %319 = arith.mulf %315, %318 : vector<32x128xf32>
    %c1_i32_193 = arith.constant 1 : i32
    %320 = tpu.dynamic_rotate %303 by %c1_i32_193 dim 1 : vector<32x128xf32>, i32 -> vector<32x128xf32>
    %c3_194 = arith.constant 3 : index
    %c0_195 = arith.constant 0 : index
    %c0_196 = arith.constant 0 : index
    %321 = vector.load %arg0[%c3_194, %c0_195, %c0_196] : memref<9x1x128xf32, #tpu.memory_space<vmem>>, vector<1x1x128xf32>
    %322 = vector.shape_cast %321 : vector<1x1x128xf32> to vector<1x128xf32>
    %323 = vector.broadcast %322 : vector<1x128xf32> to vector<32x128xf32>
    %324 = arith.mulf %320, %323 : vector<32x128xf32>
    %c4_197 = arith.constant 4 : index
    %c0_198 = arith.constant 0 : index
    %c0_199 = arith.constant 0 : index
    %325 = vector.load %arg0[%c4_197, %c0_198, %c0_199] : memref<9x1x128xf32, #tpu.memory_space<vmem>>, vector<1x1x128xf32>
    %326 = vector.shape_cast %325 : vector<1x1x128xf32> to vector<1x128xf32>
    %327 = vector.broadcast %326 : vector<1x128xf32> to vector<32x128xf32>
    %328 = arith.mulf %303, %327 : vector<32x128xf32>
    %c127_i32_200 = arith.constant 127 : i32
    %329 = tpu.dynamic_rotate %303 by %c127_i32_200 dim 1 : vector<32x128xf32>, i32 -> vector<32x128xf32>
    %c5_201 = arith.constant 5 : index
    %c0_202 = arith.constant 0 : index
    %c0_203 = arith.constant 0 : index
    %330 = vector.load %arg0[%c5_201, %c0_202, %c0_203] : memref<9x1x128xf32, #tpu.memory_space<vmem>>, vector<1x1x128xf32>
    %331 = vector.shape_cast %330 : vector<1x1x128xf32> to vector<1x128xf32>
    %332 = vector.broadcast %331 : vector<1x128xf32> to vector<32x128xf32>
    %333 = arith.mulf %329, %332 : vector<32x128xf32>
    %c121_i32_204 = arith.constant 121 : i32
    %334 = tpu.dynamic_rotate %303 by %c121_i32_204 dim 1 : vector<32x128xf32>, i32 -> vector<32x128xf32>
    %c6_205 = arith.constant 6 : index
    %c0_206 = arith.constant 0 : index
    %c0_207 = arith.constant 0 : index
    %335 = vector.load %arg0[%c6_205, %c0_206, %c0_207] : memref<9x1x128xf32, #tpu.memory_space<vmem>>, vector<1x1x128xf32>
    %336 = vector.shape_cast %335 : vector<1x1x128xf32> to vector<1x128xf32>
    %337 = vector.broadcast %336 : vector<1x128xf32> to vector<32x128xf32>
    %338 = arith.mulf %334, %337 : vector<32x128xf32>
    %c120_i32_208 = arith.constant 120 : i32
    %339 = tpu.dynamic_rotate %303 by %c120_i32_208 dim 1 : vector<32x128xf32>, i32 -> vector<32x128xf32>
    %c7_209 = arith.constant 7 : index
    %c0_210 = arith.constant 0 : index
    %c0_211 = arith.constant 0 : index
    %340 = vector.load %arg0[%c7_209, %c0_210, %c0_211] : memref<9x1x128xf32, #tpu.memory_space<vmem>>, vector<1x1x128xf32>
    %341 = vector.shape_cast %340 : vector<1x1x128xf32> to vector<1x128xf32>
    %342 = vector.broadcast %341 : vector<1x128xf32> to vector<32x128xf32>
    %343 = arith.mulf %339, %342 : vector<32x128xf32>
    %c119_i32_212 = arith.constant 119 : i32
    %344 = tpu.dynamic_rotate %303 by %c119_i32_212 dim 1 : vector<32x128xf32>, i32 -> vector<32x128xf32>
    %c8_213 = arith.constant 8 : index
    %c0_214 = arith.constant 0 : index
    %c0_215 = arith.constant 0 : index
    %345 = vector.load %arg0[%c8_213, %c0_214, %c0_215] : memref<9x1x128xf32, #tpu.memory_space<vmem>>, vector<1x1x128xf32>
    %346 = vector.shape_cast %345 : vector<1x1x128xf32> to vector<1x128xf32>
    %347 = vector.broadcast %346 : vector<1x128xf32> to vector<32x128xf32>
    %348 = arith.mulf %344, %347 : vector<32x128xf32>
    %349 = tpu.concatenate %309, %314, %319, %324, %328, %333, %338, %343, %348 in 0 : vector<32x128xf32>, vector<32x128xf32>, vector<32x128xf32>, vector<32x128xf32>, vector<32x128xf32>, vector<32x128xf32>, vector<32x128xf32>, vector<32x128xf32>, vector<32x128xf32> -> vector<288x128xf32>
    %350 = arith.truncf %349 : vector<288x128xf32> to vector<288x128xbf16>
    %cst_216 = arith.constant dense<0.000000e+00> : vector<32x128xf32>
    %351 = tpu.matmul %304, %350, %cst_216 {dimension_numbers = #tpu.dot_dimension_numbers<[1], [0], [0], [1], [0, 0, 1, 1], [], []>} : vector<32x288xbf16>, vector<288x128xbf16>, vector<32x128xf32> -> vector<32x128xf32>
    %c0_217 = arith.constant 0 : index
    %c0_218 = arith.constant 0 : index
    %352 = vector.load %arg15[%c0_217, %c0_218] : memref<32x1xf32, #tpu.memory_space<vmem>>, vector<32x1xf32>
    %c0_219 = arith.constant 0 : index
    %c0_220 = arith.constant 0 : index
    %353 = vector.load %arg16[%c0_219, %c0_220] : memref<32x1xf32, #tpu.memory_space<vmem>>, vector<32x1xf32>
    %cst_221 = arith.constant dense<0.000000e+00> : vector<32xf32>
    %354 = vector.multi_reduction <add>, %351, %cst_221 [1] : vector<32x128xf32> to vector<32xf32>
    %355 = vector.shape_cast %354 : vector<32xf32> to vector<32x1xf32>
    %cst_222 = arith.constant 7.812500e-03 : f32
    %356 = vector.broadcast %cst_222 : f32 to vector<32x1xf32>
    %357 = arith.mulf %355, %356 : vector<32x1xf32>
    %358 = arith.mulf %351, %351 : vector<32x128xf32>
    %cst_223 = arith.constant dense<0.000000e+00> : vector<32xf32>
    %359 = vector.multi_reduction <add>, %358, %cst_223 [1] : vector<32x128xf32> to vector<32xf32>
    %360 = vector.shape_cast %359 : vector<32xf32> to vector<32x1xf32>
    %cst_224 = arith.constant 7.812500e-03 : f32
    %361 = vector.broadcast %cst_224 : f32 to vector<32x1xf32>
    %362 = arith.mulf %360, %361 : vector<32x1xf32>
    %363 = arith.mulf %357, %357 : vector<32x1xf32>
    %364 = arith.subf %362, %363 : vector<32x1xf32>
    %cst_225 = arith.constant 0.000000e+00 : f32
    %365 = vector.broadcast %cst_225 : f32 to vector<32x1xf32>
    %366 = arith.maximumf %364, %365 : vector<32x1xf32>
    %367 = vector.broadcast %357 : vector<32x1xf32> to vector<32x128xf32>
    %368 = arith.subf %351, %367 : vector<32x128xf32>
    %369 = vector.broadcast %352 : vector<32x1xf32> to vector<32x128xf32>
    %370 = arith.mulf %369, %368 : vector<32x128xf32>
    %cst_226 = arith.constant 9.99999974E-6 : f32
    %371 = vector.broadcast %cst_226 : f32 to vector<32x1xf32>
    %372 = arith.addf %366, %371 : vector<32x1xf32>
    %373 = math.rsqrt %372 : vector<32x1xf32>
    %374 = vector.broadcast %373 : vector<32x1xf32> to vector<32x128xf32>
    %375 = arith.mulf %370, %374 : vector<32x128xf32>
    %376 = vector.broadcast %353 : vector<32x1xf32> to vector<32x128xf32>
    %377 = arith.addf %375, %376 : vector<32x128xf32>
    %cst_227 = arith.constant 0.000000e+00 : f32
    %378 = vector.broadcast %cst_227 : f32 to vector<32x128xf32>
    %379 = arith.maximumf %377, %378 : vector<32x128xf32>
    %c0_228 = arith.constant 0 : index
    %c0_229 = arith.constant 0 : index
    %380 = vector.load %arg17[%c0_228, %c0_229] : memref<32x288xbf16, #tpu.memory_space<vmem>>, vector<32x288xbf16>
    %c9_i32_230 = arith.constant 9 : i32
    %381 = tpu.dynamic_rotate %379 by %c9_i32_230 dim 1 : vector<32x128xf32>, i32 -> vector<32x128xf32>
    %c0_231 = arith.constant 0 : index
    %c0_232 = arith.constant 0 : index
    %c0_233 = arith.constant 0 : index
    %382 = vector.load %arg0[%c0_231, %c0_232, %c0_233] : memref<9x1x128xf32, #tpu.memory_space<vmem>>, vector<1x1x128xf32>
    %383 = vector.shape_cast %382 : vector<1x1x128xf32> to vector<1x128xf32>
    %384 = vector.broadcast %383 : vector<1x128xf32> to vector<32x128xf32>
    %385 = arith.mulf %381, %384 : vector<32x128xf32>
    %c8_i32_234 = arith.constant 8 : i32
    %386 = tpu.dynamic_rotate %379 by %c8_i32_234 dim 1 : vector<32x128xf32>, i32 -> vector<32x128xf32>
    %c1_235 = arith.constant 1 : index
    %c0_236 = arith.constant 0 : index
    %c0_237 = arith.constant 0 : index
    %387 = vector.load %arg0[%c1_235, %c0_236, %c0_237] : memref<9x1x128xf32, #tpu.memory_space<vmem>>, vector<1x1x128xf32>
    %388 = vector.shape_cast %387 : vector<1x1x128xf32> to vector<1x128xf32>
    %389 = vector.broadcast %388 : vector<1x128xf32> to vector<32x128xf32>
    %390 = arith.mulf %386, %389 : vector<32x128xf32>
    %c7_i32_238 = arith.constant 7 : i32
    %391 = tpu.dynamic_rotate %379 by %c7_i32_238 dim 1 : vector<32x128xf32>, i32 -> vector<32x128xf32>
    %c2_239 = arith.constant 2 : index
    %c0_240 = arith.constant 0 : index
    %c0_241 = arith.constant 0 : index
    %392 = vector.load %arg0[%c2_239, %c0_240, %c0_241] : memref<9x1x128xf32, #tpu.memory_space<vmem>>, vector<1x1x128xf32>
    %393 = vector.shape_cast %392 : vector<1x1x128xf32> to vector<1x128xf32>
    %394 = vector.broadcast %393 : vector<1x128xf32> to vector<32x128xf32>
    %395 = arith.mulf %391, %394 : vector<32x128xf32>
    %c1_i32_242 = arith.constant 1 : i32
    %396 = tpu.dynamic_rotate %379 by %c1_i32_242 dim 1 : vector<32x128xf32>, i32 -> vector<32x128xf32>
    %c3_243 = arith.constant 3 : index
    %c0_244 = arith.constant 0 : index
    %c0_245 = arith.constant 0 : index
    %397 = vector.load %arg0[%c3_243, %c0_244, %c0_245] : memref<9x1x128xf32, #tpu.memory_space<vmem>>, vector<1x1x128xf32>
    %398 = vector.shape_cast %397 : vector<1x1x128xf32> to vector<1x128xf32>
    %399 = vector.broadcast %398 : vector<1x128xf32> to vector<32x128xf32>
    %400 = arith.mulf %396, %399 : vector<32x128xf32>
    %c4_246 = arith.constant 4 : index
    %c0_247 = arith.constant 0 : index
    %c0_248 = arith.constant 0 : index
    %401 = vector.load %arg0[%c4_246, %c0_247, %c0_248] : memref<9x1x128xf32, #tpu.memory_space<vmem>>, vector<1x1x128xf32>
    %402 = vector.shape_cast %401 : vector<1x1x128xf32> to vector<1x128xf32>
    %403 = vector.broadcast %402 : vector<1x128xf32> to vector<32x128xf32>
    %404 = arith.mulf %379, %403 : vector<32x128xf32>
    %c127_i32_249 = arith.constant 127 : i32
    %405 = tpu.dynamic_rotate %379 by %c127_i32_249 dim 1 : vector<32x128xf32>, i32 -> vector<32x128xf32>
    %c5_250 = arith.constant 5 : index
    %c0_251 = arith.constant 0 : index
    %c0_252 = arith.constant 0 : index
    %406 = vector.load %arg0[%c5_250, %c0_251, %c0_252] : memref<9x1x128xf32, #tpu.memory_space<vmem>>, vector<1x1x128xf32>
    %407 = vector.shape_cast %406 : vector<1x1x128xf32> to vector<1x128xf32>
    %408 = vector.broadcast %407 : vector<1x128xf32> to vector<32x128xf32>
    %409 = arith.mulf %405, %408 : vector<32x128xf32>
    %c121_i32_253 = arith.constant 121 : i32
    %410 = tpu.dynamic_rotate %379 by %c121_i32_253 dim 1 : vector<32x128xf32>, i32 -> vector<32x128xf32>
    %c6_254 = arith.constant 6 : index
    %c0_255 = arith.constant 0 : index
    %c0_256 = arith.constant 0 : index
    %411 = vector.load %arg0[%c6_254, %c0_255, %c0_256] : memref<9x1x128xf32, #tpu.memory_space<vmem>>, vector<1x1x128xf32>
    %412 = vector.shape_cast %411 : vector<1x1x128xf32> to vector<1x128xf32>
    %413 = vector.broadcast %412 : vector<1x128xf32> to vector<32x128xf32>
    %414 = arith.mulf %410, %413 : vector<32x128xf32>
    %c120_i32_257 = arith.constant 120 : i32
    %415 = tpu.dynamic_rotate %379 by %c120_i32_257 dim 1 : vector<32x128xf32>, i32 -> vector<32x128xf32>
    %c7_258 = arith.constant 7 : index
    %c0_259 = arith.constant 0 : index
    %c0_260 = arith.constant 0 : index
    %416 = vector.load %arg0[%c7_258, %c0_259, %c0_260] : memref<9x1x128xf32, #tpu.memory_space<vmem>>, vector<1x1x128xf32>
    %417 = vector.shape_cast %416 : vector<1x1x128xf32> to vector<1x128xf32>
    %418 = vector.broadcast %417 : vector<1x128xf32> to vector<32x128xf32>
    %419 = arith.mulf %415, %418 : vector<32x128xf32>
    %c119_i32_261 = arith.constant 119 : i32
    %420 = tpu.dynamic_rotate %379 by %c119_i32_261 dim 1 : vector<32x128xf32>, i32 -> vector<32x128xf32>
    %c8_262 = arith.constant 8 : index
    %c0_263 = arith.constant 0 : index
    %c0_264 = arith.constant 0 : index
    %421 = vector.load %arg0[%c8_262, %c0_263, %c0_264] : memref<9x1x128xf32, #tpu.memory_space<vmem>>, vector<1x1x128xf32>
    %422 = vector.shape_cast %421 : vector<1x1x128xf32> to vector<1x128xf32>
    %423 = vector.broadcast %422 : vector<1x128xf32> to vector<32x128xf32>
    %424 = arith.mulf %420, %423 : vector<32x128xf32>
    %425 = tpu.concatenate %385, %390, %395, %400, %404, %409, %414, %419, %424 in 0 : vector<32x128xf32>, vector<32x128xf32>, vector<32x128xf32>, vector<32x128xf32>, vector<32x128xf32>, vector<32x128xf32>, vector<32x128xf32>, vector<32x128xf32>, vector<32x128xf32> -> vector<288x128xf32>
    %426 = arith.truncf %425 : vector<288x128xf32> to vector<288x128xbf16>
    %cst_265 = arith.constant dense<0.000000e+00> : vector<32x128xf32>
    %427 = tpu.matmul %380, %426, %cst_265 {dimension_numbers = #tpu.dot_dimension_numbers<[1], [0], [0], [1], [0, 0, 1, 1], [], []>} : vector<32x288xbf16>, vector<288x128xbf16>, vector<32x128xf32> -> vector<32x128xf32>
    %c0_266 = arith.constant 0 : index
    %c0_267 = arith.constant 0 : index
    %428 = vector.load %arg18[%c0_266, %c0_267] : memref<32x1xf32, #tpu.memory_space<vmem>>, vector<32x1xf32>
    %c0_268 = arith.constant 0 : index
    %c0_269 = arith.constant 0 : index
    %429 = vector.load %arg19[%c0_268, %c0_269] : memref<32x1xf32, #tpu.memory_space<vmem>>, vector<32x1xf32>
    %cst_270 = arith.constant dense<0.000000e+00> : vector<32xf32>
    %430 = vector.multi_reduction <add>, %427, %cst_270 [1] : vector<32x128xf32> to vector<32xf32>
    %431 = vector.shape_cast %430 : vector<32xf32> to vector<32x1xf32>
    %cst_271 = arith.constant 7.812500e-03 : f32
    %432 = vector.broadcast %cst_271 : f32 to vector<32x1xf32>
    %433 = arith.mulf %431, %432 : vector<32x1xf32>
    %434 = arith.mulf %427, %427 : vector<32x128xf32>
    %cst_272 = arith.constant dense<0.000000e+00> : vector<32xf32>
    %435 = vector.multi_reduction <add>, %434, %cst_272 [1] : vector<32x128xf32> to vector<32xf32>
    %436 = vector.shape_cast %435 : vector<32xf32> to vector<32x1xf32>
    %cst_273 = arith.constant 7.812500e-03 : f32
    %437 = vector.broadcast %cst_273 : f32 to vector<32x1xf32>
    %438 = arith.mulf %436, %437 : vector<32x1xf32>
    %439 = arith.mulf %433, %433 : vector<32x1xf32>
    %440 = arith.subf %438, %439 : vector<32x1xf32>
    %cst_274 = arith.constant 0.000000e+00 : f32
    %441 = vector.broadcast %cst_274 : f32 to vector<32x1xf32>
    %442 = arith.maximumf %440, %441 : vector<32x1xf32>
    %443 = vector.broadcast %433 : vector<32x1xf32> to vector<32x128xf32>
    %444 = arith.subf %427, %443 : vector<32x128xf32>
    %445 = vector.broadcast %428 : vector<32x1xf32> to vector<32x128xf32>
    %446 = arith.mulf %445, %444 : vector<32x128xf32>
    %cst_275 = arith.constant 9.99999974E-6 : f32
    %447 = vector.broadcast %cst_275 : f32 to vector<32x1xf32>
    %448 = arith.addf %442, %447 : vector<32x1xf32>
    %449 = math.rsqrt %448 : vector<32x1xf32>
    %450 = vector.broadcast %449 : vector<32x1xf32> to vector<32x128xf32>
    %451 = arith.mulf %446, %450 : vector<32x128xf32>
    %452 = vector.broadcast %429 : vector<32x1xf32> to vector<32x128xf32>
    %453 = arith.addf %451, %452 : vector<32x128xf32>
    %454 = arith.addf %453, %303 : vector<32x128xf32>
    %c0_276 = arith.constant 0 : index
    %c0_277 = arith.constant 0 : index
    %455 = vector.load %arg20[%c0_276, %c0_277] : memref<32x288xbf16, #tpu.memory_space<vmem>>, vector<32x288xbf16>
    %c9_i32_278 = arith.constant 9 : i32
    %456 = tpu.dynamic_rotate %454 by %c9_i32_278 dim 1 : vector<32x128xf32>, i32 -> vector<32x128xf32>
    %c0_279 = arith.constant 0 : index
    %c0_280 = arith.constant 0 : index
    %c0_281 = arith.constant 0 : index
    %457 = vector.load %arg0[%c0_279, %c0_280, %c0_281] : memref<9x1x128xf32, #tpu.memory_space<vmem>>, vector<1x1x128xf32>
    %458 = vector.shape_cast %457 : vector<1x1x128xf32> to vector<1x128xf32>
    %459 = vector.broadcast %458 : vector<1x128xf32> to vector<32x128xf32>
    %460 = arith.mulf %456, %459 : vector<32x128xf32>
    %c8_i32_282 = arith.constant 8 : i32
    %461 = tpu.dynamic_rotate %454 by %c8_i32_282 dim 1 : vector<32x128xf32>, i32 -> vector<32x128xf32>
    %c1_283 = arith.constant 1 : index
    %c0_284 = arith.constant 0 : index
    %c0_285 = arith.constant 0 : index
    %462 = vector.load %arg0[%c1_283, %c0_284, %c0_285] : memref<9x1x128xf32, #tpu.memory_space<vmem>>, vector<1x1x128xf32>
    %463 = vector.shape_cast %462 : vector<1x1x128xf32> to vector<1x128xf32>
    %464 = vector.broadcast %463 : vector<1x128xf32> to vector<32x128xf32>
    %465 = arith.mulf %461, %464 : vector<32x128xf32>
    %c7_i32_286 = arith.constant 7 : i32
    %466 = tpu.dynamic_rotate %454 by %c7_i32_286 dim 1 : vector<32x128xf32>, i32 -> vector<32x128xf32>
    %c2_287 = arith.constant 2 : index
    %c0_288 = arith.constant 0 : index
    %c0_289 = arith.constant 0 : index
    %467 = vector.load %arg0[%c2_287, %c0_288, %c0_289] : memref<9x1x128xf32, #tpu.memory_space<vmem>>, vector<1x1x128xf32>
    %468 = vector.shape_cast %467 : vector<1x1x128xf32> to vector<1x128xf32>
    %469 = vector.broadcast %468 : vector<1x128xf32> to vector<32x128xf32>
    %470 = arith.mulf %466, %469 : vector<32x128xf32>
    %c1_i32_290 = arith.constant 1 : i32
    %471 = tpu.dynamic_rotate %454 by %c1_i32_290 dim 1 : vector<32x128xf32>, i32 -> vector<32x128xf32>
    %c3_291 = arith.constant 3 : index
    %c0_292 = arith.constant 0 : index
    %c0_293 = arith.constant 0 : index
    %472 = vector.load %arg0[%c3_291, %c0_292, %c0_293] : memref<9x1x128xf32, #tpu.memory_space<vmem>>, vector<1x1x128xf32>
    %473 = vector.shape_cast %472 : vector<1x1x128xf32> to vector<1x128xf32>
    %474 = vector.broadcast %473 : vector<1x128xf32> to vector<32x128xf32>
    %475 = arith.mulf %471, %474 : vector<32x128xf32>
    %c4_294 = arith.constant 4 : index
    %c0_295 = arith.constant 0 : index
    %c0_296 = arith.constant 0 : index
    %476 = vector.load %arg0[%c4_294, %c0_295, %c0_296] : memref<9x1x128xf32, #tpu.memory_space<vmem>>, vector<1x1x128xf32>
    %477 = vector.shape_cast %476 : vector<1x1x128xf32> to vector<1x128xf32>
    %478 = vector.broadcast %477 : vector<1x128xf32> to vector<32x128xf32>
    %479 = arith.mulf %454, %478 : vector<32x128xf32>
    %c127_i32_297 = arith.constant 127 : i32
    %480 = tpu.dynamic_rotate %454 by %c127_i32_297 dim 1 : vector<32x128xf32>, i32 -> vector<32x128xf32>
    %c5_298 = arith.constant 5 : index
    %c0_299 = arith.constant 0 : index
    %c0_300 = arith.constant 0 : index
    %481 = vector.load %arg0[%c5_298, %c0_299, %c0_300] : memref<9x1x128xf32, #tpu.memory_space<vmem>>, vector<1x1x128xf32>
    %482 = vector.shape_cast %481 : vector<1x1x128xf32> to vector<1x128xf32>
    %483 = vector.broadcast %482 : vector<1x128xf32> to vector<32x128xf32>
    %484 = arith.mulf %480, %483 : vector<32x128xf32>
    %c121_i32_301 = arith.constant 121 : i32
    %485 = tpu.dynamic_rotate %454 by %c121_i32_301 dim 1 : vector<32x128xf32>, i32 -> vector<32x128xf32>
    %c6_302 = arith.constant 6 : index
    %c0_303 = arith.constant 0 : index
    %c0_304 = arith.constant 0 : index
    %486 = vector.load %arg0[%c6_302, %c0_303, %c0_304] : memref<9x1x128xf32, #tpu.memory_space<vmem>>, vector<1x1x128xf32>
    %487 = vector.shape_cast %486 : vector<1x1x128xf32> to vector<1x128xf32>
    %488 = vector.broadcast %487 : vector<1x128xf32> to vector<32x128xf32>
    %489 = arith.mulf %485, %488 : vector<32x128xf32>
    %c120_i32_305 = arith.constant 120 : i32
    %490 = tpu.dynamic_rotate %454 by %c120_i32_305 dim 1 : vector<32x128xf32>, i32 -> vector<32x128xf32>
    %c7_306 = arith.constant 7 : index
    %c0_307 = arith.constant 0 : index
    %c0_308 = arith.constant 0 : index
    %491 = vector.load %arg0[%c7_306, %c0_307, %c0_308] : memref<9x1x128xf32, #tpu.memory_space<vmem>>, vector<1x1x128xf32>
    %492 = vector.shape_cast %491 : vector<1x1x128xf32> to vector<1x128xf32>
    %493 = vector.broadcast %492 : vector<1x128xf32> to vector<32x128xf32>
    %494 = arith.mulf %490, %493 : vector<32x128xf32>
    %c119_i32_309 = arith.constant 119 : i32
    %495 = tpu.dynamic_rotate %454 by %c119_i32_309 dim 1 : vector<32x128xf32>, i32 -> vector<32x128xf32>
    %c8_310 = arith.constant 8 : index
    %c0_311 = arith.constant 0 : index
    %c0_312 = arith.constant 0 : index
    %496 = vector.load %arg0[%c8_310, %c0_311, %c0_312] : memref<9x1x128xf32, #tpu.memory_space<vmem>>, vector<1x1x128xf32>
    %497 = vector.shape_cast %496 : vector<1x1x128xf32> to vector<1x128xf32>
    %498 = vector.broadcast %497 : vector<1x128xf32> to vector<32x128xf32>
    %499 = arith.mulf %495, %498 : vector<32x128xf32>
    %500 = tpu.concatenate %460, %465, %470, %475, %479, %484, %489, %494, %499 in 0 : vector<32x128xf32>, vector<32x128xf32>, vector<32x128xf32>, vector<32x128xf32>, vector<32x128xf32>, vector<32x128xf32>, vector<32x128xf32>, vector<32x128xf32>, vector<32x128xf32> -> vector<288x128xf32>
    %501 = arith.truncf %500 : vector<288x128xf32> to vector<288x128xbf16>
    %cst_313 = arith.constant dense<0.000000e+00> : vector<32x128xf32>
    %502 = tpu.matmul %455, %501, %cst_313 {dimension_numbers = #tpu.dot_dimension_numbers<[1], [0], [0], [1], [0, 0, 1, 1], [], []>} : vector<32x288xbf16>, vector<288x128xbf16>, vector<32x128xf32> -> vector<32x128xf32>
    %c0_314 = arith.constant 0 : index
    %c0_315 = arith.constant 0 : index
    %503 = vector.load %arg21[%c0_314, %c0_315] : memref<32x1xf32, #tpu.memory_space<vmem>>, vector<32x1xf32>
    %c0_316 = arith.constant 0 : index
    %c0_317 = arith.constant 0 : index
    %504 = vector.load %arg22[%c0_316, %c0_317] : memref<32x1xf32, #tpu.memory_space<vmem>>, vector<32x1xf32>
    %cst_318 = arith.constant dense<0.000000e+00> : vector<32xf32>
    %505 = vector.multi_reduction <add>, %502, %cst_318 [1] : vector<32x128xf32> to vector<32xf32>
    %506 = vector.shape_cast %505 : vector<32xf32> to vector<32x1xf32>
    %cst_319 = arith.constant 7.812500e-03 : f32
    %507 = vector.broadcast %cst_319 : f32 to vector<32x1xf32>
    %508 = arith.mulf %506, %507 : vector<32x1xf32>
    %509 = arith.mulf %502, %502 : vector<32x128xf32>
    %cst_320 = arith.constant dense<0.000000e+00> : vector<32xf32>
    %510 = vector.multi_reduction <add>, %509, %cst_320 [1] : vector<32x128xf32> to vector<32xf32>
    %511 = vector.shape_cast %510 : vector<32xf32> to vector<32x1xf32>
    %cst_321 = arith.constant 7.812500e-03 : f32
    %512 = vector.broadcast %cst_321 : f32 to vector<32x1xf32>
    %513 = arith.mulf %511, %512 : vector<32x1xf32>
    %514 = arith.mulf %508, %508 : vector<32x1xf32>
    %515 = arith.subf %513, %514 : vector<32x1xf32>
    %cst_322 = arith.constant 0.000000e+00 : f32
    %516 = vector.broadcast %cst_322 : f32 to vector<32x1xf32>
    %517 = arith.maximumf %515, %516 : vector<32x1xf32>
    %518 = vector.broadcast %508 : vector<32x1xf32> to vector<32x128xf32>
    %519 = arith.subf %502, %518 : vector<32x128xf32>
    %520 = vector.broadcast %503 : vector<32x1xf32> to vector<32x128xf32>
    %521 = arith.mulf %520, %519 : vector<32x128xf32>
    %cst_323 = arith.constant 9.99999974E-6 : f32
    %522 = vector.broadcast %cst_323 : f32 to vector<32x1xf32>
    %523 = arith.addf %517, %522 : vector<32x1xf32>
    %524 = math.rsqrt %523 : vector<32x1xf32>
    %525 = vector.broadcast %524 : vector<32x1xf32> to vector<32x128xf32>
    %526 = arith.mulf %521, %525 : vector<32x128xf32>
    %527 = vector.broadcast %504 : vector<32x1xf32> to vector<32x128xf32>
    %528 = arith.addf %526, %527 : vector<32x128xf32>
    %cst_324 = arith.constant 0.000000e+00 : f32
    %529 = vector.broadcast %cst_324 : f32 to vector<32x128xf32>
    %530 = arith.maximumf %528, %529 : vector<32x128xf32>
    %c0_325 = arith.constant 0 : index
    %c0_326 = arith.constant 0 : index
    %531 = vector.load %arg23[%c0_325, %c0_326] : memref<3x32xbf16, #tpu.memory_space<vmem>>, vector<3x32xbf16>
    %532 = arith.truncf %530 : vector<32x128xf32> to vector<32x128xbf16>
    %cst_327 = arith.constant dense<0.000000e+00> : vector<3x128xf32>
    %533 = tpu.matmul %531, %532, %cst_327 {dimension_numbers = #tpu.dot_dimension_numbers<[1], [0], [0], [1], [0, 0, 1, 1], [], []>} : vector<3x32xbf16>, vector<32x128xbf16>, vector<3x128xf32> -> vector<3x128xf32>
    %c0_328 = arith.constant 0 : index
    %c0_329 = arith.constant 0 : index
    %534 = vector.load %arg24[%c0_328, %c0_329] : memref<3x1xf32, #tpu.memory_space<vmem>>, vector<3x1xf32>
    %c0_330 = arith.constant 0 : index
    %c0_331 = arith.constant 0 : index
    %535 = vector.load %arg25[%c0_330, %c0_331] : memref<3x1xf32, #tpu.memory_space<vmem>>, vector<3x1xf32>
    %cst_332 = arith.constant dense<0.000000e+00> : vector<3xf32>
    %536 = vector.multi_reduction <add>, %533, %cst_332 [1] : vector<3x128xf32> to vector<3xf32>
    %537 = vector.shape_cast %536 : vector<3xf32> to vector<3x1xf32>
    %cst_333 = arith.constant 7.812500e-03 : f32
    %538 = vector.broadcast %cst_333 : f32 to vector<3x1xf32>
    %539 = arith.mulf %537, %538 : vector<3x1xf32>
    %540 = arith.mulf %533, %533 : vector<3x128xf32>
    %cst_334 = arith.constant dense<0.000000e+00> : vector<3xf32>
    %541 = vector.multi_reduction <add>, %540, %cst_334 [1] : vector<3x128xf32> to vector<3xf32>
    %542 = vector.shape_cast %541 : vector<3xf32> to vector<3x1xf32>
    %cst_335 = arith.constant 7.812500e-03 : f32
    %543 = vector.broadcast %cst_335 : f32 to vector<3x1xf32>
    %544 = arith.mulf %542, %543 : vector<3x1xf32>
    %545 = arith.mulf %539, %539 : vector<3x1xf32>
    %546 = arith.subf %544, %545 : vector<3x1xf32>
    %cst_336 = arith.constant 0.000000e+00 : f32
    %547 = vector.broadcast %cst_336 : f32 to vector<3x1xf32>
    %548 = arith.maximumf %546, %547 : vector<3x1xf32>
    %549 = vector.broadcast %539 : vector<3x1xf32> to vector<3x128xf32>
    %550 = arith.subf %533, %549 : vector<3x128xf32>
    %551 = vector.broadcast %534 : vector<3x1xf32> to vector<3x128xf32>
    %552 = arith.mulf %551, %550 : vector<3x128xf32>
    %cst_337 = arith.constant 9.99999974E-6 : f32
    %553 = vector.broadcast %cst_337 : f32 to vector<3x1xf32>
    %554 = arith.addf %548, %553 : vector<3x1xf32>
    %555 = math.rsqrt %554 : vector<3x1xf32>
    %556 = vector.broadcast %555 : vector<3x1xf32> to vector<3x128xf32>
    %557 = arith.mulf %552, %556 : vector<3x128xf32>
    %558 = vector.broadcast %535 : vector<3x1xf32> to vector<3x128xf32>
    %559 = arith.addf %557, %558 : vector<3x128xf32>
    %cst_338 = arith.constant 0.000000e+00 : f32
    %560 = vector.broadcast %cst_338 : f32 to vector<3x128xf32>
    %561 = arith.maximumf %559, %560 : vector<3x128xf32>
    %c0_339 = arith.constant 0 : index
    %c0_340 = arith.constant 0 : index
    %562 = vector.load %arg26[%c0_339, %c0_340] : memref<3x128xf32, #tpu.memory_space<vmem>>, vector<3x128xf32>
    tpu.vector_store %arg26[%c0_339, %c0_340], %561 {strides = array<i32>} : memref<3x128xf32, #tpu.memory_space<vmem>>, vector<3x128xf32>,
    return
  }
}

module attributes {stable_mosaic.version = 11 : i64} {
  func.func @_heads_kernel(%arg0: memref<2x128xf32, #tpu.memory_space<vmem>>, %arg1: memref<2x64xf32, #tpu.memory_space<vmem>>, %arg2: memref<128x722xbf16, #tpu.memory_space<vmem>>, %arg3: memref<1x722xf32, #tpu.memory_space<vmem>>, %arg4: memref<722x65xbf16, #tpu.memory_space<vmem>>, %arg5: memref<1x65xf32, #tpu.memory_space<vmem>>, %arg6: memref<64x361xbf16, #tpu.memory_space<vmem>>, %arg7: memref<1x361xf32, #tpu.memory_space<vmem>>, %arg8: memref<361x256xbf16, #tpu.memory_space<vmem>>, %arg9: memref<1x256xf32, #tpu.memory_space<vmem>>, %arg10: memref<256x1xbf16, #tpu.memory_space<vmem>>, %arg11: memref<1x1xf32, #tpu.memory_space<vmem>>, %arg12: memref<2x65xf32, #tpu.memory_space<vmem>>, %arg13: memref<2x1xf32, #tpu.memory_space<vmem>>) attributes {dimension_semantics = [], scalar_prefetch = 0 : i64, scratch_operands = 0 : i64, tpu.core_type = #tpu.core_type<tc>} {
    %c0 = arith.constant 0 : index
    %c0_0 = arith.constant 0 : index
    %0 = vector.load %arg0[%c0, %c0_0] : memref<2x128xf32, #tpu.memory_space<vmem>>, vector<2x128xf32>
    %1 = arith.truncf %0 : vector<2x128xf32> to vector<2x128xbf16>
    %c0_1 = arith.constant 0 : index
    %c0_2 = arith.constant 0 : index
    %2 = vector.load %arg2[%c0_1, %c0_2] : memref<128x722xbf16, #tpu.memory_space<vmem>>, vector<128x722xbf16>
    %cst = arith.constant dense<0.000000e+00> : vector<2x722xf32>
    %3 = tpu.matmul %1, %2, %cst {dimension_numbers = #tpu.dot_dimension_numbers<[1], [0], [0], [1], [0, 0, 1, 1], [], []>} : vector<2x128xbf16>, vector<128x722xbf16>, vector<2x722xf32> -> vector<2x722xf32>
    %c0_3 = arith.constant 0 : index
    %c0_4 = arith.constant 0 : index
    %4 = vector.load %arg3[%c0_3, %c0_4] : memref<1x722xf32, #tpu.memory_space<vmem>>, vector<1x722xf32>
    %5 = vector.broadcast %4 : vector<1x722xf32> to vector<2x722xf32>
    %6 = arith.addf %3, %5 : vector<2x722xf32>
    %cst_5 = arith.constant 0.000000e+00 : f32
    %7 = vector.broadcast %cst_5 : f32 to vector<2x722xf32>
    %8 = arith.maximumf %6, %7 : vector<2x722xf32>
    %9 = arith.truncf %8 : vector<2x722xf32> to vector<2x722xbf16>
    %c0_6 = arith.constant 0 : index
    %c0_7 = arith.constant 0 : index
    %10 = vector.load %arg4[%c0_6, %c0_7] : memref<722x65xbf16, #tpu.memory_space<vmem>>, vector<722x65xbf16>
    %cst_8 = arith.constant dense<0.000000e+00> : vector<2x65xf32>
    %11 = tpu.matmul %9, %10, %cst_8 {dimension_numbers = #tpu.dot_dimension_numbers<[1], [0], [0], [1], [0, 0, 1, 1], [], []>} : vector<2x722xbf16>, vector<722x65xbf16>, vector<2x65xf32> -> vector<2x65xf32>
    %c0_9 = arith.constant 0 : index
    %c0_10 = arith.constant 0 : index
    %12 = vector.load %arg5[%c0_9, %c0_10] : memref<1x65xf32, #tpu.memory_space<vmem>>, vector<1x65xf32>
    %13 = vector.broadcast %12 : vector<1x65xf32> to vector<2x65xf32>
    %14 = arith.addf %11, %13 : vector<2x65xf32>
    %c0_11 = arith.constant 0 : index
    %c0_12 = arith.constant 0 : index
    %15 = vector.load %arg12[%c0_11, %c0_12] : memref<2x65xf32, #tpu.memory_space<vmem>>, vector<2x65xf32>
    tpu.vector_store %arg12[%c0_11, %c0_12], %14 {strides = array<i32>} : memref<2x65xf32, #tpu.memory_space<vmem>>, vector<2x65xf32>,
    %c0_13 = arith.constant 0 : index
    %c0_14 = arith.constant 0 : index
    %16 = vector.load %arg1[%c0_13, %c0_14] : memref<2x64xf32, #tpu.memory_space<vmem>>, vector<2x64xf32>
    %17 = arith.truncf %16 : vector<2x64xf32> to vector<2x64xbf16>
    %c0_15 = arith.constant 0 : index
    %c0_16 = arith.constant 0 : index
    %18 = vector.load %arg6[%c0_15, %c0_16] : memref<64x361xbf16, #tpu.memory_space<vmem>>, vector<64x361xbf16>
    %cst_17 = arith.constant dense<0.000000e+00> : vector<2x361xf32>
    %19 = tpu.matmul %17, %18, %cst_17 {dimension_numbers = #tpu.dot_dimension_numbers<[1], [0], [0], [1], [0, 0, 1, 1], [], []>} : vector<2x64xbf16>, vector<64x361xbf16>, vector<2x361xf32> -> vector<2x361xf32>
    %c0_18 = arith.constant 0 : index
    %c0_19 = arith.constant 0 : index
    %20 = vector.load %arg7[%c0_18, %c0_19] : memref<1x361xf32, #tpu.memory_space<vmem>>, vector<1x361xf32>
    %21 = vector.broadcast %20 : vector<1x361xf32> to vector<2x361xf32>
    %22 = arith.addf %19, %21 : vector<2x361xf32>
    %cst_20 = arith.constant 0.000000e+00 : f32
    %23 = vector.broadcast %cst_20 : f32 to vector<2x361xf32>
    %24 = arith.maximumf %22, %23 : vector<2x361xf32>
    %25 = arith.truncf %24 : vector<2x361xf32> to vector<2x361xbf16>
    %c0_21 = arith.constant 0 : index
    %c0_22 = arith.constant 0 : index
    %26 = vector.load %arg8[%c0_21, %c0_22] : memref<361x256xbf16, #tpu.memory_space<vmem>>, vector<361x256xbf16>
    %cst_23 = arith.constant dense<0.000000e+00> : vector<2x256xf32>
    %27 = tpu.matmul %25, %26, %cst_23 {dimension_numbers = #tpu.dot_dimension_numbers<[1], [0], [0], [1], [0, 0, 1, 1], [], []>} : vector<2x361xbf16>, vector<361x256xbf16>, vector<2x256xf32> -> vector<2x256xf32>
    %c0_24 = arith.constant 0 : index
    %c0_25 = arith.constant 0 : index
    %28 = vector.load %arg9[%c0_24, %c0_25] : memref<1x256xf32, #tpu.memory_space<vmem>>, vector<1x256xf32>
    %29 = vector.broadcast %28 : vector<1x256xf32> to vector<2x256xf32>
    %30 = arith.addf %27, %29 : vector<2x256xf32>
    %cst_26 = arith.constant 0.000000e+00 : f32
    %31 = vector.broadcast %cst_26 : f32 to vector<2x256xf32>
    %32 = arith.maximumf %30, %31 : vector<2x256xf32>
    %33 = arith.truncf %32 : vector<2x256xf32> to vector<2x256xbf16>
    %c0_27 = arith.constant 0 : index
    %c0_28 = arith.constant 0 : index
    %34 = vector.load %arg10[%c0_27, %c0_28] : memref<256x1xbf16, #tpu.memory_space<vmem>>, vector<256x1xbf16>
    %cst_29 = arith.constant dense<0.000000e+00> : vector<2x1xf32>
    %35 = tpu.matmul %33, %34, %cst_29 {dimension_numbers = #tpu.dot_dimension_numbers<[1], [0], [0], [1], [0, 0, 1, 1], [], []>} : vector<2x256xbf16>, vector<256x1xbf16>, vector<2x1xf32> -> vector<2x1xf32>
    %c0_30 = arith.constant 0 : index
    %c0_31 = arith.constant 0 : index
    %36 = vector.load %arg11[%c0_30, %c0_31] : memref<1x1xf32, #tpu.memory_space<vmem>>, vector<1x1xf32>
    %37 = vector.broadcast %36 : vector<1x1xf32> to vector<2x1xf32>
    %38 = arith.addf %35, %37 : vector<2x1xf32>
    %39 = math.tanh %38 : vector<2x1xf32>
    %c0_32 = arith.constant 0 : index
    %c0_33 = arith.constant 0 : index
    %40 = vector.load %arg13[%c0_32, %c0_33] : memref<2x1xf32, #tpu.memory_space<vmem>>, vector<2x1xf32>
    tpu.vector_store %arg13[%c0_32, %c0_33], %39 {strides = array<i32>} : memref<2x1xf32, #tpu.memory_space<vmem>>, vector<2x1xf32>,
    return
  }
}

</mosaic_0001>

<llo_original>
// kernel: net_forward.3
$region0: #{net_forward.3}
  #allocation0 [shape = 'u32[]', space=smem, size = 0x4, offset = 0x4, fixed_abs, tag = 'smem constant byte address 0x4 - core index']
  #allocation1 [shape = 'u32[72,128]{1,0:T(1,128)}', space=vmem, size = 0x9000, scoped, tag = 'internal scratch']
  #allocation2 [shape = 'f32[1,1]{1,0:T(1,128)S(1)}', space=vmem, size = 0x200, scoped, tag = 'scoped memory for net_forward.3']
  %s0 = inlined_call_operand.vmem [shape: f32[2,128], index: 0, kind: input, shape index: {}]
  %s1 = inlined_call_operand.vmem [shape: f32[2,64], index: 1, kind: input, shape index: {}]
  %s2 = inlined_call_operand.vmem [shape: bf16[128,722], index: 2, kind: input, shape index: {}]
  %s3 = inlined_call_operand.vmem [shape: f32[1,722], index: 3, kind: input, shape index: {}]
  %s4 = inlined_call_operand.vmem [shape: bf16[722,65], index: 4, kind: input, shape index: {}]
  %s5 = inlined_call_operand.vmem [shape: f32[1,65], index: 5, kind: input, shape index: {}]
  %s6 = inlined_call_operand.vmem [shape: bf16[64,361], index: 6, kind: input, shape index: {}]
  %s7 = inlined_call_operand.vmem [shape: f32[1,361], index: 7, kind: input, shape index: {}]
  %s8 = inlined_call_operand.vmem [shape: bf16[361,256], index: 8, kind: input, shape index: {}]
  %s9 = inlined_call_operand.vmem [shape: f32[1,256], index: 9, kind: input, shape index: {}]
  %s10 = inlined_call_operand.vmem [shape: bf16[256,1], index: 10, kind: input, shape index: {}]
  %s11 = inlined_call_operand.<no memory space> [shape: f32[1,1], index: 11, kind: input, shape index: {}]
  %s12 = inlined_call_operand.hbm [shape: f32[2,65], index: 12, kind: output, shape index: {0}]
  %s13 = inlined_call_operand.vmem [shape: f32[2,1], index: 13, kind: output, shape index: {1}]
  %14 = xla_tuple %s12, %s13
  %s15 = sld [smem:[#allocation0]]
  $region66: #{net_forward.3} parent=0
    _
  %s17 = ssub.s32 1, %s15
  %s18 = scalar_select 0, %s17, %s15
  %v19 = vstv %s11
  %20 = vst [vmem:[#allocation2] sm:$0x1] %v19
  $region1: #{net_forward.3} parent=0
    #allocation3 [shape = 'u8[1024]{0}', space=vmem, size = 0x400, scoped, tag = 'output window, operand 0, single buffered']
    #allocation4 [shape = 's32[1]{0}', space=sflag, size = 0x4, scoped, tag = 'scoped memory for net_forward.3']
    %21 = vsyncpa [#allocation4], 0
    // Predicated region
    $region2: #{net_forward.3} parent=1 // pred_check
      _
    $region3: #{net_forward.3} parent=1 // pred_check_branch
      %23 = sbr.rel (0) target = $region5
    $region4: #{net_forward.3} parent=1 // pred_region
      _
    $region5: #{net_forward.3} parent=1 // pred_fallthru
      _
    // Predicated region
    $region6: #{net_forward.3} parent=1 // pred_check
      _
    $region7: #{net_forward.3} parent=1 // pred_check_branch
      %25 = sbr.rel (0) target = $region9
    $region8: #{net_forward.3} parent=1 // pred_region
      _
    $region9: #{net_forward.3} parent=1 // pred_fallthru
      _
    // Predicated region
    $region10: #{net_forward.3} parent=1 // pred_check
      _
    $region11: #{net_forward.3} parent=1 // pred_check_branch
      %27 = sbr.rel (0) target = $region13
    $region12: #{net_forward.3} parent=1 // pred_region
      _
    $region13: #{net_forward.3} parent=1 // pred_fallthru
      _
    // Predicated region
    $region14: #{net_forward.3} parent=1 // pred_check
      _
    $region15: #{net_forward.3} parent=1 // pred_check_branch
      %29 = sbr.rel (0) target = $region17
    $region16: #{net_forward.3} parent=1 // pred_region
      _
    $region17: #{net_forward.3} parent=1 // pred_fallthru
      _
    // Predicated region
    $region18: #{net_forward.3} parent=1 // pred_check
      _
    $region19: #{net_forward.3} parent=1 // pred_check_branch
      %31 = sbr.rel (0) target = $region21
    $region20: #{net_forward.3} parent=1 // pred_region
      _
    $region21: #{net_forward.3} parent=1 // pred_fallthru
      _
    // Predicated region
    $region22: #{net_forward.3} parent=1 // pred_check
      _
    $region23: #{net_forward.3} parent=1 // pred_check_branch
      %33 = sbr.rel (0) target = $region25
    $region24: #{net_forward.3} parent=1 // pred_region
      _
    $region25: #{net_forward.3} parent=1 // pred_fallthru
      _
    // Predicated region
    $region26: #{net_forward.3} parent=1 // pred_check
      _
    $region27: #{net_forward.3} parent=1 // pred_check_branch
      %35 = sbr.rel (0) target = $region29
    $region28: #{net_forward.3} parent=1 // pred_region
      _
    $region29: #{net_forward.3} parent=1 // pred_fallthru
      _
    // Predicated region
    $region30: #{net_forward.3} parent=1 // pred_check
      _
    $region31: #{net_forward.3} parent=1 // pred_check_branch
      %37 = sbr.rel (0) target = $region33
    $region32: #{net_forward.3} parent=1 // pred_region
      _
    $region33: #{net_forward.3} parent=1 // pred_fallthru
      _
    // Predicated region
    $region34: #{net_forward.3} parent=1 // pred_check
      _
    $region35: #{net_forward.3} parent=1 // pred_check_branch
      %39 = sbr.rel (0) target = $region37
    $region36: #{net_forward.3} parent=1 // pred_region
      _
    $region37: #{net_forward.3} parent=1 // pred_fallthru
      _
    // Predicated region
    $region38: #{net_forward.3} parent=1 // pred_check
      _
    $region39: #{net_forward.3} parent=1 // pred_check_branch
      %41 = sbr.rel (0) target = $region41
    $region40: #{net_forward.3} parent=1 // pred_region
      _
    $region41: #{net_forward.3} parent=1 // pred_fallthru
      _
    // Predicated region
    $region42: #{net_forward.3} parent=1 // pred_check
      _
    $region43: #{net_forward.3} parent=1 // pred_check_branch
      %43 = sbr.rel (0) target = $region45
    $region44: #{net_forward.3} parent=1 // pred_region
      _
    $region45: #{net_forward.3} parent=1 // pred_fallthru
      _
    // Predicated region
    $region46: #{net_forward.3} parent=1 // pred_check
      _
    $region47: #{net_forward.3} parent=1 // pred_check_branch
      %45 = sbr.rel (0) target = $region49
    $region48: #{net_forward.3} parent=1 // pred_region
      _
    $region49: #{net_forward.3} parent=1 // pred_fallthru
      _
    %v47 = vld [vmem:[%s0] sm:$0x3]
    %v48 = vpack.c.bf16 %v47, %v47
    %v49 = vld [vmem:[%s2] sm:$0xff]
    %v50 = vld [vmem:[%s2 + $0x8] sm:$0xff]
    %v51 = vld [vmem:[%s2 + $0x10] sm:$0xff]
    %v52 = vld [vmem:[%s2 + $0x18] sm:$0xff]
    %v53 = vld [vmem:[%s2 + $0x20] sm:$0xff]
    %v54 = vld [vmem:[%s2 + $0x28] sm:$0xff]
    %v55 = vld [vmem:[%s2 + $0x30] sm:$0xff]
    %v56 = vld [vmem:[%s2 + $0x38] sm:$0xff]
    %v57 = vld [vmem:[%s2 + $0x40] sm:$0xff]
    %v58 = vld [vmem:[%s2 + $0x48] sm:$0xff]
    %v59 = vld [vmem:[%s2 + $0x50] sm:$0xff]
    %v60 = vld [vmem:[%s2 + $0x58] sm:$0xff]
    %v61 = vld [vmem:[%s2 + $0x60] sm:$0xff]
    %v62 = vld [vmem:[%s2 + $0x68] sm:$0xff]
    %v63 = vld [vmem:[%s2 + $0x70] sm:$0xff]
    %v64 = vld [vmem:[%s2 + $0x78] sm:$0xff]
    %v65 = vld [vmem:[%s2 + $0x80] sm:$0xff]
    %v66 = vld [vmem:[%s2 + $0x88] sm:$0xff]
    %v67 = vld [vmem:[%s2 + $0x90] sm:$0xff]
    %v68 = vld [vmem:[%s2 + $0x98] sm:$0xff]
    %v69 = vld [vmem:[%s2 + $0xa0] sm:$0xff]
    %v70 = vld [vmem:[%s2 + $0xa8] sm:$0xff]
    %v71 = vld [vmem:[%s2 + $0xb0] sm:$0xff]
    %v72 = vld [vmem:[%s2 + $0xb8] sm:$0xff]
    %v73 = vld [vmem:[%s2 + $0xc0] sm:$0xff]
    %v74 = vld [vmem:[%s2 + $0xc8] sm:$0xff]
    %v75 = vld [vmem:[%s2 + $0xd0] sm:$0xff]
    %v76 = vld [vmem:[%s2 + $0xd8] sm:$0xff]
    %v77 = vld [vmem:[%s2 + $0xe0] sm:$0xff]
    %v78 = vld [vmem:[%s2 + $0xe8] sm:$0xff]
    %v79 = vld [vmem:[%s2 + $0xf0] sm:$0xff]
    %v80 = vld [vmem:[%s2 + $0xf8] sm:$0xff]
    %v81 = vld [vmem:[%s2 + $0x100] sm:$0xff]
    %v82 = vld [vmem:[%s2 + $0x108] sm:$0xff]
    %v83 = vld [vmem:[%s2 + $0x110] sm:$0xff]
    %v84 = vld [vmem:[%s2 + $0x118] sm:$0xff]
    %v85 = vld [vmem:[%s2 + $0x120] sm:$0xff]
    %v86 = vld [vmem:[%s2 + $0x128] sm:$0xff]
    %v87 = vld [vmem:[%s2 + $0x130] sm:$0xff]
    %v88 = vld [vmem:[%s2 + $0x138] sm:$0xff]
    %v89 = vld [vmem:[%s2 + $0x140] sm:$0xff]
    %v90 = vld [vmem:[%s2 + $0x148] sm:$0xff]
    %v91 = vld [vmem:[%s2 + $0x150] sm:$0xff]
    %v92 = vld [vmem:[%s2 + $0x158] sm:$0xff]
    %v93 = vld [vmem:[%s2 + $0x160] sm:$0xff]
    %v94 = vld [vmem:[%s2 + $0x168] sm:$0xff]
    %v95 = vld [vmem:[%s2 + $0x170] sm:$0xff]
    %v96 = vld [vmem:[%s2 + $0x178] sm:$0xff]
    %v97 = vld [vmem:[%s3] sm:$0x3f]
    %v99 = vperm.slane %v97, 0
    %v100 = vperm.slane %v97, 1
    %v101 = vperm.slane %v97, 2
    %v102 = vperm.slane %v97, 3
    %v103 = vperm.slane %v97, 4
    %v104 = vperm.slane %v97, 5
    %v159 = vunpack.c.l.b16 %v49
    %v160 = vunpack.c.h.b16 %v49
    %v161 = vunpack.c.l.b16 %v50
    %v162 = vunpack.c.h.b16 %v50
    %v163 = vunpack.c.l.b16 %v51
    %v164 = vunpack.c.h.b16 %v51
    %v165 = vunpack.c.l.b16 %v52
    %v166 = vunpack.c.h.b16 %v52
    %v167 = vunpack.c.l.b16 %v53
    %v168 = vunpack.c.h.b16 %v53
    %v169 = vunpack.c.l.b16 %v54
    %v170 = vunpack.c.h.b16 %v54
    %v171 = vunpack.c.l.b16 %v55
    %v172 = vunpack.c.h.b16 %v55
    %v173 = vunpack.c.l.b16 %v56
    %v174 = vunpack.c.h.b16 %v56
    %v175 = vunpack.c.l.b16 %v57
    %v176 = vunpack.c.h.b16 %v57
    %v177 = vunpack.c.l.b16 %v58
    %v178 = vunpack.c.h.b16 %v58
    %v179 = vunpack.c.l.b16 %v59
    %v180 = vunpack.c.h.b16 %v59
    %v181 = vunpack.c.l.b16 %v60
    %v182 = vunpack.c.h.b16 %v60
    %v183 = vunpack.c.l.b16 %v61
    %v184 = vunpack.c.h.b16 %v61
    %v185 = vunpack.c.l.b16 %v62
    %v186 = vunpack.c.h.b16 %v62
    %v187 = vunpack.c.l.b16 %v63
    %v188 = vunpack.c.h.b16 %v63
    %v189 = vunpack.c.l.b16 %v64
    %v190 = vunpack.c.h.b16 %v64
    %v191 = vunpack.c.l.b16 %v65
    %v192 = vunpack.c.h.b16 %v65
    %v193 = vunpack.c.l.b16 %v66
    %v194 = vunpack.c.h.b16 %v66
    %v195 = vunpack.c.l.b16 %v67
    %v196 = vunpack.c.h.b16 %v67
    %v197 = vunpack.c.l.b16 %v68
    %v198 = vunpack.c.h.b16 %v68
    %v199 = vunpack.c.l.b16 %v69
    %v200 = vunpack.c.h.b16 %v69
    %v201 = vunpack.c.l.b16 %v70
    %v202 = vunpack.c.h.b16 %v70
    %v203 = vunpack.c.l.b16 %v71
    %v204 = vunpack.c.h.b16 %v71
    %v205 = vunpack.c.l.b16 %v72
    %v206 = vunpack.c.h.b16 %v72
    %v207 = vunpack.c.l.b16 %v73
    %v208 = vunpack.c.h.b16 %v73
    %v209 = vunpack.c.l.b16 %v74
    %v210 = vunpack.c.h.b16 %v74
    %v211 = vunpack.c.l.b16 %v75
    %v212 = vunpack.c.h.b16 %v75
    %v213 = vunpack.c.l.b16 %v76
    %v214 = vunpack.c.h.b16 %v76
    %v215 = vunpack.c.l.b16 %v77
    %v216 = vunpack.c.h.b16 %v77
    %v217 = vunpack.c.l.b16 %v78
    %v218 = vunpack.c.h.b16 %v78
    %v219 = vunpack.c.l.b16 %v79
    %v220 = vunpack.c.h.b16 %v79
    %v221 = vunpack.c.l.b16 %v80
    %v222 = vunpack.c.h.b16 %v80
    %v223 = vunpack.c.l.b16 %v81
    %v224 = vunpack.c.h.b16 %v81
    %v225 = vunpack.c.l.b16 %v82
    %v226 = vunpack.c.h.b16 %v82
    %v227 = vunpack.c.l.b16 %v83
    %v228 = vunpack.c.h.b16 %v83
    %v229 = vunpack.c.l.b16 %v84
    %v230 = vunpack.c.h.b16 %v84
    %v231 = vunpack.c.l.b16 %v85
    %v232 = vunpack.c.h.b16 %v85
    %v233 = vunpack.c.l.b16 %v86
    %v234 = vunpack.c.h.b16 %v86
    %v235 = vunpack.c.l.b16 %v87
    %v236 = vunpack.c.h.b16 %v87
    %v237 = vunpack.c.l.b16 %v88
    %v238 = vunpack.c.h.b16 %v88
    %v239 = vunpack.c.l.b16 %v89
    %v240 = vunpack.c.h.b16 %v89
    %v241 = vunpack.c.l.b16 %v90
    %v242 = vunpack.c.h.b16 %v90
    %v243 = vunpack.c.l.b16 %v91
    %v244 = vunpack.c.h.b16 %v91
    %v245 = vunpack.c.l.b16 %v92
    %v246 = vunpack.c.h.b16 %v92
    %v247 = vunpack.c.l.b16 %v93
    %v248 = vunpack.c.h.b16 %v93
    %v249 = vunpack.c.l.b16 %v94
    %v250 = vunpack.c.h.b16 %v94
    %v251 = vunpack.c.l.b16 %v95
    %v252 = vunpack.c.h.b16 %v95
    %v253 = vunpack.c.l.b16 %v96
    %v254 = vunpack.c.h.b16 %v96
    %v255 = vpack.c.b16 %v165, %v159
    %v256 = vpack.c.b16 %v166, %v160
    %v257 = vpack.c.b16 %v167, %v161
    %v258 = vpack.c.b16 %v168, %v162
    %v259 = vpack.c.b16 %v169, %v163
    %v260 = vpack.c.b16 %v170, %v164
    %v261 = vpack.c.b16 %v177, %v171
    %v262 = vpack.c.b16 %v178, %v172
    %v263 = vpack.c.b16 %v179, %v173
    %v264 = vpack.c.b16 %v180, %v174
    %v265 = vpack.c.b16 %v181, %v175
    %v266 = vpack.c.b16 %v182, %v176
    %v267 = vpack.c.b16 %v189, %v183
    %v268 = vpack.c.b16 %v190, %v184
    %v269 = vpack.c.b16 %v191, %v185
    %v270 = vpack.c.b16 %v192, %v186
    %v271 = vpack.c.b16 %v193, %v187
    %v272 = vpack.c.b16 %v194, %v188
    %v273 = vpack.c.b16 %v201, %v195
    %v274 = vpack.c.b16 %v202, %v196
    %v275 = vpack.c.b16 %v203, %v197
    %v276 = vpack.c.b16 %v204, %v198
    %v277 = vpack.c.b16 %v205, %v199
    %v278 = vpack.c.b16 %v206, %v200
    %v279 = vpack.c.b16 %v213, %v207
    %v280 = vpack.c.b16 %v214, %v208
    %v281 = vpack.c.b16 %v215, %v209
    %v282 = vpack.c.b16 %v216, %v210
    %v283 = vpack.c.b16 %v217, %v211
    %v284 = vpack.c.b16 %v218, %v212
    %v285 = vpack.c.b16 %v225, %v219
    %v286 = vpack.c.b16 %v226, %v220
    %v287 = vpack.c.b16 %v227, %v221
    %v288 = vpack.c.b16 %v228, %v222
    %v289 = vpack.c.b16 %v229, %v223
    %v290 = vpack.c.b16 %v230, %v224
    %v291 = vpack.c.b16 %v237, %v231
    %v292 = vpack.c.b16 %v238, %v232
    %v293 = vpack.c.b16 %v239, %v233
    %v294 = vpack.c.b16 %v240, %v234
    %v295 = vpack.c.b16 %v241, %v235
    %v296 = vpack.c.b16 %v242, %v236
    %v297 = vpack.c.b16 %v249, %v243
    %v298 = vpack.c.b16 %v250, %v244
    %v299 = vpack.c.b16 %v251, %v245
    %v300 = vpack.c.b16 %v252, %v246
    %v301 = vpack.c.b16 %v253, %v247
    %v302 = vpack.c.b16 %v254, %v248
    %351 = vmatpush.bf16.msra.mxu0 %v297
    %352 = vmatpush.bf16.msra.mxu0 %v291
    %353 = vmatpush.bf16.msra.mxu0 %v285
    %354 = vmatpush.bf16.msra.mxu0 %v279
    %355 = vmatpush.bf16.msra.mxu0 %v273
    %356 = vmatpush.bf16.msra.mxu0 %v267
    %357 = vmatpush.bf16.msra.mxu0 %v261
    %358 = vmatpush.bf16.msra.mxu0 %v255
    %359 = vmatmul.bf16.gmra.mxu0 %v48
    %v360 = vpop.f32.mrf.mxu0
    %v361 = vadd.f32 %v99, %v360
    %v362 = vpop.f32.mrf.mxu0
    %363 = vdwg.mxu0
    %364 = vmatpush.bf16.msra.mxu0 %v298
    %365 = vmatpush.bf16.msra.mxu0 %v292
    %366 = vmatpush.bf16.msra.mxu0 %v286
    %367 = vmatpush.bf16.msra.mxu0 %v280
    %368 = vmatpush.bf16.msra.mxu0 %v274
    %369 = vmatpush.bf16.msra.mxu0 %v268
    %370 = vmatpush.bf16.msra.mxu0 %v262
    %371 = vmatpush.bf16.msra.mxu0 %v256
    %372 = vmatmul.bf16.gmra.mxu0 %v48
    %v373 = vpop.f32.mrf.mxu0
    %v374 = vadd.f32 %v100, %v373
    %v375 = vpop.f32.mrf.mxu0
    %376 = vdwg.mxu0
    %377 = vmatpush.bf16.msra.mxu0 %v299
    %378 = vmatpush.bf16.msra.mxu0 %v293
    %379 = vmatpush.bf16.msra.mxu0 %v287
    %380 = vmatpush.bf16.msra.mxu0 %v281
    %381 = vmatpush.bf16.msra.mxu0 %v275
    %382 = vmatpush.bf16.msra.mxu0 %v269
    %383 = vmatpush.bf16.msra.mxu0 %v263
    %384 = vmatpush.bf16.msra.mxu0 %v257
    %385 = vmatmul.bf16.gmra.mxu0 %v48
    %v386 = vpop.f32.mrf.mxu0
    %v387 = vadd.f32 %v101, %v386
    %v388 = vpop.f32.mrf.mxu0
    %389 = vdwg.mxu0
    %390 = vmatpush.bf16.msra.mxu0 %v300
    %391 = vmatpush.bf16.msra.mxu0 %v294
    %392 = vmatpush.bf16.msra.mxu0 %v288
    %393 = vmatpush.bf16.msra.mxu0 %v282
    %394 = vmatpush.bf16.msra.mxu0 %v276
    %395 = vmatpush.bf16.msra.mxu0 %v270
    %396 = vmatpush.bf16.msra.mxu0 %v264
    %397 = vmatpush.bf16.msra.mxu0 %v258
    %398 = vmatmul.bf16.gmra.mxu0 %v48
    %v399 = vpop.f32.mrf.mxu0
    %v400 = vadd.f32 %v102, %v399
    %v401 = vpop.f32.mrf.mxu0
    %402 = vdwg.mxu0
    %403 = vmatpush.bf16.msra.mxu0 %v301
    %404 = vmatpush.bf16.msra.mxu0 %v295
    %405 = vmatpush.bf16.msra.mxu0 %v289
    %406 = vmatpush.bf16.msra.mxu0 %v283
    %407 = vmatpush.bf16.msra.mxu0 %v277
    %408 = vmatpush.bf16.msra.mxu0 %v271
    %409 = vmatpush.bf16.msra.mxu0 %v265
    %410 = vmatpush.bf16.msra.mxu0 %v259
    %411 = vmatmul.bf16.gmra.mxu0 %v48
    %v412 = vpop.f32.mrf.mxu0
    %v413 = vadd.f32 %v103, %v412
    %v414 = vpop.f32.mrf.mxu0
    %415 = vdwg.mxu0
    %416 = vmatpush.bf16.msra.mxu0 %v302
    %417 = vmatpush.bf16.msra.mxu0 %v296
    %418 = vmatpush.bf16.msra.mxu0 %v290
    %419 = vmatpush.bf16.msra.mxu0 %v284
    %420 = vmatpush.bf16.msra.mxu0 %v278
    %421 = vmatpush.bf16.msra.mxu0 %v272
    %422 = vmatpush.bf16.msra.mxu0 %v266
    %423 = vmatpush.bf16.msra.mxu0 %v260
    %424 = vmatmul.bf16.gmra.mxu0 %v48
    %v425 = vpop.f32.mrf.mxu0
    %v426 = vadd.f32 %v104, %v425
    %v427 = vpop.f32.mrf.mxu0
    %428 = vdwg.mxu0
    %v429 = vmax.f32 %v361, 0.0
    %v430 = vmax.f32 %v374, 0.0
    %v431 = vmax.f32 %v387, 0.0
    %v432 = vmax.f32 %v400, 0.0
    %v433 = vmax.f32 %v413, 0.0
    %v434 = vmax.f32 %v426, 0.0
    %v435 = vpack.c.bf16 %v429, %v429
    %v436 = vpack.c.bf16 %v430, %v430
    %v437 = vpack.c.bf16 %v431, %v431
    %v438 = vpack.c.bf16 %v432, %v432
    %v439 = vpack.c.bf16 %v433, %v433
    %v440 = vpack.c.bf16 %v434, %v434
    %v441 = vld [vmem:[%s4] sm:$0xf]
    %v442 = vld [vmem:[%s4 + $0x4] sm:$0xf]
    %v443 = vld [vmem:[%s4 + $0x8] sm:$0xf]
    %v444 = vld [vmem:[%s4 + $0xc] sm:$0xf]
    %v445 = vld [vmem:[%s4 + $0x10] sm:$0xf]
    %v446 = vld [vmem:[%s4 + $0x14] sm:$0xf]
    %v447 = vld [vmem:[%s4 + $0x18] sm:$0xf]
    %v448 = vld [vmem:[%s4 + $0x1c] sm:$0xf]
    %v449 = vld [vmem:[%s4 + $0x20] sm:$0xf]
    %v450 = vld [vmem:[%s4 + $0x24] sm:$0xf]
    %v451 = vld [vmem:[%s4 + $0x28] sm:$0xf]
    %v452 = vld [vmem:[%s4 + $0x2c] sm:$0xf]
    %v453 = vld [vmem:[%s4 + $0x30] sm:$0xf]
    %v454 = vld [vmem:[%s4 + $0x34] sm:$0xf]
    %v455 = vld [vmem:[%s4 + $0x38] sm:$0xf]
    %v456 = vld [vmem:[%s4 + $0x3c] sm:$0xf]
    %v457 = vld [vmem:[%s4 + $0x40] sm:$0xf]
    %v458 = vld [vmem:[%s4 + $0x44] sm:$0xf]
    %v459 = vld [vmem:[%s4 + $0x48] sm:$0xf]
    %v460 = vld [vmem:[%s4 + $0x4c] sm:$0xf]
    %v461 = vld [vmem:[%s4 + $0x50] sm:$0xf]
    %v462 = vld [vmem:[%s4 + $0x54] sm:$0xf]
    %v463 = vld [vmem:[%s4 + $0x58] sm:$0xf]
    %v464 = vld [vmem:[%s4 + $0x5c] sm:$0xf]
    %v465 = vld [vmem:[%s4 + $0x60] sm:$0xf]
    %v466 = vld [vmem:[%s4 + $0x64] sm:$0xf]
    %v467 = vld [vmem:[%s4 + $0x68] sm:$0xf]
    %v468 = vld [vmem:[%s4 + $0x6c] sm:$0xf]
    %v469 = vld [vmem:[%s4 + $0x70] sm:$0xf]
    %v470 = vld [vmem:[%s4 + $0x74] sm:$0xf]
    %v471 = vld [vmem:[%s4 + $0x78] sm:$0xf]
    %v472 = vld [vmem:[%s4 + $0x7c] sm:$0xf]
    %v473 = vld [vmem:[%s4 + $0x80] sm:$0xf]
    %v474 = vld [vmem:[%s4 + $0x84] sm:$0xf]
    %v475 = vld [vmem:[%s4 + $0x88] sm:$0xf]
    %v476 = vld [vmem:[%s4 + $0x8c] sm:$0xf]
    %v477 = vld [vmem:[%s4 + $0x90] sm:$0xf]
    %v478 = vld [vmem:[%s4 + $0x94] sm:$0xf]
    %v479 = vld [vmem:[%s4 + $0x98] sm:$0xf]
    %v480 = vld [vmem:[%s4 + $0x9c] sm:$0xf]
    %v481 = vld [vmem:[%s4 + $0xa0] sm:$0xf]
    %v482 = vld [vmem:[%s4 + $0xa4] sm:$0xf]
    %v483 = vld [vmem:[%s4 + $0xa8] sm:$0xf]
    %v484 = vld [vmem:[%s4 + $0xac] sm:$0xf]
    %v485 = vld [vmem:[%s4 + $0xb0] sm:$0xf]
    %v486 = vld [vmem:[%s4 + $0xb4] sm:$0xf]
    %v487 = vld [vmem:[%s4 + $0xb8] sm:$0xf]
    %v488 = vld [vmem:[%s4 + $0xbc] sm:$0xf]
    %v489 = vld [vmem:[%s4 + $0xc0] sm:$0xf]
    %v490 = vld [vmem:[%s4 + $0xc4] sm:$0xf]
    %v491 = vld [vmem:[%s4 + $0xc8] sm:$0xf]
    %v492 = vld [vmem:[%s4 + $0xcc] sm:$0xf]
    %v493 = vld [vmem:[%s4 + $0xd0] sm:$0xf]
    %v494 = vld [vmem:[%s4 + $0xd4] sm:$0xf]
    %v495 = vld [vmem:[%s4 + $0xd8] sm:$0xf]
    %v496 = vld [vmem:[%s4 + $0xdc] sm:$0xf]
    %v497 = vld [vmem:[%s4 + $0xe0] sm:$0xf]
    %v498 = vld [vmem:[%s4 + $0xe4] sm:$0xf]
    %v499 = vld [vmem:[%s4 + $0xe8] sm:$0xf]
    %v500 = vld [vmem:[%s4 + $0xec] sm:$0xf]
    %v501 = vld [vmem:[%s4 + $0xf0] sm:$0xf]
    %v502 = vld [vmem:[%s4 + $0xf4] sm:$0xf]
    %v503 = vld [vmem:[%s4 + $0xf8] sm:$0xf]
    %v504 = vld [vmem:[%s4 + $0xfc] sm:$0xf]
    %v505 = vld [vmem:[%s4 + $0x100] sm:$0xf]
    %v506 = vld [vmem:[%s4 + $0x104] sm:$0xf]
    %v507 = vld [vmem:[%s4 + $0x108] sm:$0xf]
    %v508 = vld [vmem:[%s4 + $0x10c] sm:$0xf]
    %v509 = vld [vmem:[%s4 + $0x110] sm:$0xf]
    %v510 = vld [vmem:[%s4 + $0x114] sm:$0xf]
    %v511 = vld [vmem:[%s4 + $0x118] sm:$0xf]
    %v512 = vld [vmem:[%s4 + $0x11c] sm:$0xf]
    %v513 = vld [vmem:[%s4 + $0x120] sm:$0xf]
    %v514 = vld [vmem:[%s4 + $0x124] sm:$0xf]
    %v515 = vld [vmem:[%s4 + $0x128] sm:$0xf]
    %v516 = vld [vmem:[%s4 + $0x12c] sm:$0xf]
    %v517 = vld [vmem:[%s4 + $0x130] sm:$0xf]
    %v518 = vld [vmem:[%s4 + $0x134] sm:$0xf]
    %v519 = vld [vmem:[%s4 + $0x138] sm:$0xf]
    %v520 = vld [vmem:[%s4 + $0x13c] sm:$0xf]
    %v521 = vld [vmem:[%s4 + $0x140] sm:$0xf]
    %v522 = vld [vmem:[%s4 + $0x144] sm:$0xf]
    %v523 = vld [vmem:[%s4 + $0x148] sm:$0xf]
    %v524 = vld [vmem:[%s4 + $0x14c] sm:$0xf]
    %v525 = vld [vmem:[%s4 + $0x150] sm:$0xf]
    %v526 = vld [vmem:[%s4 + $0x154] sm:$0xf]
    %v527 = vld [vmem:[%s4 + $0x158] sm:$0xf]
    %v528 = vld [vmem:[%s4 + $0x15c] sm:$0xf]
    %v529 = vld [vmem:[%s4 + $0x160] sm:$0xf]
    %v530 = vld [vmem:[%s4 + $0x164] sm:$0xf]
    %v531 = vld [vmem:[%s4 + $0x168] sm:$0x1]
    %v532 = vld [vmem:[%s5] sm:$0x1]
    %v534 = vperm.slane %v532, 0
    %v627 = vunpack.c.l.b16 %v441
    %v628 = vunpack.c.l.b16 %v442
    %v629 = vunpack.c.l.b16 %v443
    %v630 = vunpack.c.l.b16 %v444
    %v631 = vunpack.c.l.b16 %v445
    %v632 = vunpack.c.l.b16 %v446
    %v633 = vunpack.c.l.b16 %v447
    %v634 = vunpack.c.l.b16 %v448
    %v635 = vunpack.c.l.b16 %v449
    %v636 = vunpack.c.l.b16 %v450
    %v637 = vunpack.c.l.b16 %v451
    %v638 = vunpack.c.l.b16 %v452
    %v639 = vunpack.c.l.b16 %v453
    %v640 = vunpack.c.l.b16 %v454
    %v641 = vunpack.c.l.b16 %v455
    %v642 = vunpack.c.l.b16 %v456
    %v643 = vunpack.c.l.b16 %v457
    %v644 = vunpack.c.l.b16 %v458
    %v645 = vunpack.c.l.b16 %v459
    %v646 = vunpack.c.l.b16 %v460
    %v647 = vunpack.c.l.b16 %v461
    %v648 = vunpack.c.l.b16 %v462
    %v649 = vunpack.c.l.b16 %v463
    %v650 = vunpack.c.l.b16 %v464
    %v651 = vunpack.c.l.b16 %v465
    %v652 = vunpack.c.l.b16 %v466
    %v653 = vunpack.c.l.b16 %v467
    %v654 = vunpack.c.l.b16 %v468
    %v655 = vunpack.c.l.b16 %v469
    %v656 = vunpack.c.l.b16 %v470
    %v657 = vunpack.c.l.b16 %v471
    %v658 = vunpack.c.l.b16 %v472
    %v659 = vunpack.c.l.b16 %v473
    %v660 = vunpack.c.l.b16 %v474
    %v661 = vunpack.c.l.b16 %v475
    %v662 = vunpack.c.l.b16 %v476
    %v663 = vunpack.c.l.b16 %v477
    %v664 = vunpack.c.l.b16 %v478
    %v665 = vunpack.c.l.b16 %v479
    %v666 = vunpack.c.l.b16 %v480
    %v667 = vunpack.c.l.b16 %v481
    %v668 = vunpack.c.l.b16 %v482
    %v669 = vunpack.c.l.b16 %v483
    %v670 = vunpack.c.l.b16 %v484
    %v671 = vunpack.c.l.b16 %v485
    %v672 = vunpack.c.l.b16 %v486
    %v673 = vunpack.c.l.b16 %v487
    %v674 = vunpack.c.l.b16 %v488
    %v675 = vunpack.c.l.b16 %v489
    %v676 = vunpack.c.l.b16 %v490
    %v677 = vunpack.c.l.b16 %v491
    %v678 = vunpack.c.l.b16 %v492
    %v679 = vunpack.c.l.b16 %v493
    %v680 = vunpack.c.l.b16 %v494
    %v681 = vunpack.c.l.b16 %v495
    %v682 = vunpack.c.l.b16 %v496
    %v683 = vunpack.c.l.b16 %v497
    %v684 = vunpack.c.l.b16 %v498
    %v685 = vunpack.c.l.b16 %v499
    %v686 = vunpack.c.l.b16 %v500
    %v687 = vunpack.c.l.b16 %v501
    %v688 = vunpack.c.l.b16 %v502
    %v689 = vunpack.c.l.b16 %v503
    %v690 = vunpack.c.l.b16 %v504
    %v691 = vunpack.c.l.b16 %v505
    %v692 = vunpack.c.l.b16 %v506
    %v693 = vunpack.c.l.b16 %v507
    %v694 = vunpack.c.l.b16 %v508
    %v695 = vunpack.c.l.b16 %v509
    %v696 = vunpack.c.l.b16 %v510
    %v697 = vunpack.c.l.b16 %v511
    %v698 = vunpack.c.l.b16 %v512
    %v699 = vunpack.c.l.b16 %v513
    %v700 = vunpack.c.l.b16 %v514
    %v701 = vunpack.c.l.b16 %v515
    %v702 = vunpack.c.l.b16 %v516
    %v703 = vunpack.c.l.b16 %v517
    %v704 = vunpack.c.l.b16 %v518
    %v705 = vunpack.c.l.b16 %v519
    %v706 = vunpack.c.l.b16 %v520
    %v707 = vunpack.c.l.b16 %v521
    %v708 = vunpack.c.l.b16 %v522
    %v709 = vunpack.c.l.b16 %v523
    %v710 = vunpack.c.l.b16 %v524
    %v711 = vunpack.c.l.b16 %v525
    %v712 = vunpack.c.l.b16 %v526
    %v713 = vunpack.c.l.b16 %v527
    %v714 = vunpack.c.l.b16 %v528
    %v715 = vunpack.c.l.b16 %v529
    %v716 = vunpack.c.l.b16 %v530
    %v717 = vunpack.c.l.b16 %v531
    %v718 = vpack.c.b16 %v628, %v627
    %v719 = vpack.c.b16 %v630, %v629
    %v720 = vpack.c.b16 %v632, %v631
    %v721 = vpack.c.b16 %v634, %v633
    %v722 = vpack.c.b16 %v636, %v635
    %v723 = vpack.c.b16 %v638, %v637
    %v724 = vpack.c.b16 %v640, %v639
    %v725 = vpack.c.b16 %v642, %v641
    %v726 = vpack.c.b16 %v644, %v643
    %v727 = vpack.c.b16 %v646, %v645
    %v728 = vpack.c.b16 %v648, %v647
    %v729 = vpack.c.b16 %v650, %v649
    %v730 = vpack.c.b16 %v652, %v651
    %v731 = vpack.c.b16 %v654, %v653
    %v732 = vpack.c.b16 %v656, %v655
    %v733 = vpack.c.b16 %v658, %v657
    %v734 = vpack.c.b16 %v660, %v659
    %v735 = vpack.c.b16 %v662, %v661
    %v736 = vpack.c.b16 %v664, %v663
    %v737 = vpack.c.b16 %v666, %v665
    %v738 = vpack.c.b16 %v668, %v667
    %v739 = vpack.c.b16 %v670, %v669
    %v740 = vpack.c.b16 %v672, %v671
    %v741 = vpack.c.b16 %v674, %v673
    %v742 = vpack.c.b16 %v676, %v675
    %v743 = vpack.c.b16 %v678, %v677
    %v744 = vpack.c.b16 %v680, %v679
    %v745 = vpack.c.b16 %v682, %v681
    %v746 = vpack.c.b16 %v684, %v683
    %v747 = vpack.c.b16 %v686, %v685
    %v748 = vpack.c.b16 %v688, %v687
    %v749 = vpack.c.b16 %v690, %v689
    %v750 = vpack.c.b16 %v692, %v691
    %v751 = vpack.c.b16 %v694, %v693
    %v752 = vpack.c.b16 %v696, %v695
    %v753 = vpack.c.b16 %v698, %v697
    %v754 = vpack.c.b16 %v700, %v699
    %v755 = vpack.c.b16 %v702, %v701
    %v756 = vpack.c.b16 %v704, %v703
    %v757 = vpack.c.b16 %v706, %v705
    %v758 = vpack.c.b16 %v708, %v707
    %v759 = vpack.c.b16 %v710, %v709
    %v760 = vpack.c.b16 %v712, %v711
    %v761 = vpack.c.b16 %v714, %v713
    %v762 = vpack.c.b16 %v716, %v715
    %v763 = vpack.c.b16 %v717, %v717
    %vm809 = vcmask 670720
    %v811 = vsel %vm809, %v440, 0
    %vm813 = vcmask 1040384
    %v815 = vsel %vm813, %v763, 0
    %817 = vmatpush.bf16.msra.mxu0 %v725
    %818 = vmatpush.bf16.msra.mxu0 %v724
    %819 = vmatpush.bf16.msra.mxu0 %v723
    %820 = vmatpush.bf16.msra.mxu0 %v722
    %821 = vmatpush.bf16.msra.mxu0 %v721
    %822 = vmatpush.bf16.msra.mxu0 %v720
    %823 = vmatpush.bf16.msra.mxu0 %v719
    %824 = vmatpush.bf16.msra.mxu0 %v718
    %825 = vmatmul.bf16.gmra.mxu0 %v435
    %v826 = vpop.f32.mrf.mxu0
    %v827 = vadd.f32 %v534, %v826
    %v828 = vpop.f32.mrf.mxu0
    %829 = vdwg.mxu0
    %830 = vmatpush.bf16.msra.mxu0 %v733
    %831 = vmatpush.bf16.msra.mxu0 %v732
    %832 = vmatpush.bf16.msra.mxu0 %v731
    %833 = vmatpush.bf16.msra.mxu0 %v730
    %834 = vmatpush.bf16.msra.mxu0 %v729
    %835 = vmatpush.bf16.msra.mxu0 %v728
    %836 = vmatpush.bf16.msra.mxu0 %v727
    %837 = vmatpush.bf16.msra.mxu0 %v726
    %838 = vmatmul.bf16.gmra.mxu0 %v436
    %v839 = vpop.f32.mrf.mxu0
    %v840 = vadd.f32 %v827, %v839
    %v841 = vpop.f32.mrf.mxu0
    %842 = vdwg.mxu0
    %843 = vmatpush.bf16.msra.mxu0 %v741
    %844 = vmatpush.bf16.msra.mxu0 %v740
    %845 = vmatpush.bf16.msra.mxu0 %v739
    %846 = vmatpush.bf16.msra.mxu0 %v738
    %847 = vmatpush.bf16.msra.mxu0 %v737
    %848 = vmatpush.bf16.msra.mxu0 %v736
    %849 = vmatpush.bf16.msra.mxu0 %v735
    %850 = vmatpush.bf16.msra.mxu0 %v734
    %851 = vmatmul.bf16.gmra.mxu0 %v437
    %v852 = vpop.f32.mrf.mxu0
    %v853 = vadd.f32 %v840, %v852
    %v854 = vpop.f32.mrf.mxu0
    %855 = vdwg.mxu0
    %856 = vmatpush.bf16.msra.mxu0 %v749
    %857 = vmatpush.bf16.msra.mxu0 %v748
    %858 = vmatpush.bf16.msra.mxu0 %v747
    %859 = vmatpush.bf16.msra.mxu0 %v746
    %860 = vmatpush.bf16.msra.mxu0 %v745
    %861 = vmatpush.bf16.msra.mxu0 %v744
    %862 = vmatpush.bf16.msra.mxu0 %v743
    %863 = vmatpush.bf16.msra.mxu0 %v742
    %864 = vmatmul.bf16.gmra.mxu0 %v438
    %v865 = vpop.f32.mrf.mxu0
    %v866 = vadd.f32 %v853, %v865
    %v867 = vpop.f32.mrf.mxu0
    %868 = vdwg.mxu0
    %869 = vmatpush.bf16.msra.mxu0 %v757
    %870 = vmatpush.bf16.msra.mxu0 %v756
    %871 = vmatpush.bf16.msra.mxu0 %v755
    %872 = vmatpush.bf16.msra.mxu0 %v754
    %873 = vmatpush.bf16.msra.mxu0 %v753
    %874 = vmatpush.bf16.msra.mxu0 %v752
    %875 = vmatpush.bf16.msra.mxu0 %v751
    %876 = vmatpush.bf16.msra.mxu0 %v750
    %877 = vmatmul.bf16.gmra.mxu0 %v439
    %v878 = vpop.f32.mrf.mxu0
    %v879 = vadd.f32 %v866, %v878
    %v880 = vpop.f32.mrf.mxu0
    %881 = vdwg.mxu0
    %882 = vmatpush.bf16.msra.mxu0 0
    %883 = vmatpush.bf16.msra.mxu0 0
    %884 = vmatpush.bf16.msra.mxu0 %v815
    %885 = vmatpush.bf16.msra.mxu0 %v762
    %886 = vmatpush.bf16.msra.mxu0 %v761
    %887 = vmatpush.bf16.msra.mxu0 %v760
    %888 = vmatpush.bf16.msra.mxu0 %v759
    %889 = vmatpush.bf16.msra.mxu0 %v758
    %890 = vmatmul.bf16.gmra.mxu0 %v811
    %v891 = vpop.f32.mrf.mxu0
    %v892 = vadd.f32 %v879, %v891
    %v893 = vpop.f32.mrf.mxu0
    %894 = vdwg.mxu0
    %vm895 = vcmask 525312
    %896 = vst.msk [vmem:[#allocation3] sm:$0x3] %vm895, %v892
    %v897 = vld [vmem:[%s1] sm:$0x3]
    %v898 = vpack.c.bf16 %v897, %v897
    %v899 = vld [vmem:[%s6] sm:$0xff]
    %v900 = vld [vmem:[%s6 + $0x8] sm:$0xf]
    %v901 = vld [vmem:[%s6 + $0xc] sm:$0xff]
    %v902 = vld [vmem:[%s6 + $0x14] sm:$0xf]
    %v903 = vld [vmem:[%s6 + $0x18] sm:$0xff]
    %v904 = vld [vmem:[%s6 + $0x20] sm:$0xf]
    %v905 = vld [vmem:[%s6 + $0x24] sm:$0xff]
    %v906 = vld [vmem:[%s6 + $0x2c] sm:$0xf]
    %v907 = vld [vmem:[%s6 + $0x30] sm:$0xff]
    %v908 = vld [vmem:[%s6 + $0x38] sm:$0xf]
    %v909 = vld [vmem:[%s6 + $0x3c] sm:$0xff]
    %v910 = vld [vmem:[%s6 + $0x44] sm:$0xf]
    %v911 = vld [vmem:[%s6 + $0x48] sm:$0xff]
    %v912 = vld [vmem:[%s6 + $0x50] sm:$0xf]
    %v913 = vld [vmem:[%s6 + $0x54] sm:$0xff]
    %v914 = vld [vmem:[%s6 + $0x5c] sm:$0xf]
    %v915 = vld [vmem:[%s7] sm:$0x7]
    %v917 = vperm.slane %v915, 0
    %v918 = vperm.slane %v915, 1
    %v919 = vperm.slane %v915, 2
    %v939 = vunpack.c.l.b16 %v899
    %v940 = vunpack.c.h.b16 %v899
    %v941 = vunpack.c.l.b16 %v900
    %v942 = vunpack.c.l.b16 %v901
    %v943 = vunpack.c.h.b16 %v901
    %v944 = vunpack.c.l.b16 %v902
    %v945 = vunpack.c.l.b16 %v903
    %v946 = vunpack.c.h.b16 %v903
    %v947 = vunpack.c.l.b16 %v904
    %v948 = vunpack.c.l.b16 %v905
    %v949 = vunpack.c.h.b16 %v905
    %v950 = vunpack.c.l.b16 %v906
    %v951 = vunpack.c.l.b16 %v907
    %v952 = vunpack.c.h.b16 %v907
    %v953 = vunpack.c.l.b16 %v908
    %v954 = vunpack.c.l.b16 %v909
    %v955 = vunpack.c.h.b16 %v909
    %v956 = vunpack.c.l.b16 %v910
    %v957 = vunpack.c.l.b16 %v911
    %v958 = vunpack.c.h.b16 %v911
    %v959 = vunpack.c.l.b16 %v912
    %v960 = vunpack.c.l.b16 %v913
    %v961 = vunpack.c.h.b16 %v913
    %v962 = vunpack.c.l.b16 %v914
    %v963 = vpack.c.b16 %v942, %v939
    %v964 = vpack.c.b16 %v943, %v940
    %v965 = vpack.c.b16 %v944, %v941
    %v966 = vpack.c.b16 %v948, %v945
    %v967 = vpack.c.b16 %v949, %v946
    %v968 = vpack.c.b16 %v950, %v947
    %v969 = vpack.c.b16 %v954, %v951
    %v970 = vpack.c.b16 %v955, %v952
    %v971 = vpack.c.b16 %v956, %v953
    %v972 = vpack.c.b16 %v960, %v957
    %v973 = vpack.c.b16 %v961, %v958
    %v974 = vpack.c.b16 %v962, %v959
    %vm987 = vcmask 523264
    %v989 = vsel %vm987, %v898, 0
    %991 = vmatpush.bf16.msra.mxu0 0
    %992 = vmatpush.bf16.msra.mxu0 0
    %993 = vmatpush.bf16.msra.mxu0 0
    %994 = vmatpush.bf16.msra.mxu0 0
    %995 = vmatpush.bf16.msra.mxu0 %v972
    %996 = vmatpush.bf16.msra.mxu0 %v969
    %997 = vmatpush.bf16.msra.mxu0 %v966
    %998 = vmatpush.bf16.msra.mxu0 %v963
    %999 = vmatmul.bf16.gmra.mxu0 %v989
    %v1000 = vpop.f32.mrf.mxu0
    %v1001 = vadd.f32 %v917, %v1000
    %v1002 = vpop.f32.mrf.mxu0
    %1003 = vdwg.mxu0
    %1004 = vmatpush.bf16.msra.mxu0 0
    %1005 = vmatpush.bf16.msra.mxu0 0
    %1006 = vmatpush.bf16.msra.mxu0 0
    %1007 = vmatpush.bf16.msra.mxu0 0
    %1008 = vmatpush.bf16.msra.mxu0 %v973
    %1009 = vmatpush.bf16.msra.mxu0 %v970
    %1010 = vmatpush.bf16.msra.mxu0 %v967
    %1011 = vmatpush.bf16.msra.mxu0 %v964
    %1012 = vmatmul.bf16.gmra.mxu0 %v989
    %v1013 = vpop.f32.mrf.mxu0
    %v1014 = vadd.f32 %v918, %v1013
    %v1015 = vpop.f32.mrf.mxu0
    %1016 = vdwg.mxu0
    %1017 = vmatpush.bf16.msra.mxu0 0
    %1018 = vmatpush.bf16.msra.mxu0 0
    %1019 = vmatpush.bf16.msra.mxu0 0
    %1020 = vmatpush.bf16.msra.mxu0 0
    %1021 = vmatpush.bf16.msra.mxu0 %v974
    %1022 = vmatpush.bf16.msra.mxu0 %v971
    %1023 = vmatpush.bf16.msra.mxu0 %v968
    %1024 = vmatpush.bf16.msra.mxu0 %v965
    %1025 = vmatmul.bf16.gmra.mxu0 %v989
    %v1026 = vpop.f32.mrf.mxu0
    %v1027 = vadd.f32 %v919, %v1026
    %v1028 = vpop.f32.mrf.mxu0
    %1029 = vdwg.mxu0
    %v1030 = vmax.f32 %v1001, 0.0
    %v1031 = vmax.f32 %v1014, 0.0
    %v1032 = vmax.f32 %v1027, 0.0
    %v1033 = vpack.c.bf16 %v1030, %v1030
    %v1034 = vpack.c.bf16 %v1031, %v1031
    %v1035 = vpack.c.bf16 %v1032, %v1032
    %v1036 = vld [vmem:[%s8] sm:$0xff]
    %v1037 = vld [vmem:[%s8 + $0x8] sm:$0xff]
    %v1038 = vld [vmem:[%s8 + $0x10] sm:$0xff]
    %v1039 = vld [vmem:[%s8 + $0x18] sm:$0xff]
    %v1040 = vld [vmem:[%s8 + $0x20] sm:$0xff]
    %v1041 = vld [vmem:[%s8 + $0x28] sm:$0xff]
    %v1042 = vld [vmem:[%s8 + $0x30] sm:$0xff]
    %v1043 = vld [vmem:[%s8 + $0x38] sm:$0xff]
    %v1044 = vld [vmem:[%s8 + $0x40] sm:$0xff]
    %v1045 = vld [vmem:[%s8 + $0x48] sm:$0xff]
    %v1046 = vld [vmem:[%s8 + $0x50] sm:$0xff]
    %v1047 = vld [vmem:[%s8 + $0x58] sm:$0xff]
    %v1048 = vld [vmem:[%s8 + $0x60] sm:$0xff]
    %v1049 = vld [vmem:[%s8 + $0x68] sm:$0xff]
    %v1050 = vld [vmem:[%s8 + $0x70] sm:$0xff]
    %v1051 = vld [vmem:[%s8 + $0x78] sm:$0xff]
    %v1052 = vld [vmem:[%s8 + $0x80] sm:$0xff]
    %v1053 = vld [vmem:[%s8 + $0x88] sm:$0xff]
    %v1054 = vld [vmem:[%s8 + $0x90] sm:$0xff]
    %v1055 = vld [vmem:[%s8 + $0x98] sm:$0xff]
    %v1056 = vld [vmem:[%s8 + $0xa0] sm:$0xff]
    %v1057 = vld [vmem:[%s8 + $0xa8] sm:$0xff]
    %v1058 = vld [vmem:[%s8 + $0xb0] sm:$0xff]
    %v1059 = vld [vmem:[%s8 + $0xb8] sm:$0xff]
    %v1060 = vld [vmem:[%s8 + $0xc0] sm:$0xff]
    %v1061 = vld [vmem:[%s8 + $0xc8] sm:$0xff]
    %v1062 = vld [vmem:[%s8 + $0xd0] sm:$0xff]
    %v1063 = vld [vmem:[%s8 + $0xd8] sm:$0xff]
    %v1064 = vld [vmem:[%s8 + $0xe0] sm:$0xff]
    %v1065 = vld [vmem:[%s8 + $0xe8] sm:$0xff]
    %v1066 = vld [vmem:[%s8 + $0xf0] sm:$0xff]
    %v1067 = vld [vmem:[%s8 + $0xf8] sm:$0xff]
    %v1068 = vld [vmem:[%s8 + $0x100] sm:$0xff]
    %v1069 = vld [vmem:[%s8 + $0x108] sm:$0xff]
    %v1070 = vld [vmem:[%s8 + $0x110] sm:$0xff]
    %v1071 = vld [vmem:[%s8 + $0x118] sm:$0xff]
    %v1072 = vld [vmem:[%s8 + $0x120] sm:$0xff]
    %v1073 = vld [vmem:[%s8 + $0x128] sm:$0xff]
    %v1074 = vld [vmem:[%s8 + $0x130] sm:$0xff]
    %v1075 = vld [vmem:[%s8 + $0x138] sm:$0xff]
    %v1076 = vld [vmem:[%s8 + $0x140] sm:$0xff]
    %v1077 = vld [vmem:[%s8 + $0x148] sm:$0xff]
    %v1078 = vld [vmem:[%s8 + $0x150] sm:$0xff]
    %v1079 = vld [vmem:[%s8 + $0x158] sm:$0xff]
    %v1080 = vld [vmem:[%s8 + $0x160] sm:$0xff]
    %v1081 = vld [vmem:[%s8 + $0x168] sm:$0x11]
    %v1082 = vld [vmem:[%s9] sm:$0x3]
    %v1084 = vperm.slane %v1082, 0
    %v1085 = vperm.slane %v1082, 1
    %v1134 = vunpack.c.l.b16 %v1036
    %v1135 = vunpack.c.h.b16 %v1036
    %v1136 = vunpack.c.l.b16 %v1037
    %v1137 = vunpack.c.h.b16 %v1037
    %v1138 = vunpack.c.l.b16 %v1038
    %v1139 = vunpack.c.h.b16 %v1038
    %v1140 = vunpack.c.l.b16 %v1039
    %v1141 = vunpack.c.h.b16 %v1039
    %v1142 = vunpack.c.l.b16 %v1040
    %v1143 = vunpack.c.h.b16 %v1040
    %v1144 = vunpack.c.l.b16 %v1041
    %v1145 = vunpack.c.h.b16 %v1041
    %v1146 = vunpack.c.l.b16 %v1042
    %v1147 = vunpack.c.h.b16 %v1042
    %v1148 = vunpack.c.l.b16 %v1043
    %v1149 = vunpack.c.h.b16 %v1043
    %v1150 = vunpack.c.l.b16 %v1044
    %v1151 = vunpack.c.h.b16 %v1044
    %v1152 = vunpack.c.l.b16 %v1045
    %v1153 = vunpack.c.h.b16 %v1045
    %v1154 = vunpack.c.l.b16 %v1046
    %v1155 = vunpack.c.h.b16 %v1046
    %v1156 = vunpack.c.l.b16 %v1047
    %v1157 = vunpack.c.h.b16 %v1047
    %v1158 = vunpack.c.l.b16 %v1048
    %v1159 = vunpack.c.h.b16 %v1048
    %v1160 = vunpack.c.l.b16 %v1049
    %v1161 = vunpack.c.h.b16 %v1049
    %v1162 = vunpack.c.l.b16 %v1050
    %v1163 = vunpack.c.h.b16 %v1050
    %v1164 = vunpack.c.l.b16 %v1051
    %v1165 = vunpack.c.h.b16 %v1051
    %v1166 = vunpack.c.l.b16 %v1052
    %v1167 = vunpack.c.h.b16 %v1052
    %v1168 = vunpack.c.l.b16 %v1053
    %v1169 = vunpack.c.h.b16 %v1053
    %v1170 = vunpack.c.l.b16 %v1054
    %v1171 = vunpack.c.h.b16 %v1054
    %v1172 = vunpack.c.l.b16 %v1055
    %v1173 = vunpack.c.h.b16 %v1055
    %v1174 = vunpack.c.l.b16 %v1056
    %v1175 = vunpack.c.h.b16 %v1056
    %v1176 = vunpack.c.l.b16 %v1057
    %v1177 = vunpack.c.h.b16 %v1057
    %v1178 = vunpack.c.l.b16 %v1058
    %v1179 = vunpack.c.h.b16 %v1058
    %v1180 = vunpack.c.l.b16 %v1059
    %v1181 = vunpack.c.h.b16 %v1059
    %v1182 = vunpack.c.l.b16 %v1060
    %v1183 = vunpack.c.h.b16 %v1060
    %v1184 = vunpack.c.l.b16 %v1061
    %v1185 = vunpack.c.h.b16 %v1061
    %v1186 = vunpack.c.l.b16 %v1062
    %v1187 = vunpack.c.h.b16 %v1062
    %v1188 = vunpack.c.l.b16 %v1063
    %v1189 = vunpack.c.h.b16 %v1063
    %v1190 = vunpack.c.l.b16 %v1064
    %v1191 = vunpack.c.h.b16 %v1064
    %v1192 = vunpack.c.l.b16 %v1065
    %v1193 = vunpack.c.h.b16 %v1065
    %v1194 = vunpack.c.l.b16 %v1066
    %v1195 = vunpack.c.h.b16 %v1066
    %v1196 = vunpack.c.l.b16 %v1067
    %v1197 = vunpack.c.h.b16 %v1067
    %v1198 = vunpack.c.l.b16 %v1068
    %v1199 = vunpack.c.h.b16 %v1068
    %v1200 = vunpack.c.l.b16 %v1069
    %v1201 = vunpack.c.h.b16 %v1069
    %v1202 = vunpack.c.l.b16 %v1070
    %v1203 = vunpack.c.h.b16 %v1070
    %v1204 = vunpack.c.l.b16 %v1071
    %v1205 = vunpack.c.h.b16 %v1071
    %v1206 = vunpack.c.l.b16 %v1072
    %v1207 = vunpack.c.h.b16 %v1072
    %v1208 = vunpack.c.l.b16 %v1073
    %v1209 = vunpack.c.h.b16 %v1073
    %v1210 = vunpack.c.l.b16 %v1074
    %v1211 = vunpack.c.h.b16 %v1074
    %v1212 = vunpack.c.l.b16 %v1075
    %v1213 = vunpack.c.h.b16 %v1075
    %v1214 = vunpack.c.l.b16 %v1076
    %v1215 = vunpack.c.h.b16 %v1076
    %v1216 = vunpack.c.l.b16 %v1077
    %v1217 = vunpack.c.h.b16 %v1077
    %v1218 = vunpack.c.l.b16 %v1078
    %v1219 = vunpack.c.h.b16 %v1078
    %v1220 = vunpack.c.l.b16 %v1079
    %v1221 = vunpack.c.h.b16 %v1079
    %v1222 = vunpack.c.l.b16 %v1080
    %v1223 = vunpack.c.h.b16 %v1080
    %v1224 = vunpack.c.l.b16 %v1081
    %v1225 = vunpack.c.h.b16 %v1081
    %v1226 = vpack.c.b16 %v1136, %v1134
    %v1227 = vpack.c.b16 %v1137, %v1135
    %v1228 = vpack.c.b16 %v1140, %v1138
    %v1229 = vpack.c.b16 %v1141, %v1139
    %v1230 = vpack.c.b16 %v1144, %v1142
    %v1231 = vpack.c.b16 %v1145, %v1143
    %v1232 = vpack.c.b16 %v1148, %v1146
    %v1233 = vpack.c.b16 %v1149, %v1147
    %v1234 = vpack.c.b16 %v1152, %v1150
    %v1235 = vpack.c.b16 %v1153, %v1151
    %v1236 = vpack.c.b16 %v1156, %v1154
    %v1237 = vpack.c.b16 %v1157, %v1155
    %v1238 = vpack.c.b16 %v1160, %v1158
    %v1239 = vpack.c.b16 %v1161, %v1159
    %v1240 = vpack.c.b16 %v1164, %v1162
    %v1241 = vpack.c.b16 %v1165, %v1163
    %v1242 = vpack.c.b16 %v1168, %v1166
    %v1243 = vpack.c.b16 %v1169, %v1167
    %v1244 = vpack.c.b16 %v1172, %v1170
    %v1245 = vpack.c.b16 %v1173, %v1171
    %v1246 = vpack.c.b16 %v1176, %v1174
    %v1247 = vpack.c.b16 %v1177, %v1175
    %v1248 = vpack.c.b16 %v1180, %v1178
    %v1249 = vpack.c.b16 %v1181, %v1179
    %v1250 = vpack.c.b16 %v1184, %v1182
    %v1251 = vpack.c.b16 %v1185, %v1183
    %v1252 = vpack.c.b16 %v1188, %v1186
    %v1253 = vpack.c.b16 %v1189, %v1187
    %v1254 = vpack.c.b16 %v1192, %v1190
    %v1255 = vpack.c.b16 %v1193, %v1191
    %v1256 = vpack.c.b16 %v1196, %v1194
    %v1257 = vpack.c.b16 %v1197, %v1195
    %v1258 = vpack.c.b16 %v1200, %v1198
    %v1259 = vpack.c.b16 %v1201, %v1199
    %v1260 = vpack.c.b16 %v1204, %v1202
    %v1261 = vpack.c.b16 %v1205, %v1203
    %v1262 = vpack.c.b16 %v1208, %v1206
    %v1263 = vpack.c.b16 %v1209, %v1207
    %v1264 = vpack.c.b16 %v1212, %v1210
    %v1265 = vpack.c.b16 %v1213, %v1211
    %v1266 = vpack.c.b16 %v1216, %v1214
    %v1267 = vpack.c.b16 %v1217, %v1215
    %v1268 = vpack.c.b16 %v1220, %v1218
    %v1269 = vpack.c.b16 %v1221, %v1219
    %v1270 = vpack.c.b16 %v1224, %v1222
    %v1271 = vpack.c.b16 %v1225, %v1223
    %vm1316 = vcmask 859136
    %v1318 = vsel %vm1316, %v1035, 0
    %vm1320 = vcmask 1043456
    %vm1321 = vcmask 1044480
    %v1322 = vsel %vm1320, 4294967295, 65535
    %v1323 = vsel %vm1321, %v1322, 0
    %v1325 = vand.u32 %v1270, %v1323
    %v1328 = vand.u32 %v1271, %v1323
    %1330 = vmatpush.bf16.msra.mxu0 %v1240
    %1331 = vmatpush.bf16.msra.mxu0 %v1238
    %1332 = vmatpush.bf16.msra.mxu0 %v1236
    %1333 = vmatpush.bf16.msra.mxu0 %v1234
    %1334 = vmatpush.bf16.msra.mxu0 %v1232
    %1335 = vmatpush.bf16.msra.mxu0 %v1230
    %1336 = vmatpush.bf16.msra.mxu0 %v1228
    %1337 = vmatpush.bf16.msra.mxu0 %v1226
    %1338 = vmatmul.bf16.gmra.mxu0 %v1033
    %v1339 = vpop.f32.mrf.mxu0
    %v1340 = vadd.f32 %v1084, %v1339
    %v1341 = vpop.f32.mrf.mxu0
    %1342 = vdwg.mxu0
    %1343 = vmatpush.bf16.msra.mxu0 %v1256
    %1344 = vmatpush.bf16.msra.mxu0 %v1254
    %1345 = vmatpush.bf16.msra.mxu0 %v1252
    %1346 = vmatpush.bf16.msra.mxu0 %v1250
    %1347 = vmatpush.bf16.msra.mxu0 %v1248
    %1348 = vmatpush.bf16.msra.mxu0 %v1246
    %1349 = vmatpush.bf16.msra.mxu0 %v1244
    %1350 = vmatpush.bf16.msra.mxu0 %v1242
    %1351 = vmatmul.bf16.gmra.mxu0 %v1034
    %v1352 = vpop.f32.mrf.mxu0
    %v1353 = vadd.f32 %v1340, %v1352
    %v1354 = vpop.f32.mrf.mxu0
    %1355 = vdwg.mxu0
    %1356 = vmatpush.bf16.msra.mxu0 0
    %1357 = vmatpush.bf16.msra.mxu0 %v1325
    %1358 = vmatpush.bf16.msra.mxu0 %v1268
    %1359 = vmatpush.bf16.msra.mxu0 %v1266
    %1360 = vmatpush.bf16.msra.mxu0 %v1264
    %1361 = vmatpush.bf16.msra.mxu0 %v1262
    %1362 = vmatpush.bf16.msra.mxu0 %v1260
    %1363 = vmatpush.bf16.msra.mxu0 %v1258
    %1364 = vmatmul.bf16.gmra.mxu0 %v1318
    %v1365 = vpop.f32.mrf.mxu0
    %v1366 = vadd.f32 %v1353, %v1365
    %v1367 = vpop.f32.mrf.mxu0
    %1368 = vdwg.mxu0
    %1369 = vmatpush.bf16.msra.mxu0 %v1241
    %1370 = vmatpush.bf16.msra.mxu0 %v1239
    %1371 = vmatpush.bf16.msra.mxu0 %v1237
    %1372 = vmatpush.bf16.msra.mxu0 %v1235
    %1373 = vmatpush.bf16.msra.mxu0 %v1233
    %1374 = vmatpush.bf16.msra.mxu0 %v1231
    %1375 = vmatpush.bf16.msra.mxu0 %v1229
    %1376 = vmatpush.bf16.msra.mxu0 %v1227
    %1377 = vmatmul.bf16.gmra.mxu0 %v1033
    %v1378 = vpop.f32.mrf.mxu0
    %v1379 = vadd.f32 %v1085, %v1378
    %v1380 = vpop.f32.mrf.mxu0
    %1381 = vdwg.mxu0
    %1382 = vmatpush.bf16.msra.mxu0 %v1257
    %1383 = vmatpush.bf16.msra.mxu0 %v1255
    %1384 = vmatpush.bf16.msra.mxu0 %v1253
    %1385 = vmatpush.bf16.msra.mxu0 %v1251
    %1386 = vmatpush.bf16.msra.mxu0 %v1249
    %1387 = vmatpush.bf16.msra.mxu0 %v1247
    %1388 = vmatpush.bf16.msra.mxu0 %v1245
    %1389 = vmatpush.bf16.msra.mxu0 %v1243
    %1390 = vmatmul.bf16.gmra.mxu0 %v1034
    %v1391 = vpop.f32.mrf.mxu0
    %v1392 = vadd.f32 %v1379, %v1391
    %v1393 = vpop.f32.mrf.mxu0
    %1394 = vdwg.mxu0
    %1395 = vmatpush.bf16.msra.mxu0 0
    %1396 = vmatpush.bf16.msra.mxu0 %v1328
    %1397 = vmatpush.bf16.msra.mxu0 %v1269
    %1398 = vmatpush.bf16.msra.mxu0 %v1267
    %1399 = vmatpush.bf16.msra.mxu0 %v1265
    %1400 = vmatpush.bf16.msra.mxu0 %v1263
    %1401 = vmatpush.bf16.msra.mxu0 %v1261
    %1402 = vmatpush.bf16.msra.mxu0 %v1259
    %1403 = vmatmul.bf16.gmra.mxu0 %v1318
    %v1404 = vpop.f32.mrf.mxu0
    %v1405 = vadd.f32 %v1392, %v1404
    %v1406 = vpop.f32.mrf.mxu0
    %1407 = vdwg.mxu0
    %v1408 = vmax.f32 %v1366, 0.0
    %v1409 = vmax.f32 %v1405, 0.0
    %v1410 = vpack.c.bf16 %v1408, %v1408
    %v1411 = vpack.c.bf16 %v1409, %v1409
    %v1412 = vld [vmem:[%s10] sm:$0xf]
    %v1413 = vld [vmem:[%s10 + $0x4] sm:$0xf]
    %v1414 = vld [vmem:[%s10 + $0x8] sm:$0xf]
    %v1415 = vld [vmem:[%s10 + $0xc] sm:$0xf]
    %v1416 = vld [vmem:[%s10 + $0x10] sm:$0xf]
    %v1417 = vld [vmem:[%s10 + $0x14] sm:$0xf]
    %v1418 = vld [vmem:[%s10 + $0x18] sm:$0xf]
    %v1419 = vld [vmem:[%s10 + $0x1c] sm:$0xf]
    %v1420 = vld [vmem:[%s10 + $0x20] sm:$0xf]
    %v1421 = vld [vmem:[%s10 + $0x24] sm:$0xf]
    %v1422 = vld [vmem:[%s10 + $0x28] sm:$0xf]
    %v1423 = vld [vmem:[%s10 + $0x2c] sm:$0xf]
    %v1424 = vld [vmem:[%s10 + $0x30] sm:$0xf]
    %v1425 = vld [vmem:[%s10 + $0x34] sm:$0xf]
    %v1426 = vld [vmem:[%s10 + $0x38] sm:$0xf]
    %v1427 = vld [vmem:[%s10 + $0x3c] sm:$0xf]
    %v1428 = vld [vmem:[%s10 + $0x40] sm:$0xf]
    %v1429 = vld [vmem:[%s10 + $0x44] sm:$0xf]
    %v1430 = vld [vmem:[%s10 + $0x48] sm:$0xf]
    %v1431 = vld [vmem:[%s10 + $0x4c] sm:$0xf]
    %v1432 = vld [vmem:[%s10 + $0x50] sm:$0xf]
    %v1433 = vld [vmem:[%s10 + $0x54] sm:$0xf]
    %v1434 = vld [vmem:[%s10 + $0x58] sm:$0xf]
    %v1435 = vld [vmem:[%s10 + $0x5c] sm:$0xf]
    %v1436 = vld [vmem:[%s10 + $0x60] sm:$0xf]
    %v1437 = vld [vmem:[%s10 + $0x64] sm:$0xf]
    %v1438 = vld [vmem:[%s10 + $0x68] sm:$0xf]
    %v1439 = vld [vmem:[%s10 + $0x6c] sm:$0xf]
    %v1440 = vld [vmem:[%s10 + $0x70] sm:$0xf]
    %v1441 = vld [vmem:[%s10 + $0x74] sm:$0xf]
    %v1442 = vld [vmem:[%s10 + $0x78] sm:$0xf]
    %v1443 = vld [vmem:[%s10 + $0x7c] sm:$0xf]
    %v1444 = vld [vmem:[#allocation2] sm:$0x1]
    %v1446 = vperm.slane %v1444, 0
    %v1480 = vunpack.c.l.b16 %v1412
    %v1481 = vunpack.c.l.b16 %v1413
    %v1482 = vunpack.c.l.b16 %v1414
    %v1483 = vunpack.c.l.b16 %v1415
    %v1484 = vunpack.c.l.b16 %v1416
    %v1485 = vunpack.c.l.b16 %v1417
    %v1486 = vunpack.c.l.b16 %v1418
    %v1487 = vunpack.c.l.b16 %v1419
    %v1488 = vunpack.c.l.b16 %v1420
    %v1489 = vunpack.c.l.b16 %v1421
    %v1490 = vunpack.c.l.b16 %v1422
    %v1491 = vunpack.c.l.b16 %v1423
    %v1492 = vunpack.c.l.b16 %v1424
    %v1493 = vunpack.c.l.b16 %v1425
    %v1494 = vunpack.c.l.b16 %v1426
    %v1495 = vunpack.c.l.b16 %v1427
    %v1496 = vunpack.c.l.b16 %v1428
    %v1497 = vunpack.c.l.b16 %v1429
    %v1498 = vunpack.c.l.b16 %v1430
    %v1499 = vunpack.c.l.b16 %v1431
    %v1500 = vunpack.c.l.b16 %v1432
    %v1501 = vunpack.c.l.b16 %v1433
    %v1502 = vunpack.c.l.b16 %v1434
    %v1503 = vunpack.c.l.b16 %v1435
    %v1504 = vunpack.c.l.b16 %v1436
    %v1505 = vunpack.c.l.b16 %v1437
    %v1506 = vunpack.c.l.b16 %v1438
    %v1507 = vunpack.c.l.b16 %v1439
    %v1508 = vunpack.c.l.b16 %v1440
    %v1509 = vunpack.c.l.b16 %v1441
    %v1510 = vunpack.c.l.b16 %v1442
    %v1511 = vunpack.c.l.b16 %v1443
    %v1512 = vpack.c.b16 %v1481, %v1480
    %v1513 = vpack.c.b16 %v1483, %v1482
    %v1514 = vpack.c.b16 %v1485, %v1484
    %v1515 = vpack.c.b16 %v1487, %v1486
    %v1516 = vpack.c.b16 %v1489, %v1488
    %v1517 = vpack.c.b16 %v1491, %v1490
    %v1518 = vpack.c.b16 %v1493, %v1492
    %v1519 = vpack.c.b16 %v1495, %v1494
    %v1520 = vpack.c.b16 %v1497, %v1496
    %v1521 = vpack.c.b16 %v1499, %v1498
    %v1522 = vpack.c.b16 %v1501, %v1500
    %v1523 = vpack.c.b16 %v1503, %v1502
    %v1524 = vpack.c.b16 %v1505, %v1504
    %v1525 = vpack.c.b16 %v1507, %v1506
    %v1526 = vpack.c.b16 %v1509, %v1508
    %v1527 = vpack.c.b16 %v1511, %v1510
    %1544 = vmatpush.bf16.msra.mxu0 %v1519
    %1545 = vmatpush.bf16.msra.mxu0 %v1518
    %1546 = vmatpush.bf16.msra.mxu0 %v1517
    %1547 = vmatpush.bf16.msra.mxu0 %v1516
    %1548 = vmatpush.bf16.msra.mxu0 %v1515
    %1549 = vmatpush.bf16.msra.mxu0 %v1514
    %1550 = vmatpush.bf16.msra.mxu0 %v1513
    %1551 = vmatpush.bf16.msra.mxu0 %v1512
    %1552 = vmatmul.bf16.gmra.mxu0 %v1410
    %v1553 = vpop.f32.mrf.mxu0
    %v1554 = vadd.f32 %v1446, %v1553
    %v1555 = vpop.f32.mrf.mxu0
    %1556 = vdwg.mxu0
    %1557 = vmatpush.bf16.msra.mxu0 %v1527
    %1558 = vmatpush.bf16.msra.mxu0 %v1526
    %1559 = vmatpush.bf16.msra.mxu0 %v1525
    %1560 = vmatpush.bf16.msra.mxu0 %v1524
    %1561 = vmatpush.bf16.msra.mxu0 %v1523
    %1562 = vmatpush.bf16.msra.mxu0 %v1522
    %1563 = vmatpush.bf16.msra.mxu0 %v1521
    %1564 = vmatpush.bf16.msra.mxu0 %v1520
    %1565 = vmatmul.bf16.gmra.mxu0 %v1411
    %v1566 = vpop.f32.mrf.mxu0
    %v1567 = vadd.f32 %v1554, %v1566
    %v1568 = vpop.f32.mrf.mxu0
    %1569 = vdwg.mxu0
    %v1570 = vtanh.pop %v1567
    %vm1571 = vcmask 1024
    %1572 = vst.msk [vmem:[%s13] sm:$0x3] %vm1571, %v1570
    // Predicated region
    $region50: #{net_forward.3} parent=1 // pred_check
      _
    $region51: #{net_forward.3} parent=1 // pred_check_branch
      %1574 = sbr.rel (0) target = $region53
    $region52: #{net_forward.3} parent=1 // pred_region
      %1576 = vsyncadd [#allocation4], 0
      %s1578 = sshll.u32 [#allocation3], 4
      %s1579 = int_to_ptr.vmem [resolvable:$true] %s1578
      %s1580 = sshll.u32 %s12, 4
      %s1581 = int_to_ptr.hbm [resolvable:$true] %s1580
      %1583 = dma.vmem_to_hbm [thread:$0]  %s1579, 32, %s1581, [#allocation4]
    $region53: #{net_forward.3} parent=1 // pred_fallthru
      _
    // Predicated region
    $region54: #{net_forward.3} parent=1 // pred_check
      _
    $region55: #{net_forward.3} parent=1 // pred_check_branch
      %1585 = sbr.rel (0) target = $region57
    $region56: #{net_forward.3} parent=1 // pred_region
      _
    $region57: #{net_forward.3} parent=1 // pred_fallthru
      _
    // Predicated region
    $region58: #{net_forward.3} parent=1 // pred_check
      _
    $region59: #{net_forward.3} parent=1 // pred_check_branch
      %1587 = sbr.rel (0) target = $region61
    $region60: #{net_forward.3} parent=1 // pred_region
      %1589 = dma.done [#allocation4], 32
    $region61: #{net_forward.3} parent=1 // pred_fallthru
      _
    // Predicated region
    $region62: #{net_forward.3} parent=1 // pred_check
      _
    $region63: #{net_forward.3} parent=1 // pred_check_branch
      %1591 = sbr.rel (0) target = $region65
    $region64: #{net_forward.3} parent=1 // pred_region
      _
    $region65: #{net_forward.3} parent=1 // pred_fallthru
      _
    %1592 = vsyncpa [#allocation4], 1

// kernel: net_forward.2
$region0: #{net_forward.2}
  #allocation0 [shape = 'u32[]', space=smem, size = 0x4, offset = 0x4, fixed_abs, tag = 'smem constant byte address 0x4 - core index']
  #allocation1 [shape = 'u32[72,128]{1,0:T(1,128)}', space=vmem, size = 0x9000, scoped, tag = 'internal scratch']
  %s0 = inlined_call_operand.vmem [shape: f32[9,1,128], index: 0, kind: input, shape index: {}]
  %s1 = inlined_call_operand.vmem [shape: f32[8,128], index: 1, kind: input, shape index: {}]
  %s2 = inlined_call_operand.vmem [shape: bf16[32,72], index: 2, kind: input, shape index: {}]
  %s3 = inlined_call_operand.vmem [shape: f32[32,1], index: 3, kind: input, shape index: {}]
  %s4 = inlined_call_operand.vmem [shape: f32[32,1], index: 4, kind: input, shape index: {}]
  %s5 = inlined_call_operand.vmem [shape: bf16[32,288], index: 5, kind: input, shape index: {}]
  %s6 = inlined_call_operand.vmem [shape: f32[32,1], index: 6, kind: input, shape index: {}]
  %s7 = inlined_call_operand.vmem [shape: f32[32,1], index: 7, kind: input, shape index: {}]
  %s8 = inlined_call_operand.vmem [shape: bf16[32,288], index: 8, kind: input, shape index: {}]
  %s9 = inlined_call_operand.vmem [shape: f32[32,1], index: 9, kind: input, shape index: {}]
  %s10 = inlined_call_operand.vmem [shape: f32[32,1], index: 10, kind: input, shape index: {}]
  %s11 = inlined_call_operand.vmem [shape: bf16[32,288], index: 11, kind: input, shape index: {}]
  %s12 = inlined_call_operand.vmem [shape: f32[32,1], index: 12, kind: input, shape index: {}]
  %s13 = inlined_call_operand.vmem [shape: f32[32,1], index: 13, kind: input, shape index: {}]
  %s14 = inlined_call_operand.vmem [shape: bf16[32,288], index: 14, kind: input, shape index: {}]
  %s15 = inlined_call_operand.vmem [shape: f32[32,1], index: 15, kind: input, shape index: {}]
  %s16 = inlined_call_operand.vmem [shape: f32[32,1], index: 16, kind: input, shape index: {}]
  %s17 = inlined_call_operand.vmem [shape: bf16[32,288], index: 17, kind: input, shape index: {}]
  %s18 = inlined_call_operand.vmem [shape: f32[32,1], index: 18, kind: input, shape index: {}]
  %s19 = inlined_call_operand.vmem [shape: f32[32,1], index: 19, kind: input, shape index: {}]
  %s20 = inlined_call_operand.vmem [shape: bf16[32,288], index: 20, kind: input, shape index: {}]
  %s21 = inlined_call_operand.vmem [shape: f32[32,1], index: 21, kind: input, shape index: {}]
  %s22 = inlined_call_operand.vmem [shape: f32[32,1], index: 22, kind: input, shape index: {}]
  %s23 = inlined_call_operand.vmem [shape: bf16[3,32], index: 23, kind: input, shape index: {}]
  %s24 = inlined_call_operand.vmem [shape: f32[3,1], index: 24, kind: input, shape index: {}]
  %s25 = inlined_call_operand.vmem [shape: f32[3,1], index: 25, kind: input, shape index: {}]
  %s26 = inlined_call_operand.vmem [shape: f32[3,128], index: 26, kind: output, shape index: {}]
  %s27 = sld [smem:[#allocation0]]
  $region114: #{net_forward.2} parent=0
    _
  %s29 = ssub.s32 1, %s27
  %s30 = scalar_select 0, %s29, %s27
  // Predicated region
  $region2: #{net_forward.2} parent=0 // pred_check
    _
  $region3: #{net_forward.2} parent=0 // pred_check_branch
    %32 = sbr.rel (0) target = $region5
  $region4: #{net_forward.2} parent=0 // pred_region
    _
  $region5: #{net_forward.2} parent=0 // pred_fallthru
    _
  // Predicated region
  $region6: #{net_forward.2} parent=0 // pred_check
    _
  $region7: #{net_forward.2} parent=0 // pred_check_branch
    %34 = sbr.rel (0) target = $region9
  $region8: #{net_forward.2} parent=0 // pred_region
    _
  $region9: #{net_forward.2} parent=0 // pred_fallthru
    _
  // Predicated region
  $region10: #{net_forward.2} parent=0 // pred_check
    _
  $region11: #{net_forward.2} parent=0 // pred_check_branch
    %36 = sbr.rel (0) target = $region13
  $region12: #{net_forward.2} parent=0 // pred_region
    _
  $region13: #{net_forward.2} parent=0 // pred_fallthru
    _
  // Predicated region
  $region14: #{net_forward.2} parent=0 // pred_check
    _
  $region15: #{net_forward.2} parent=0 // pred_check_branch
    %38 = sbr.rel (0) target = $region17
  $region16: #{net_forward.2} parent=0 // pred_region
    _
  $region17: #{net_forward.2} parent=0 // pred_fallthru
    _
  // Predicated region
  $region18: #{net_forward.2} parent=0 // pred_check
    _
  $region19: #{net_forward.2} parent=0 // pred_check_branch
    %40 = sbr.rel (0) target = $region21
  $region20: #{net_forward.2} parent=0 // pred_region
    _
  $region21: #{net_forward.2} parent=0 // pred_fallthru
    _
  // Predicated region
  $region22: #{net_forward.2} parent=0 // pred_check
    _
  $region23: #{net_forward.2} parent=0 // pred_check_branch
    %42 = sbr.rel (0) target = $region25
  $region24: #{net_forward.2} parent=0 // pred_region
    _
  $region25: #{net_forward.2} parent=0 // pred_fallthru
    _
  // Predicated region
  $region26: #{net_forward.2} parent=0 // pred_check
    _
  $region27: #{net_forward.2} parent=0 // pred_check_branch
    %44 = sbr.rel (0) target = $region29
  $region28: #{net_forward.2} parent=0 // pred_region
    _
  $region29: #{net_forward.2} parent=0 // pred_fallthru
    _
  // Predicated region
  $region30: #{net_forward.2} parent=0 // pred_check
    _
  $region31: #{net_forward.2} parent=0 // pred_check_branch
    %46 = sbr.rel (0) target = $region33
  $region32: #{net_forward.2} parent=0 // pred_region
    _
  $region33: #{net_forward.2} parent=0 // pred_fallthru
    _
  // Predicated region
  $region34: #{net_forward.2} parent=0 // pred_check
    _
  $region35: #{net_forward.2} parent=0 // pred_check_branch
    %48 = sbr.rel (0) target = $region37
  $region36: #{net_forward.2} parent=0 // pred_region
    _
  $region37: #{net_forward.2} parent=0 // pred_fallthru
    _
  // Predicated region
  $region38: #{net_forward.2} parent=0 // pred_check
    _
  $region39: #{net_forward.2} parent=0 // pred_check_branch
    %50 = sbr.rel (0) target = $region41
  $region40: #{net_forward.2} parent=0 // pred_region
    _
  $region41: #{net_forward.2} parent=0 // pred_fallthru
    _
  // Predicated region
  $region42: #{net_forward.2} parent=0 // pred_check
    _
  $region43: #{net_forward.2} parent=0 // pred_check_branch
    %52 = sbr.rel (0) target = $region45
  $region44: #{net_forward.2} parent=0 // pred_region
    _
  $region45: #{net_forward.2} parent=0 // pred_fallthru
    _
  // Predicated region
  $region46: #{net_forward.2} parent=0 // pred_check
    _
  $region47: #{net_forward.2} parent=0 // pred_check_branch
    %54 = sbr.rel (0) target = $region49
  $region48: #{net_forward.2} parent=0 // pred_region
    _
  $region49: #{net_forward.2} parent=0 // pred_fallthru
    _
  // Predicated region
  $region50: #{net_forward.2} parent=0 // pred_check
    _
  $region51: #{net_forward.2} parent=0 // pred_check_branch
    %56 = sbr.rel (0) target = $region53
  $region52: #{net_forward.2} parent=0 // pred_region
    _
  $region53: #{net_forward.2} parent=0 // pred_fallthru
    _
  // Predicated region
  $region54: #{net_forward.2} parent=0 // pred_check
    _
  $region55: #{net_forward.2} parent=0 // pred_check_branch
    %58 = sbr.rel (0) target = $region57
  $region56: #{net_forward.2} parent=0 // pred_region
    _
  $region57: #{net_forward.2} parent=0 // pred_fallthru
    _
  // Predicated region
  $region58: #{net_forward.2} parent=0 // pred_check
    _
  $region59: #{net_forward.2} parent=0 // pred_check_branch
    %60 = sbr.rel (0) target = $region61
  $region60: #{net_forward.2} parent=0 // pred_region
    _
  $region61: #{net_forward.2} parent=0 // pred_fallthru
    _
  // Predicated region
  $region62: #{net_forward.2} parent=0 // pred_check
    _
  $region63: #{net_forward.2} parent=0 // pred_check_branch
    %62 = sbr.rel (0) target = $region65
  $region64: #{net_forward.2} parent=0 // pred_region
    _
  $region65: #{net_forward.2} parent=0 // pred_fallthru
    _
  // Predicated region
  $region66: #{net_forward.2} parent=0 // pred_check
    _
  $region67: #{net_forward.2} parent=0 // pred_check_branch
    %64 = sbr.rel (0) target = $region69
  $region68: #{net_forward.2} parent=0 // pred_region
    _
  $region69: #{net_forward.2} parent=0 // pred_fallthru
    _
  // Predicated region
  $region70: #{net_forward.2} parent=0 // pred_check
    _
  $region71: #{net_forward.2} parent=0 // pred_check_branch
    %66 = sbr.rel (0) target = $region73
  $region72: #{net_forward.2} parent=0 // pred_region
    _
  $region73: #{net_forward.2} parent=0 // pred_fallthru
    _
  // Predicated region
  $region74: #{net_forward.2} parent=0 // pred_check
    _
  $region75: #{net_forward.2} parent=0 // pred_check_branch
    %68 = sbr.rel (0) target = $region77
  $region76: #{net_forward.2} parent=0 // pred_region
    _
  $region77: #{net_forward.2} parent=0 // pred_fallthru
    _
  // Predicated region
  $region78: #{net_forward.2} parent=0 // pred_check
    _
  $region79: #{net_forward.2} parent=0 // pred_check_branch
    %70 = sbr.rel (0) target = $region81
  $region80: #{net_forward.2} parent=0 // pred_region
    _
  $region81: #{net_forward.2} parent=0 // pred_fallthru
    _
  // Predicated region
  $region82: #{net_forward.2} parent=0 // pred_check
    _
  $region83: #{net_forward.2} parent=0 // pred_check_branch
    %72 = sbr.rel (0) target = $region85
  $region84: #{net_forward.2} parent=0 // pred_region
    _
  $region85: #{net_forward.2} parent=0 // pred_fallthru
    _
  // Predicated region
  $region86: #{net_forward.2} parent=0 // pred_check
    _
  $region87: #{net_forward.2} parent=0 // pred_check_branch
    %74 = sbr.rel (0) target = $region89
  $region88: #{net_forward.2} parent=0 // pred_region
    _
  $region89: #{net_forward.2} parent=0 // pred_fallthru
    _
  // Predicated region
  $region90: #{net_forward.2} parent=0 // pred_check
    _
  $region91: #{net_forward.2} parent=0 // pred_check_branch
    %76 = sbr.rel (0) target = $region93
  $region92: #{net_forward.2} parent=0 // pred_region
    _
  $region93: #{net_forward.2} parent=0 // pred_fallthru
    _
  // Predicated region
  $region94: #{net_forward.2} parent=0 // pred_check
    _
  $region95: #{net_forward.2} parent=0 // pred_check_branch
    %78 = sbr.rel (0) target = $region97
  $region96: #{net_forward.2} parent=0 // pred_region
    _
  $region97: #{net_forward.2} parent=0 // pred_fallthru
    _
  // Predicated region
  $region98: #{net_forward.2} parent=0 // pred_check
    _
  $region99: #{net_forward.2} parent=0 // pred_check_branch
    %80 = sbr.rel (0) target = $region101
  $region100: #{net_forward.2} parent=0 // pred_region
    _
  $region101: #{net_forward.2} parent=0 // pred_fallthru
    _
  // Predicated region
  $region102: #{net_forward.2} parent=0 // pred_check
    _
  $region103: #{net_forward.2} parent=0 // pred_check_branch
    %82 = sbr.rel (0) target = $region105
  $region104: #{net_forward.2} parent=0 // pred_region
    _
  $region105: #{net_forward.2} parent=0 // pred_fallthru
    _
  %v84 = vld [vmem:[%s1] sm:$0xff]
  %v85 = vld [vmem:[%s2] sm:$0xf]
  %v86 = vld [vmem:[%s2 + $0x4] sm:$0xf]
  %v87 = vld [vmem:[%s2 + $0x8] sm:$0xf]
  %v88 = vld [vmem:[%s2 + $0xc] sm:$0xf]
  %89 = vrot.lane.b32.xlu0 %v84, 9
  %v90 = vpop.permute.xlu0 %89
  %v91 = vld [vmem:[%s0] sm:$0x1]
  %v93 = vperm.slane %v91, 0
  %v95 = vmul.f32 %v90, %v93
  %96 = vrot.lane.b32.xlu0 %v84, 8
  %v97 = vpop.permute.xlu0 %96
  %s98 = scalar_lea.vmem %s0, 1
  %v99 = vld [vmem:[%s98] sm:$0x1]
  %v101 = vperm.slane %v99, 0
  %v103 = vmul.f32 %v97, %v101
  %104 = vrot.lane.b32.xlu0 %v84, 7
  %v105 = vpop.permute.xlu0 %104
  %s106 = scalar_lea.vmem %s0, 2
  %v107 = vld [vmem:[%s106] sm:$0x1]
  %v109 = vperm.slane %v107, 0
  %v111 = vmul.f32 %v105, %v109
  %112 = vrot.lane.b32.xlu0 %v84, 1
  %v113 = vpop.permute.xlu0 %112
  %s114 = scalar_lea.vmem %s0, 3
  %v115 = vld [vmem:[%s114] sm:$0x1]
  %v117 = vperm.slane %v115, 0
  %v119 = vmul.f32 %v113, %v117
  %s120 = scalar_lea.vmem %s0, 4
  %v121 = vld [vmem:[%s120] sm:$0x1]
  %v123 = vperm.slane %v121, 0
  %v125 = vmul.f32 %v84, %v123
  %126 = vrot.lane.b32.xlu0 %v84, 127
  %v127 = vpop.permute.xlu0 %126
  %s128 = scalar_lea.vmem %s0, 5
  %v129 = vld [vmem:[%s128] sm:$0x1]
  %v131 = vperm.slane %v129, 0
  %v133 = vmul.f32 %v127, %v131
  %134 = vrot.lane.b32.xlu0 %v84, 121
  %v135 = vpop.permute.xlu0 %134
  %s136 = scalar_lea.vmem %s0, 6
  %v137 = vld [vmem:[%s136] sm:$0x1]
  %v139 = vperm.slane %v137, 0
  %v141 = vmul.f32 %v135, %v139
  %142 = vrot.lane.b32.xlu0 %v84, 120
  %v143 = vpop.permute.xlu0 %142
  %s144 = scalar_lea.vmem %s0, 7
  %v145 = vld [vmem:[%s144] sm:$0x1]
  %v147 = vperm.slane %v145, 0
  %v149 = vmul.f32 %v143, %v147
  %150 = vrot.lane.b32.xlu0 %v84, 119
  %v151 = vpop.permute.xlu0 %150
  %s152 = scalar_lea.vmem %s0, 8
  %v153 = vld [vmem:[%s152] sm:$0x1]
  %v155 = vperm.slane %v153, 0
  %v157 = vmul.f32 %v151, %v155
  %v158 = vpack.c.bf16 %v103, %v95
  %v159 = vpack.c.bf16 %v119, %v111
  %v160 = vpack.c.bf16 %v133, %v125
  %v161 = vpack.c.bf16 %v149, %v141
  %v162 = vpack.c.bf16 %v157, %v157
  %v167 = vunpack.c.l.b16 %v85
  %v168 = vunpack.c.l.b16 %v86
  %v169 = vunpack.c.l.b16 %v87
  %v170 = vunpack.c.l.b16 %v88
  %v171 = vpack.c.b16 %v168, %v167
  %v172 = vpack.c.b16 %v170, %v169
  %vm173 = vcmask 588800
  %v175 = vsel %vm173, %v171, 0
  %v178 = vsel %vm173, %v172, 0
  %vm180 = vcmask 1043456
  %v182 = vsel %vm180, %v162, 0
  %184 = vmatpush.bf16.msra.mxu0 0
  %185 = vmatpush.bf16.msra.mxu0 0
  %186 = vmatpush.bf16.msra.mxu0 0
  %187 = vmatpush.bf16.msra.mxu0 %v182
  %188 = vmatpush.bf16.msra.mxu0 %v161
  %189 = vmatpush.bf16.msra.mxu0 %v160
  %190 = vmatpush.bf16.msra.mxu0 %v159
  %191 = vmatpush.bf16.msra.mxu0 %v158
  %192 = vmatmul.bf16.gmra.mxu0 %v175
  %v193 = vpop.f32.mrf.mxu0
  %v194 = vadd.f32 0.0, %v193
  %v195 = vpop.f32.mrf.mxu0
  %v196 = vadd.f32 0.0, %v195
  %197 = vmatmul.bf16.gmra.mxu0 %v178
  %v198 = vpop.f32.mrf.mxu0
  %v199 = vadd.f32 0.0, %v198
  %v200 = vpop.f32.mrf.mxu0
  %v201 = vadd.f32 0.0, %v200
  %202 = vdwg.mxu0
  %v203 = vld [vmem:[%s3] sm:$0xff]
  %v204 = vld [vmem:[%s3 + $0x8] sm:$0xff]
  %v205 = vld [vmem:[%s3 + $0x10] sm:$0xff]
  %v206 = vld [vmem:[%s3 + $0x18] sm:$0xff]
  %v207 = vld [vmem:[%s4] sm:$0xff]
  %v208 = vld [vmem:[%s4 + $0x8] sm:$0xff]
  %v209 = vld [vmem:[%s4 + $0x10] sm:$0xff]
  %v210 = vld [vmem:[%s4 + $0x18] sm:$0xff]
  %211 = vadd.xlane.f32.xlu0 %v194
  %v212 = vpop.xlane.xlu0 %211
  %213 = vadd.xlane.f32.xlu0 %v196
  %v214 = vpop.xlane.xlu0 %213
  %215 = vadd.xlane.f32.xlu0 %v199
  %v216 = vpop.xlane.xlu0 %215
  %217 = vadd.xlane.f32.xlu0 %v201
  %v218 = vpop.xlane.xlu0 %217
  %v219 = vmul.f32 %v212, 0.0078125
  %v220 = vmul.f32 %v214, 0.0078125
  %v221 = vmul.f32 %v216, 0.0078125
  %v222 = vmul.f32 %v218, 0.0078125
  %v223 = vmul.f32 %v194, %v194
  %v224 = vmul.f32 %v196, %v196
  %v225 = vmul.f32 %v199, %v199
  %v226 = vmul.f32 %v201, %v201
  %227 = vadd.xlane.f32.xlu0 %v223
  %v228 = vpop.xlane.xlu0 %227
  %229 = vadd.xlane.f32.xlu0 %v224
  %v230 = vpop.xlane.xlu0 %229
  %231 = vadd.xlane.f32.xlu0 %v225
  %v232 = vpop.xlane.xlu0 %231
  %233 = vadd.xlane.f32.xlu0 %v226
  %v234 = vpop.xlane.xlu0 %233
  %v235 = vmul.f32 %v228, 0.0078125
  %v236 = vmul.f32 %v230, 0.0078125
  %v237 = vmul.f32 %v232, 0.0078125
  %v238 = vmul.f32 %v234, 0.0078125
  %v239 = vmul.f32 %v219, %v219
  %v240 = vmul.f32 %v220, %v220
  %v241 = vmul.f32 %v221, %v221
  %v242 = vmul.f32 %v222, %v222
  %v243 = vsub.f32 %v235, %v239
  %v244 = vsub.f32 %v236, %v240
  %v245 = vsub.f32 %v237, %v241
  %v246 = vsub.f32 %v238, %v242
  %v247 = vmax.f32 %v243, 0.0
  %v248 = vmax.f32 %v244, 0.0
  %v249 = vmax.f32 %v245, 0.0
  %v250 = vmax.f32 %v246, 0.0
  %v251 = vsub.f32 %v194, %v219
  %v252 = vsub.f32 %v196, %v220
  %v253 = vsub.f32 %v199, %v221
  %v254 = vsub.f32 %v201, %v222
  %256 = vset.pattern.permute.xlu0 0
  %257 = vperm.xlu0 %256, %v203
  %v258 = vpop.permute.xlu0 %257
  %261 = vset.pattern.permute.xlu0 0
  %262 = vperm.xlu0 %261, %v204
  %v263 = vpop.permute.xlu0 %262
  %266 = vset.pattern.permute.xlu0 0
  %267 = vperm.xlu0 %266, %v205
  %v268 = vpop.permute.xlu0 %267
  %271 = vset.pattern.permute.xlu0 0
  %272 = vperm.xlu0 %271, %v206
  %v273 = vpop.permute.xlu0 %272
  %v275 = vmul.f32 %v258, %v251
  %v276 = vmul.f32 %v263, %v252
  %v277 = vmul.f32 %v268, %v253
  %v278 = vmul.f32 %v273, %v254
  %v279 = vadd.f32 %v247, 1e-05
  %v280 = vadd.f32 %v248, 1e-05
  %v281 = vadd.f32 %v249, 1e-05
  %v282 = vadd.f32 %v250, 1e-05
  %v283 = vrsqrt.pop %v279
  %v284 = vmul.f32 %v283, %v279
  %v285 = vmul.f32 %v284, %v283
  %v286 = vmul.f32 0.5, %v285
  %v287 = vsub.f32 1.5, %v286
  %v288 = vmul.f32 %v283, %v287
  %vm289 = vweird.f32 %v279
  %vm290 = vweird.f32 %v283
  %vm291 = vmor %vm289, %vm290
  %v292 = vsel %vm291, %v283, %v288
  %v293 = vrsqrt.pop %v280
  %v294 = vmul.f32 %v293, %v280
  %v295 = vmul.f32 %v294, %v293
  %v296 = vmul.f32 0.5, %v295
  %v297 = vsub.f32 1.5, %v296
  %v298 = vmul.f32 %v293, %v297
  %vm299 = vweird.f32 %v280
  %vm300 = vweird.f32 %v293
  %vm301 = vmor %vm299, %vm300
  %v302 = vsel %vm301, %v293, %v298
  %v303 = vrsqrt.pop %v281
  %v304 = vmul.f32 %v303, %v281
  %v305 = vmul.f32 %v304, %v303
  %v306 = vmul.f32 0.5, %v305
  %v307 = vsub.f32 1.5, %v306
  %v308 = vmul.f32 %v303, %v307
  %vm309 = vweird.f32 %v281
  %vm310 = vweird.f32 %v303
  %vm311 = vmor %vm309, %vm310
  %v312 = vsel %vm311, %v303, %v308
  %v313 = vrsqrt.pop %v282
  %v314 = vmul.f32 %v313, %v282
  %v315 = vmul.f32 %v314, %v313
  %v316 = vmul.f32 0.5, %v315
  %v317 = vsub.f32 1.5, %v316
  %v318 = vmul.f32 %v313, %v317
  %vm319 = vweird.f32 %v282
  %vm320 = vweird.f32 %v313
  %vm321 = vmor %vm319, %vm320
  %v322 = vsel %vm321, %v313, %v318
  %v323 = vmul.f32 %v275, %v292
  %v324 = vmul.f32 %v276, %v302
  %v325 = vmul.f32 %v277, %v312
  %v326 = vmul.f32 %v278, %v322
  %328 = vset.pattern.permute.xlu0 0
  %329 = vperm.xlu0 %328, %v207
  %v330 = vpop.permute.xlu0 %329
  %333 = vset.pattern.permute.xlu0 0
  %334 = vperm.xlu0 %333, %v208
  %v335 = vpop.permute.xlu0 %334
  %338 = vset.pattern.permute.xlu0 0
  %339 = vperm.xlu0 %338, %v209
  %v340 = vpop.permute.xlu0 %339
  %343 = vset.pattern.permute.xlu0 0
  %344 = vperm.xlu0 %343, %v210
  %v345 = vpop.permute.xlu0 %344
  %v347 = vadd.f32 %v323, %v330
  %v348 = vadd.f32 %v324, %v335
  %v349 = vadd.f32 %v325, %v340
  %v350 = vadd.f32 %v326, %v345
  %v351 = vmax.f32 %v347, 0.0
  %v352 = vmax.f32 %v348, 0.0
  %v353 = vmax.f32 %v349, 0.0
  %v354 = vmax.f32 %v350, 0.0
  %v355 = vld [vmem:[%s5] sm:$0xff]
  %v356 = vld [vmem:[%s5 + $0x8] sm:$0xf]
  %v357 = vld [vmem:[%s5 + $0xc] sm:$0xff]
  %v358 = vld [vmem:[%s5 + $0x14] sm:$0xf]
  %v359 = vld [vmem:[%s5 + $0x18] sm:$0xff]
  %v360 = vld [vmem:[%s5 + $0x20] sm:$0xf]
  %v361 = vld [vmem:[%s5 + $0x24] sm:$0xff]
  %v362 = vld [vmem:[%s5 + $0x2c] sm:$0xf]
  %363 = vrot.lane.b32.xlu0 %v351, 9
  %v364 = vpop.permute.xlu0 %363
  %365 = vrot.lane.b32.xlu0 %v352, 9
  %v366 = vpop.permute.xlu0 %365
  %367 = vrot.lane.b32.xlu0 %v353, 9
  %v368 = vpop.permute.xlu0 %367
  %369 = vrot.lane.b32.xlu0 %v354, 9
  %v370 = vpop.permute.xlu0 %369
  %v371 = vmul.f32 %v364, %v93
  %v372 = vmul.f32 %v366, %v93
  %v373 = vmul.f32 %v368, %v93
  %v374 = vmul.f32 %v370, %v93
  %375 = vrot.lane.b32.xlu0 %v351, 8
  %v376 = vpop.permute.xlu0 %375
  %377 = vrot.lane.b32.xlu0 %v352, 8
  %v378 = vpop.permute.xlu0 %377
  %379 = vrot.lane.b32.xlu0 %v353, 8
  %v380 = vpop.permute.xlu0 %379
  %381 = vrot.lane.b32.xlu0 %v354, 8
  %v382 = vpop.permute.xlu0 %381
  %v383 = vmul.f32 %v376, %v101
  %v384 = vmul.f32 %v378, %v101
  %v385 = vmul.f32 %v380, %v101
  %v386 = vmul.f32 %v382, %v101
  %387 = vrot.lane.b32.xlu0 %v351, 7
  %v388 = vpop.permute.xlu0 %387
  %389 = vrot.lane.b32.xlu0 %v352, 7
  %v390 = vpop.permute.xlu0 %389
  %391 = vrot.lane.b32.xlu0 %v353, 7
  %v392 = vpop.permute.xlu0 %391
  %393 = vrot.lane.b32.xlu0 %v354, 7
  %v394 = vpop.permute.xlu0 %393
  %v395 = vmul.f32 %v388, %v109
  %v396 = vmul.f32 %v390, %v109
  %v397 = vmul.f32 %v392, %v109
  %v398 = vmul.f32 %v394, %v109
  %399 = vrot.lane.b32.xlu0 %v351, 1
  %v400 = vpop.permute.xlu0 %399
  %401 = vrot.lane.b32.xlu0 %v352, 1
  %v402 = vpop.permute.xlu0 %401
  %403 = vrot.lane.b32.xlu0 %v353, 1
  %v404 = vpop.permute.xlu0 %403
  %405 = vrot.lane.b32.xlu0 %v354, 1
  %v406 = vpop.permute.xlu0 %405
  %v407 = vmul.f32 %v400, %v117
  %v408 = vmul.f32 %v402, %v117
  %v409 = vmul.f32 %v404, %v117
  %v410 = vmul.f32 %v406, %v117
  %v411 = vmul.f32 %v351, %v123
  %v412 = vmul.f32 %v352, %v123
  %v413 = vmul.f32 %v353, %v123
  %v414 = vmul.f32 %v354, %v123
  %415 = vrot.lane.b32.xlu0 %v351, 127
  %v416 = vpop.permute.xlu0 %415
  %417 = vrot.lane.b32.xlu0 %v352, 127
  %v418 = vpop.permute.xlu0 %417
  %419 = vrot.lane.b32.xlu0 %v353, 127
  %v420 = vpop.permute.xlu0 %419
  %421 = vrot.lane.b32.xlu0 %v354, 127
  %v422 = vpop.permute.xlu0 %421
  %v423 = vmul.f32 %v416, %v131
  %v424 = vmul.f32 %v418, %v131
  %v425 = vmul.f32 %v420, %v131
  %v426 = vmul.f32 %v422, %v131
  %427 = vrot.lane.b32.xlu0 %v351, 121
  %v428 = vpop.permute.xlu0 %427
  %429 = vrot.lane.b32.xlu0 %v352, 121
  %v430 = vpop.permute.xlu0 %429
  %431 = vrot.lane.b32.xlu0 %v353, 121
  %v432 = vpop.permute.xlu0 %431
  %433 = vrot.lane.b32.xlu0 %v354, 121
  %v434 = vpop.permute.xlu0 %433
  %v435 = vmul.f32 %v428, %v139
  %v436 = vmul.f32 %v430, %v139
  %v437 = vmul.f32 %v432, %v139
  %v438 = vmul.f32 %v434, %v139
  %439 = vrot.lane.b32.xlu0 %v351, 120
  %v440 = vpop.permute.xlu0 %439
  %441 = vrot.lane.b32.xlu0 %v352, 120
  %v442 = vpop.permute.xlu0 %441
  %443 = vrot.lane.b32.xlu0 %v353, 120
  %v444 = vpop.permute.xlu0 %443
  %445 = vrot.lane.b32.xlu0 %v354, 120
  %v446 = vpop.permute.xlu0 %445
  %v447 = vmul.f32 %v440, %v147
  %v448 = vmul.f32 %v442, %v147
  %v449 = vmul.f32 %v444, %v147
  %v450 = vmul.f32 %v446, %v147
  %451 = vrot.lane.b32.xlu0 %v351, 119
  %v452 = vpop.permute.xlu0 %451
  %453 = vrot.lane.b32.xlu0 %v352, 119
  %v454 = vpop.permute.xlu0 %453
  %455 = vrot.lane.b32.xlu0 %v353, 119
  %v456 = vpop.permute.xlu0 %455
  %457 = vrot.lane.b32.xlu0 %v354, 119
  %v458 = vpop.permute.xlu0 %457
  %v459 = vmul.f32 %v452, %v155
  %v460 = vmul.f32 %v454, %v155
  %v461 = vmul.f32 %v456, %v155
  %v462 = vmul.f32 %v458, %v155
  %v463 = vpack.c.bf16 %v372, %v371
  %v464 = vpack.c.bf16 %v374, %v373
  %v465 = vpack.c.bf16 %v384, %v383
  %v466 = vpack.c.bf16 %v386, %v385
  %v467 = vpack.c.bf16 %v396, %v395
  %v468 = vpack.c.bf16 %v398, %v397
  %v469 = vpack.c.bf16 %v408, %v407
  %v470 = vpack.c.bf16 %v410, %v409
  %v471 = vpack.c.bf16 %v412, %v411
  %v472 = vpack.c.bf16 %v414, %v413
  %v473 = vpack.c.bf16 %v424, %v423
  %v474 = vpack.c.bf16 %v426, %v425
  %v475 = vpack.c.bf16 %v436, %v435
  %v476 = vpack.c.bf16 %v438, %v437
  %v477 = vpack.c.bf16 %v448, %v447
  %v478 = vpack.c.bf16 %v450, %v449
  %v479 = vpack.c.bf16 %v460, %v459
  %v480 = vpack.c.bf16 %v462, %v461
  %v489 = vunpack.c.l.b16 %v355
  %v490 = vunpack.c.h.b16 %v355
  %v491 = vunpack.c.l.b16 %v356
  %v492 = vunpack.c.l.b16 %v357
  %v493 = vunpack.c.h.b16 %v357
  %v494 = vunpack.c.l.b16 %v358
  %v495 = vunpack.c.l.b16 %v359
  %v496 = vunpack.c.h.b16 %v359
  %v497 = vunpack.c.l.b16 %v360
  %v498 = vunpack.c.l.b16 %v361
  %v499 = vunpack.c.h.b16 %v361
  %v500 = vunpack.c.l.b16 %v362
  %v501 = vpack.c.b16 %v492, %v489
  %v502 = vpack.c.b16 %v493, %v490
  %v503 = vpack.c.b16 %v494, %v491
  %v504 = vpack.c.b16 %v498, %v495
  %v505 = vpack.c.b16 %v499, %v496
  %v506 = vpack.c.b16 %v500, %v497
  %vm511 = vcmask 261120
  %v513 = vsel %vm511, %v503, 0
  %v516 = vsel %vm511, %v506, 0
  %518 = vmatpush.bf16.msra.mxu0 %v470
  %519 = vmatpush.bf16.msra.mxu0 %v469
  %520 = vmatpush.bf16.msra.mxu0 %v468
  %521 = vmatpush.bf16.msra.mxu0 %v467
  %522 = vmatpush.bf16.msra.mxu0 %v466
  %523 = vmatpush.bf16.msra.mxu0 %v465
  %524 = vmatpush.bf16.msra.mxu0 %v464
  %525 = vmatpush.bf16.msra.mxu0 %v463
  %526 = vmatmul.bf16.gmra.mxu0 %v501
  %v527 = vpop.f32.mrf.mxu0
  %v528 = vadd.f32 0.0, %v527
  %v529 = vpop.f32.mrf.mxu0
  %v530 = vadd.f32 0.0, %v529
  %531 = vmatmul.bf16.gmra.mxu0 %v504
  %v532 = vpop.f32.mrf.mxu0
  %v533 = vadd.f32 0.0, %v532
  %v534 = vpop.f32.mrf.mxu0
  %v535 = vadd.f32 0.0, %v534
  %536 = vdwg.mxu0
  %537 = vmatpush.bf16.msra.mxu0 %v478
  %538 = vmatpush.bf16.msra.mxu0 %v477
  %539 = vmatpush.bf16.msra.mxu0 %v476
  %540 = vmatpush.bf16.msra.mxu0 %v475
  %541 = vmatpush.bf16.msra.mxu0 %v474
  %542 = vmatpush.bf16.msra.mxu0 %v473
  %543 = vmatpush.bf16.msra.mxu0 %v472
  %544 = vmatpush.bf16.msra.mxu0 %v471
  %545 = vmatmul.bf16.gmra.mxu0 %v502
  %v546 = vpop.f32.mrf.mxu0
  %v547 = vadd.f32 %v528, %v546
  %v548 = vpop.f32.mrf.mxu0
  %v549 = vadd.f32 %v530, %v548
  %550 = vmatmul.bf16.gmra.mxu0 %v505
  %v551 = vpop.f32.mrf.mxu0
  %v552 = vadd.f32 %v533, %v551
  %v553 = vpop.f32.mrf.mxu0
  %v554 = vadd.f32 %v535, %v553
  %555 = vdwg.mxu0
  %556 = vmatpush.bf16.msra.mxu0 0
  %557 = vmatpush.bf16.msra.mxu0 0
  %558 = vmatpush.bf16.msra.mxu0 0
  %559 = vmatpush.bf16.msra.mxu0 0
  %560 = vmatpush.bf16.msra.mxu0 0
  %561 = vmatpush.bf16.msra.mxu0 0
  %562 = vmatpush.bf16.msra.mxu0 %v480
  %563 = vmatpush.bf16.msra.mxu0 %v479
  %564 = vmatmul.bf16.gmra.mxu0 %v513
  %v565 = vpop.f32.mrf.mxu0
  %v566 = vadd.f32 %v547, %v565
  %v567 = vpop.f32.mrf.mxu0
  %v568 = vadd.f32 %v549, %v567
  %569 = vmatmul.bf16.gmra.mxu0 %v516
  %v570 = vpop.f32.mrf.mxu0
  %v571 = vadd.f32 %v552, %v570
  %v572 = vpop.f32.mrf.mxu0
  %v573 = vadd.f32 %v554, %v572
  %574 = vdwg.mxu0
  %v575 = vld [vmem:[%s6] sm:$0xff]
  %v576 = vld [vmem:[%s6 + $0x8] sm:$0xff]
  %v577 = vld [vmem:[%s6 + $0x10] sm:$0xff]
  %v578 = vld [vmem:[%s6 + $0x18] sm:$0xff]
  %v579 = vld [vmem:[%s7] sm:$0xff]
  %v580 = vld [vmem:[%s7 + $0x8] sm:$0xff]
  %v581 = vld [vmem:[%s7 + $0x10] sm:$0xff]
  %v582 = vld [vmem:[%s7 + $0x18] sm:$0xff]
  %583 = vadd.xlane.f32.xlu0 %v566
  %v584 = vpop.xlane.xlu0 %583
  %585 = vadd.xlane.f32.xlu0 %v568
  %v586 = vpop.xlane.xlu0 %585
  %587 = vadd.xlane.f32.xlu0 %v571
  %v588 = vpop.xlane.xlu0 %587
  %589 = vadd.xlane.f32.xlu0 %v573
  %v590 = vpop.xlane.xlu0 %589
  %v591 = vmul.f32 %v584, 0.0078125
  %v592 = vmul.f32 %v586, 0.0078125
  %v593 = vmul.f32 %v588, 0.0078125
  %v594 = vmul.f32 %v590, 0.0078125
  %v595 = vmul.f32 %v566, %v566
  %v596 = vmul.f32 %v568, %v568
  %v597 = vmul.f32 %v571, %v571
  %v598 = vmul.f32 %v573, %v573
  %599 = vadd.xlane.f32.xlu0 %v595
  %v600 = vpop.xlane.xlu0 %599
  %601 = vadd.xlane.f32.xlu0 %v596
  %v602 = vpop.xlane.xlu0 %601
  %603 = vadd.xlane.f32.xlu0 %v597
  %v604 = vpop.xlane.xlu0 %603
  %605 = vadd.xlane.f32.xlu0 %v598
  %v606 = vpop.xlane.xlu0 %605
  %v607 = vmul.f32 %v600, 0.0078125
  %v608 = vmul.f32 %v602, 0.0078125
  %v609 = vmul.f32 %v604, 0.0078125
  %v610 = vmul.f32 %v606, 0.0078125
  %v611 = vmul.f32 %v591, %v591
  %v612 = vmul.f32 %v592, %v592
  %v613 = vmul.f32 %v593, %v593
  %v614 = vmul.f32 %v594, %v594
  %v615 = vsub.f32 %v607, %v611
  %v616 = vsub.f32 %v608, %v612
  %v617 = vsub.f32 %v609, %v613
  %v618 = vsub.f32 %v610, %v614
  %v619 = vmax.f32 %v615, 0.0
  %v620 = vmax.f32 %v616, 0.0
  %v621 = vmax.f32 %v617, 0.0
  %v622 = vmax.f32 %v618, 0.0
  %v623 = vsub.f32 %v566, %v591
  %v624 = vsub.f32 %v568, %v592
  %v625 = vsub.f32 %v571, %v593
  %v626 = vsub.f32 %v573, %v594
  %628 = vset.pattern.permute.xlu0 0
  %629 = vperm.xlu0 %628, %v575
  %v630 = vpop.permute.xlu0 %629
  %633 = vset.pattern.permute.xlu0 0
  %634 = vperm.xlu0 %633, %v576
  %v635 = vpop.permute.xlu0 %634
  %638 = vset.pattern.permute.xlu0 0
  %639 = vperm.xlu0 %638, %v577
  %v640 = vpop.permute.xlu0 %639
  %643 = vset.pattern.permute.xlu0 0
  %644 = vperm.xlu0 %643, %v578
  %v645 = vpop.permute.xlu0 %644
  %v647 = vmul.f32 %v630, %v623
  %v648 = vmul.f32 %v635, %v624
  %v649 = vmul.f32 %v640, %v625
  %v650 = vmul.f32 %v645, %v626
  %v651 = vadd.f32 %v619, 1e-05
  %v652 = vadd.f32 %v620, 1e-05
  %v653 = vadd.f32 %v621, 1e-05
  %v654 = vadd.f32 %v622, 1e-05
  %v655 = vrsqrt.pop %v651
  %v656 = vmul.f32 %v655, %v651
  %v657 = vmul.f32 %v656, %v655
  %v658 = vmul.f32 0.5, %v657
  %v659 = vsub.f32 1.5, %v658
  %v660 = vmul.f32 %v655, %v659
  %vm661 = vweird.f32 %v651
  %vm662 = vweird.f32 %v655
  %vm663 = vmor %vm661, %vm662
  %v664 = vsel %vm663, %v655, %v660
  %v665 = vrsqrt.pop %v652
  %v666 = vmul.f32 %v665, %v652
  %v667 = vmul.f32 %v666, %v665
  %v668 = vmul.f32 0.5, %v667
  %v669 = vsub.f32 1.5, %v668
  %v670 = vmul.f32 %v665, %v669
  %vm671 = vweird.f32 %v652
  %vm672 = vweird.f32 %v665
  %vm673 = vmor %vm671, %vm672
  %v674 = vsel %vm673, %v665, %v670
  %v675 = vrsqrt.pop %v653
  %v676 = vmul.f32 %v675, %v653
  %v677 = vmul.f32 %v676, %v675
  %v678 = vmul.f32 0.5, %v677
  %v679 = vsub.f32 1.5, %v678
  %v680 = vmul.f32 %v675, %v679
  %vm681 = vweird.f32 %v653
  %vm682 = vweird.f32 %v675
  %vm683 = vmor %vm681, %vm682
  %v684 = vsel %vm683, %v675, %v680
  %v685 = vrsqrt.pop %v654
  %v686 = vmul.f32 %v685, %v654
  %v687 = vmul.f32 %v686, %v685
  %v688 = vmul.f32 0.5, %v687
  %v689 = vsub.f32 1.5, %v688
  %v690 = vmul.f32 %v685, %v689
  %vm691 = vweird.f32 %v654
  %vm692 = vweird.f32 %v685
  %vm693 = vmor %vm691, %vm692
  %v694 = vsel %vm693, %v685, %v690
  %v695 = vmul.f32 %v647, %v664
  %v696 = vmul.f32 %v648, %v674
  %v697 = vmul.f32 %v649, %v684
  %v698 = vmul.f32 %v650, %v694
  %700 = vset.pattern.permute.xlu0 0
  %701 = vperm.xlu0 %700, %v579
  %v702 = vpop.permute.xlu0 %701
  %705 = vset.pattern.permute.xlu0 0
  %706 = vperm.xlu0 %705, %v580
  %v707 = vpop.permute.xlu0 %706
  %710 = vset.pattern.permute.xlu0 0
  %711 = vperm.xlu0 %710, %v581
  %v712 = vpop.permute.xlu0 %711
  %715 = vset.pattern.permute.xlu0 0
  %716 = vperm.xlu0 %715, %v582
  %v717 = vpop.permute.xlu0 %716
  %v719 = vadd.f32 %v695, %v702
  %v720 = vadd.f32 %v696, %v707
  %v721 = vadd.f32 %v697, %v712
  %v722 = vadd.f32 %v698, %v717
  %v723 = vmax.f32 %v719, 0.0
  %v724 = vmax.f32 %v720, 0.0
  %v725 = vmax.f32 %v721, 0.0
  %v726 = vmax.f32 %v722, 0.0
  %v727 = vld [vmem:[%s8] sm:$0xff]
  %v728 = vld [vmem:[%s8 + $0x8] sm:$0xf]
  %v729 = vld [vmem:[%s8 + $0xc] sm:$0xff]
  %v730 = vld [vmem:[%s8 + $0x14] sm:$0xf]
  %v731 = vld [vmem:[%s8 + $0x18] sm:$0xff]
  %v732 = vld [vmem:[%s8 + $0x20] sm:$0xf]
  %v733 = vld [vmem:[%s8 + $0x24] sm:$0xff]
  %v734 = vld [vmem:[%s8 + $0x2c] sm:$0xf]
  %735 = vrot.lane.b32.xlu0 %v723, 9
  %v736 = vpop.permute.xlu0 %735
  %737 = vrot.lane.b32.xlu0 %v724, 9
  %v738 = vpop.permute.xlu0 %737
  %739 = vrot.lane.b32.xlu0 %v725, 9
  %v740 = vpop.permute.xlu0 %739
  %741 = vrot.lane.b32.xlu0 %v726, 9
  %v742 = vpop.permute.xlu0 %741
  %v743 = vmul.f32 %v736, %v93
  %v744 = vmul.f32 %v738, %v93
  %v745 = vmul.f32 %v740, %v93
  %v746 = vmul.f32 %v742, %v93
  %747 = vrot.lane.b32.xlu0 %v723, 8
  %v748 = vpop.permute.xlu0 %747
  %749 = vrot.lane.b32.xlu0 %v724, 8
  %v750 = vpop.permute.xlu0 %749
  %751 = vrot.lane.b32.xlu0 %v725, 8
  %v752 = vpop.permute.xlu0 %751
  %753 = vrot.lane.b32.xlu0 %v726, 8
  %v754 = vpop.permute.xlu0 %753
  %v755 = vmul.f32 %v748, %v101
  %v756 = vmul.f32 %v750, %v101
  %v757 = vmul.f32 %v752, %v101
  %v758 = vmul.f32 %v754, %v101
  %759 = vrot.lane.b32.xlu0 %v723, 7
  %v760 = vpop.permute.xlu0 %759
  %761 = vrot.lane.b32.xlu0 %v724, 7
  %v762 = vpop.permute.xlu0 %761
  %763 = vrot.lane.b32.xlu0 %v725, 7
  %v764 = vpop.permute.xlu0 %763
  %765 = vrot.lane.b32.xlu0 %v726, 7
  %v766 = vpop.permute.xlu0 %765
  %v767 = vmul.f32 %v760, %v109
  %v768 = vmul.f32 %v762, %v109
  %v769 = vmul.f32 %v764, %v109
  %v770 = vmul.f32 %v766, %v109
  %771 = vrot.lane.b32.xlu0 %v723, 1
  %v772 = vpop.permute.xlu0 %771
  %773 = vrot.lane.b32.xlu0 %v724, 1
  %v774 = vpop.permute.xlu0 %773
  %775 = vrot.lane.b32.xlu0 %v725, 1
  %v776 = vpop.permute.xlu0 %775
  %777 = vrot.lane.b32.xlu0 %v726, 1
  %v778 = vpop.permute.xlu0 %777
  %v779 = vmul.f32 %v772, %v117
  %v780 = vmul.f32 %v774, %v117
  %v781 = vmul.f32 %v776, %v117
  %v782 = vmul.f32 %v778, %v117
  %v783 = vmul.f32 %v723, %v123
  %v784 = vmul.f32 %v724, %v123
  %v785 = vmul.f32 %v725, %v123
  %v786 = vmul.f32 %v726, %v123
  %787 = vrot.lane.b32.xlu0 %v723, 127
  %v788 = vpop.permute.xlu0 %787
  %789 = vrot.lane.b32.xlu0 %v724, 127
  %v790 = vpop.permute.xlu0 %789
  %791 = vrot.lane.b32.xlu0 %v725, 127
  %v792 = vpop.permute.xlu0 %791
  %793 = vrot.lane.b32.xlu0 %v726, 127
  %v794 = vpop.permute.xlu0 %793
  %v795 = vmul.f32 %v788, %v131
  %v796 = vmul.f32 %v790, %v131
  %v797 = vmul.f32 %v792, %v131
  %v798 = vmul.f32 %v794, %v131
  %799 = vrot.lane.b32.xlu0 %v723, 121
  %v800 = vpop.permute.xlu0 %799
  %801 = vrot.lane.b32.xlu0 %v724, 121
  %v802 = vpop.permute.xlu0 %801
  %803 = vrot.lane.b32.xlu0 %v725, 121
  %v804 = vpop.permute.xlu0 %803
  %805 = vrot.lane.b32.xlu0 %v726, 121
  %v806 = vpop.permute.xlu0 %805
  %v807 = vmul.f32 %v800, %v139
  %v808 = vmul.f32 %v802, %v139
  %v809 = vmul.f32 %v804, %v139
  %v810 = vmul.f32 %v806, %v139
  %811 = vrot.lane.b32.xlu0 %v723, 120
  %v812 = vpop.permute.xlu0 %811
  %813 = vrot.lane.b32.xlu0 %v724, 120
  %v814 = vpop.permute.xlu0 %813
  %815 = vrot.lane.b32.xlu0 %v725, 120
  %v816 = vpop.permute.xlu0 %815
  %817 = vrot.lane.b32.xlu0 %v726, 120
  %v818 = vpop.permute.xlu0 %817
  %v819 = vmul.f32 %v812, %v147
  %v820 = vmul.f32 %v814, %v147
  %v821 = vmul.f32 %v816, %v147
  %v822 = vmul.f32 %v818, %v147
  %823 = vrot.lane.b32.xlu0 %v723, 119
  %v824 = vpop.permute.xlu0 %823
  %825 = vrot.lane.b32.xlu0 %v724, 119
  %v826 = vpop.permute.xlu0 %825
  %827 = vrot.lane.b32.xlu0 %v725, 119
  %v828 = vpop.permute.xlu0 %827
  %829 = vrot.lane.b32.xlu0 %v726, 119
  %v830 = vpop.permute.xlu0 %829
  %v831 = vmul.f32 %v824, %v155
  %v832 = vmul.f32 %v826, %v155
  %v833 = vmul.f32 %v828, %v155
  %v834 = vmul.f32 %v830, %v155
  %v835 = vpack.c.bf16 %v744, %v743
  %v836 = vpack.c.bf16 %v746, %v745
  %v837 = vpack.c.bf16 %v756, %v755
  %v838 = vpack.c.bf16 %v758, %v757
  %v839 = vpack.c.bf16 %v768, %v767
  %v840 = vpack.c.bf16 %v770, %v769
  %v841 = vpack.c.bf16 %v780, %v779
  %v842 = vpack.c.bf16 %v782, %v781
  %v843 = vpack.c.bf16 %v784, %v783
  %v844 = vpack.c.bf16 %v786, %v785
  %v845 = vpack.c.bf16 %v796, %v795
  %v846 = vpack.c.bf16 %v798, %v797
  %v847 = vpack.c.bf16 %v808, %v807
  %v848 = vpack.c.bf16 %v810, %v809
  %v849 = vpack.c.bf16 %v820, %v819
  %v850 = vpack.c.bf16 %v822, %v821
  %v851 = vpack.c.bf16 %v832, %v831
  %v852 = vpack.c.bf16 %v834, %v833
  %v861 = vunpack.c.l.b16 %v727
  %v862 = vunpack.c.h.b16 %v727
  %v863 = vunpack.c.l.b16 %v728
  %v864 = vunpack.c.l.b16 %v729
  %v865 = vunpack.c.h.b16 %v729
  %v866 = vunpack.c.l.b16 %v730
  %v867 = vunpack.c.l.b16 %v731
  %v868 = vunpack.c.h.b16 %v731
  %v869 = vunpack.c.l.b16 %v732
  %v870 = vunpack.c.l.b16 %v733
  %v871 = vunpack.c.h.b16 %v733
  %v872 = vunpack.c.l.b16 %v734
  %v873 = vpack.c.b16 %v864, %v861
  %v874 = vpack.c.b16 %v865, %v862
  %v875 = vpack.c.b16 %v866, %v863
  %v876 = vpack.c.b16 %v870, %v867
  %v877 = vpack.c.b16 %v871, %v868
  %v878 = vpack.c.b16 %v872, %v869
  %v884 = vsel %vm511, %v875, 0
  %v887 = vsel %vm511, %v878, 0
  %889 = vmatpush.bf16.msra.mxu0 %v842
  %890 = vmatpush.bf16.msra.mxu0 %v841
  %891 = vmatpush.bf16.msra.mxu0 %v840
  %892 = vmatpush.bf16.msra.mxu0 %v839
  %893 = vmatpush.bf16.msra.mxu0 %v838
  %894 = vmatpush.bf16.msra.mxu0 %v837
  %895 = vmatpush.bf16.msra.mxu0 %v836
  %896 = vmatpush.bf16.msra.mxu0 %v835
  %897 = vmatmul.bf16.gmra.mxu0 %v873
  %v898 = vpop.f32.mrf.mxu0
  %v899 = vadd.f32 0.0, %v898
  %v900 = vpop.f32.mrf.mxu0
  %v901 = vadd.f32 0.0, %v900
  %902 = vmatmul.bf16.gmra.mxu0 %v876
  %v903 = vpop.f32.mrf.mxu0
  %v904 = vadd.f32 0.0, %v903
  %v905 = vpop.f32.mrf.mxu0
  %v906 = vadd.f32 0.0, %v905
  %907 = vdwg.mxu0
  %908 = vmatpush.bf16.msra.mxu0 %v850
  %909 = vmatpush.bf16.msra.mxu0 %v849
  %910 = vmatpush.bf16.msra.mxu0 %v848
  %911 = vmatpush.bf16.msra.mxu0 %v847
  %912 = vmatpush.bf16.msra.mxu0 %v846
  %913 = vmatpush.bf16.msra.mxu0 %v845
  %914 = vmatpush.bf16.msra.mxu0 %v844
  %915 = vmatpush.bf16.msra.mxu0 %v843
  %916 = vmatmul.bf16.gmra.mxu0 %v874
  %v917 = vpop.f32.mrf.mxu0
  %v918 = vadd.f32 %v899, %v917
  %v919 = vpop.f32.mrf.mxu0
  %v920 = vadd.f32 %v901, %v919
  %921 = vmatmul.bf16.gmra.mxu0 %v877
  %v922 = vpop.f32.mrf.mxu0
  %v923 = vadd.f32 %v904, %v922
  %v924 = vpop.f32.mrf.mxu0
  %v925 = vadd.f32 %v906, %v924
  %926 = vdwg.mxu0
  %927 = vmatpush.bf16.msra.mxu0 0
  %928 = vmatpush.bf16.msra.mxu0 0
  %929 = vmatpush.bf16.msra.mxu0 0
  %930 = vmatpush.bf16.msra.mxu0 0
  %931 = vmatpush.bf16.msra.mxu0 0
  %932 = vmatpush.bf16.msra.mxu0 0
  %933 = vmatpush.bf16.msra.mxu0 %v852
  %934 = vmatpush.bf16.msra.mxu0 %v851
  %935 = vmatmul.bf16.gmra.mxu0 %v884
  %v936 = vpop.f32.mrf.mxu0
  %v937 = vadd.f32 %v918, %v936
  %v938 = vpop.f32.mrf.mxu0
  %v939 = vadd.f32 %v920, %v938
  %940 = vmatmul.bf16.gmra.mxu0 %v887
  %v941 = vpop.f32.mrf.mxu0
  %v942 = vadd.f32 %v923, %v941
  %v943 = vpop.f32.mrf.mxu0
  %v944 = vadd.f32 %v925, %v943
  %945 = vdwg.mxu0
  %v946 = vld [vmem:[%s9] sm:$0xff]
  %v947 = vld [vmem:[%s9 + $0x8] sm:$0xff]
  %v948 = vld [vmem:[%s9 + $0x10] sm:$0xff]
  %v949 = vld [vmem:[%s9 + $0x18] sm:$0xff]
  %v950 = vld [vmem:[%s10] sm:$0xff]
  %v951 = vld [vmem:[%s10 + $0x8] sm:$0xff]
  %v952 = vld [vmem:[%s10 + $0x10] sm:$0xff]
  %v953 = vld [vmem:[%s10 + $0x18] sm:$0xff]
  %954 = vadd.xlane.f32.xlu0 %v937
  %v955 = vpop.xlane.xlu0 %954
  %956 = vadd.xlane.f32.xlu0 %v939
  %v957 = vpop.xlane.xlu0 %956
  %958 = vadd.xlane.f32.xlu0 %v942
  %v959 = vpop.xlane.xlu0 %958
  %960 = vadd.xlane.f32.xlu0 %v944
  %v961 = vpop.xlane.xlu0 %960
  %v962 = vmul.f32 %v955, 0.0078125
  %v963 = vmul.f32 %v957, 0.0078125
  %v964 = vmul.f32 %v959, 0.0078125
  %v965 = vmul.f32 %v961, 0.0078125
  %v966 = vmul.f32 %v937, %v937
  %v967 = vmul.f32 %v939, %v939
  %v968 = vmul.f32 %v942, %v942
  %v969 = vmul.f32 %v944, %v944
  %970 = vadd.xlane.f32.xlu0 %v966
  %v971 = vpop.xlane.xlu0 %970
  %972 = vadd.xlane.f32.xlu0 %v967
  %v973 = vpop.xlane.xlu0 %972
  %974 = vadd.xlane.f32.xlu0 %v968
  %v975 = vpop.xlane.xlu0 %974
  %976 = vadd.xlane.f32.xlu0 %v969
  %v977 = vpop.xlane.xlu0 %976
  %v978 = vmul.f32 %v971, 0.0078125
  %v979 = vmul.f32 %v973, 0.0078125
  %v980 = vmul.f32 %v975, 0.0078125
  %v981 = vmul.f32 %v977, 0.0078125
  %v982 = vmul.f32 %v962, %v962
  %v983 = vmul.f32 %v963, %v963
  %v984 = vmul.f32 %v964, %v964
  %v985 = vmul.f32 %v965, %v965
  %v986 = vsub.f32 %v978, %v982
  %v987 = vsub.f32 %v979, %v983
  %v988 = vsub.f32 %v980, %v984
  %v989 = vsub.f32 %v981, %v985
  %v990 = vmax.f32 %v986, 0.0
  %v991 = vmax.f32 %v987, 0.0
  %v992 = vmax.f32 %v988, 0.0
  %v993 = vmax.f32 %v989, 0.0
  %v994 = vsub.f32 %v937, %v962
  %v995 = vsub.f32 %v939, %v963
  %v996 = vsub.f32 %v942, %v964
  %v997 = vsub.f32 %v944, %v965
  %999 = vset.pattern.permute.xlu0 0
  %1000 = vperm.xlu0 %999, %v946
  %v1001 = vpop.permute.xlu0 %1000
  %1004 = vset.pattern.permute.xlu0 0
  %1005 = vperm.xlu0 %1004, %v947
  %v1006 = vpop.permute.xlu0 %1005
  %1009 = vset.pattern.permute.xlu0 0
  %1010 = vperm.xlu0 %1009, %v948
  %v1011 = vpop.permute.xlu0 %1010
  %1014 = vset.pattern.permute.xlu0 0
  %1015 = vperm.xlu0 %1014, %v949
  %v1016 = vpop.permute.xlu0 %1015
  %v1018 = vmul.f32 %v1001, %v994
  %v1019 = vmul.f32 %v1006, %v995
  %v1020 = vmul.f32 %v1011, %v996
  %v1021 = vmul.f32 %v1016, %v997
  %v1022 = vadd.f32 %v990, 1e-05
  %v1023 = vadd.f32 %v991, 1e-05
  %v1024 = vadd.f32 %v992, 1e-05
  %v1025 = vadd.f32 %v993, 1e-05
  %v1026 = vrsqrt.pop %v1022
  %v1027 = vmul.f32 %v1026, %v1022
  %v1028 = vmul.f32 %v1027, %v1026
  %v1029 = vmul.f32 0.5, %v1028
  %v1030 = vsub.f32 1.5, %v1029
  %v1031 = vmul.f32 %v1026, %v1030
  %vm1032 = vweird.f32 %v1022
  %vm1033 = vweird.f32 %v1026
  %vm1034 = vmor %vm1032, %vm1033
  %v1035 = vsel %vm1034, %v1026, %v1031
  %v1036 = vrsqrt.pop %v1023
  %v1037 = vmul.f32 %v1036, %v1023
  %v1038 = vmul.f32 %v1037, %v1036
  %v1039 = vmul.f32 0.5, %v1038
  %v1040 = vsub.f32 1.5, %v1039
  %v1041 = vmul.f32 %v1036, %v1040
  %vm1042 = vweird.f32 %v1023
  %vm1043 = vweird.f32 %v1036
  %vm1044 = vmor %vm1042, %vm1043
  %v1045 = vsel %vm1044, %v1036, %v1041
  %v1046 = vrsqrt.pop %v1024
  %v1047 = vmul.f32 %v1046, %v1024
  %v1048 = vmul.f32 %v1047, %v1046
  %v1049 = vmul.f32 0.5, %v1048
  %v1050 = vsub.f32 1.5, %v1049
  %v1051 = vmul.f32 %v1046, %v1050
  %vm1052 = vweird.f32 %v1024
  %vm1053 = vweird.f32 %v1046
  %vm1054 = vmor %vm1052, %vm1053
  %v1055 = vsel %vm1054, %v1046, %v1051
  %v1056 = vrsqrt.pop %v1025
  %v1057 = vmul.f32 %v1056, %v1025
  %v1058 = vmul.f32 %v1057, %v1056
  %v1059 = vmul.f32 0.5, %v1058
  %v1060 = vsub.f32 1.5, %v1059
  %v1061 = vmul.f32 %v1056, %v1060
  %vm1062 = vweird.f32 %v1025
  %vm1063 = vweird.f32 %v1056
  %vm1064 = vmor %vm1062, %vm1063
  %v1065 = vsel %vm1064, %v1056, %v1061
  %v1066 = vmul.f32 %v1018, %v1035
  %v1067 = vmul.f32 %v1019, %v1045
  %v1068 = vmul.f32 %v1020, %v1055
  %v1069 = vmul.f32 %v1021, %v1065
  %1071 = vset.pattern.permute.xlu0 0
  %1072 = vperm.xlu0 %1071, %v950
  %v1073 = vpop.permute.xlu0 %1072
  %1076 = vset.pattern.permute.xlu0 0
  %1077 = vperm.xlu0 %1076, %v951
  %v1078 = vpop.permute.xlu0 %1077
  %1081 = vset.pattern.permute.xlu0 0
  %1082 = vperm.xlu0 %1081, %v952
  %v1083 = vpop.permute.xlu0 %1082
  %1086 = vset.pattern.permute.xlu0 0
  %1087 = vperm.xlu0 %1086, %v953
  %v1088 = vpop.permute.xlu0 %1087
  %v1090 = vadd.f32 %v1066, %v1073
  %v1091 = vadd.f32 %v1067, %v1078
  %v1092 = vadd.f32 %v1068, %v1083
  %v1093 = vadd.f32 %v1069, %v1088
  %v1094 = vadd.f32 %v1090, %v351
  %v1095 = vadd.f32 %v1091, %v352
  %v1096 = vadd.f32 %v1092, %v353
  %v1097 = vadd.f32 %v1093, %v354
  %v1098 = vld [vmem:[%s11] sm:$0xff]
  %v1099 = vld [vmem:[%s11 + $0x8] sm:$0xf]
  %v1100 = vld [vmem:[%s11 + $0xc] sm:$0xff]
  %v1101 = vld [vmem:[%s11 + $0x14] sm:$0xf]
  %v1102 = vld [vmem:[%s11 + $0x18] sm:$0xff]
  %v1103 = vld [vmem:[%s11 + $0x20] sm:$0xf]
  %v1104 = vld [vmem:[%s11 + $0x24] sm:$0xff]
  %v1105 = vld [vmem:[%s11 + $0x2c] sm:$0xf]
  %1106 = vrot.lane.b32.xlu0 %v1094, 9
  %v1107 = vpop.permute.xlu0 %1106
  %1108 = vrot.lane.b32.xlu0 %v1095, 9
  %v1109 = vpop.permute.xlu0 %1108
  %1110 = vrot.lane.b32.xlu0 %v1096, 9
  %v1111 = vpop.permute.xlu0 %1110
  %1112 = vrot.lane.b32.xlu0 %v1097, 9
  %v1113 = vpop.permute.xlu0 %1112
  %v1114 = vmul.f32 %v1107, %v93
  %v1115 = vmul.f32 %v1109, %v93
  %v1116 = vmul.f32 %v1111, %v93
  %v1117 = vmul.f32 %v1113, %v93
  %1118 = vrot.lane.b32.xlu0 %v1094, 8
  %v1119 = vpop.permute.xlu0 %1118
  %1120 = vrot.lane.b32.xlu0 %v1095, 8
  %v1121 = vpop.permute.xlu0 %1120
  %1122 = vrot.lane.b32.xlu0 %v1096, 8
  %v1123 = vpop.permute.xlu0 %1122
  %1124 = vrot.lane.b32.xlu0 %v1097, 8
  %v1125 = vpop.permute.xlu0 %1124
  %v1126 = vmul.f32 %v1119, %v101
  %v1127 = vmul.f32 %v1121, %v101
  %v1128 = vmul.f32 %v1123, %v101
  %v1129 = vmul.f32 %v1125, %v101
  %1130 = vrot.lane.b32.xlu0 %v1094, 7
  %v1131 = vpop.permute.xlu0 %1130
  %1132 = vrot.lane.b32.xlu0 %v1095, 7
  %v1133 = vpop.permute.xlu0 %1132
  %1134 = vrot.lane.b32.xlu0 %v1096, 7
  %v1135 = vpop.permute.xlu0 %1134
  %1136 = vrot.lane.b32.xlu0 %v1097, 7
  %v1137 = vpop.permute.xlu0 %1136
  %v1138 = vmul.f32 %v1131, %v109
  %v1139 = vmul.f32 %v1133, %v109
  %v1140 = vmul.f32 %v1135, %v109
  %v1141 = vmul.f32 %v1137, %v109
  %1142 = vrot.lane.b32.xlu0 %v1094, 1
  %v1143 = vpop.permute.xlu0 %1142
  %1144 = vrot.lane.b32.xlu0 %v1095, 1
  %v1145 = vpop.permute.xlu0 %1144
  %1146 = vrot.lane.b32.xlu0 %v1096, 1
  %v1147 = vpop.permute.xlu0 %1146
  %1148 = vrot.lane.b32.xlu0 %v1097, 1
  %v1149 = vpop.permute.xlu0 %1148
  %v1150 = vmul.f32 %v1143, %v117
  %v1151 = vmul.f32 %v1145, %v117
  %v1152 = vmul.f32 %v1147, %v117
  %v1153 = vmul.f32 %v1149, %v117
  %v1154 = vmul.f32 %v1094, %v123
  %v1155 = vmul.f32 %v1095, %v123
  %v1156 = vmul.f32 %v1096, %v123
  %v1157 = vmul.f32 %v1097, %v123
  %1158 = vrot.lane.b32.xlu0 %v1094, 127
  %v1159 = vpop.permute.xlu0 %1158
  %1160 = vrot.lane.b32.xlu0 %v1095, 127
  %v1161 = vpop.permute.xlu0 %1160
  %1162 = vrot.lane.b32.xlu0 %v1096, 127
  %v1163 = vpop.permute.xlu0 %1162
  %1164 = vrot.lane.b32.xlu0 %v1097, 127
  %v1165 = vpop.permute.xlu0 %1164
  %v1166 = vmul.f32 %v1159, %v131
  %v1167 = vmul.f32 %v1161, %v131
  %v1168 = vmul.f32 %v1163, %v131
  %v1169 = vmul.f32 %v1165, %v131
  %1170 = vrot.lane.b32.xlu0 %v1094, 121
  %v1171 = vpop.permute.xlu0 %1170
  %1172 = vrot.lane.b32.xlu0 %v1095, 121
  %v1173 = vpop.permute.xlu0 %1172
  %1174 = vrot.lane.b32.xlu0 %v1096, 121
  %v1175 = vpop.permute.xlu0 %1174
  %1176 = vrot.lane.b32.xlu0 %v1097, 121
  %v1177 = vpop.permute.xlu0 %1176
  %v1178 = vmul.f32 %v1171, %v139
  %v1179 = vmul.f32 %v1173, %v139
  %v1180 = vmul.f32 %v1175, %v139
  %v1181 = vmul.f32 %v1177, %v139
  %1182 = vrot.lane.b32.xlu0 %v1094, 120
  %v1183 = vpop.permute.xlu0 %1182
  %1184 = vrot.lane.b32.xlu0 %v1095, 120
  %v1185 = vpop.permute.xlu0 %1184
  %1186 = vrot.lane.b32.xlu0 %v1096, 120
  %v1187 = vpop.permute.xlu0 %1186
  %1188 = vrot.lane.b32.xlu0 %v1097, 120
  %v1189 = vpop.permute.xlu0 %1188
  %v1190 = vmul.f32 %v1183, %v147
  %v1191 = vmul.f32 %v1185, %v147
  %v1192 = vmul.f32 %v1187, %v147
  %v1193 = vmul.f32 %v1189, %v147
  %1194 = vrot.lane.b32.xlu0 %v1094, 119
  %v1195 = vpop.permute.xlu0 %1194
  %1196 = vrot.lane.b32.xlu0 %v1095, 119
  %v1197 = vpop.permute.xlu0 %1196
  %1198 = vrot.lane.b32.xlu0 %v1096, 119
  %v1199 = vpop.permute.xlu0 %1198
  %1200 = vrot.lane.b32.xlu0 %v1097, 119
  %v1201 = vpop.permute.xlu0 %1200
  %v1202 = vmul.f32 %v1195, %v155
  %v1203 = vmul.f32 %v1197, %v155
  %v1204 = vmul.f32 %v1199, %v155
  %v1205 = vmul.f32 %v1201, %v155
  %v1206 = vpack.c.bf16 %v1115, %v1114
  %v1207 = vpack.c.bf16 %v1117, %v1116
  %v1208 = vpack.c.bf16 %v1127, %v1126
  %v1209 = vpack.c.bf16 %v1129, %v1128
  %v1210 = vpack.c.bf16 %v1139, %v1138
  %v1211 = vpack.c.bf16 %v1141, %v1140
  %v1212 = vpack.c.bf16 %v1151, %v1150
  %v1213 = vpack.c.bf16 %v1153, %v1152
  %v1214 = vpack.c.bf16 %v1155, %v1154
  %v1215 = vpack.c.bf16 %v1157, %v1156
  %v1216 = vpack.c.bf16 %v1167, %v1166
  %v1217 = vpack.c.bf16 %v1169, %v1168
  %v1218 = vpack.c.bf16 %v1179, %v1178
  %v1219 = vpack.c.bf16 %v1181, %v1180
  %v1220 = vpack.c.bf16 %v1191, %v1190
  %v1221 = vpack.c.bf16 %v1193, %v1192
  %v1222 = vpack.c.bf16 %v1203, %v1202
  %v1223 = vpack.c.bf16 %v1205, %v1204
  %v1232 = vunpack.c.l.b16 %v1098
  %v1233 = vunpack.c.h.b16 %v1098
  %v1234 = vunpack.c.l.b16 %v1099
  %v1235 = vunpack.c.l.b16 %v1100
  %v1236 = vunpack.c.h.b16 %v1100
  %v1237 = vunpack.c.l.b16 %v1101
  %v1238 = vunpack.c.l.b16 %v1102
  %v1239 = vunpack.c.h.b16 %v1102
  %v1240 = vunpack.c.l.b16 %v1103
  %v1241 = vunpack.c.l.b16 %v1104
  %v1242 = vunpack.c.h.b16 %v1104
  %v1243 = vunpack.c.l.b16 %v1105
  %v1244 = vpack.c.b16 %v1235, %v1232
  %v1245 = vpack.c.b16 %v1236, %v1233
  %v1246 = vpack.c.b16 %v1237, %v1234
  %v1247 = vpack.c.b16 %v1241, %v1238
  %v1248 = vpack.c.b16 %v1242, %v1239
  %v1249 = vpack.c.b16 %v1243, %v1240
  %v1255 = vsel %vm511, %v1246, 0
  %v1258 = vsel %vm511, %v1249, 0
  %1260 = vmatpush.bf16.msra.mxu0 %v1213
  %1261 = vmatpush.bf16.msra.mxu0 %v1212
  %1262 = vmatpush.bf16.msra.mxu0 %v1211
  %1263 = vmatpush.bf16.msra.mxu0 %v1210
  %1264 = vmatpush.bf16.msra.mxu0 %v1209
  %1265 = vmatpush.bf16.msra.mxu0 %v1208
  %1266 = vmatpush.bf16.msra.mxu0 %v1207
  %1267 = vmatpush.bf16.msra.mxu0 %v1206
  %1268 = vmatmul.bf16.gmra.mxu0 %v1244
  %v1269 = vpop.f32.mrf.mxu0
  %v1270 = vadd.f32 0.0, %v1269
  %v1271 = vpop.f32.mrf.mxu0
  %v1272 = vadd.f32 0.0, %v1271
  %1273 = vmatmul.bf16.gmra.mxu0 %v1247
  %v1274 = vpop.f32.mrf.mxu0
  %v1275 = vadd.f32 0.0, %v1274
  %v1276 = vpop.f32.mrf.mxu0
  %v1277 = vadd.f32 0.0, %v1276
  %1278 = vdwg.mxu0
  %1279 = vmatpush.bf16.msra.mxu0 %v1221
  %1280 = vmatpush.bf16.msra.mxu0 %v1220
  %1281 = vmatpush.bf16.msra.mxu0 %v1219
  %1282 = vmatpush.bf16.msra.mxu0 %v1218
  %1283 = vmatpush.bf16.msra.mxu0 %v1217
  %1284 = vmatpush.bf16.msra.mxu0 %v1216
  %1285 = vmatpush.bf16.msra.mxu0 %v1215
  %1286 = vmatpush.bf16.msra.mxu0 %v1214
  %1287 = vmatmul.bf16.gmra.mxu0 %v1245
  %v1288 = vpop.f32.mrf.mxu0
  %v1289 = vadd.f32 %v1270, %v1288
  %v1290 = vpop.f32.mrf.mxu0
  %v1291 = vadd.f32 %v1272, %v1290
  %1292 = vmatmul.bf16.gmra.mxu0 %v1248
  %v1293 = vpop.f32.mrf.mxu0
  %v1294 = vadd.f32 %v1275, %v1293
  %v1295 = vpop.f32.mrf.mxu0
  %v1296 = vadd.f32 %v1277, %v1295
  %1297 = vdwg.mxu0
  %1298 = vmatpush.bf16.msra.mxu0 0
  %1299 = vmatpush.bf16.msra.mxu0 0
  %1300 = vmatpush.bf16.msra.mxu0 0
  %1301 = vmatpush.bf16.msra.mxu0 0
  %1302 = vmatpush.bf16.msra.mxu0 0
  %1303 = vmatpush.bf16.msra.mxu0 0
  %1304 = vmatpush.bf16.msra.mxu0 %v1223
  %1305 = vmatpush.bf16.msra.mxu0 %v1222
  %1306 = vmatmul.bf16.gmra.mxu0 %v1255
  %v1307 = vpop.f32.mrf.mxu0
  %v1308 = vadd.f32 %v1289, %v1307
  %v1309 = vpop.f32.mrf.mxu0
  %v1310 = vadd.f32 %v1291, %v1309
  %1311 = vmatmul.bf16.gmra.mxu0 %v1258
  %v1312 = vpop.f32.mrf.mxu0
  %v1313 = vadd.f32 %v1294, %v1312
  %v1314 = vpop.f32.mrf.mxu0
  %v1315 = vadd.f32 %v1296, %v1314
  %1316 = vdwg.mxu0
  %v1317 = vld [vmem:[%s12] sm:$0xff]
  %v1318 = vld [vmem:[%s12 + $0x8] sm:$0xff]
  %v1319 = vld [vmem:[%s12 + $0x10] sm:$0xff]
  %v1320 = vld [vmem:[%s12 + $0x18] sm:$0xff]
  %v1321 = vld [vmem:[%s13] sm:$0xff]
  %v1322 = vld [vmem:[%s13 + $0x8] sm:$0xff]
  %v1323 = vld [vmem:[%s13 + $0x10] sm:$0xff]
  %v1324 = vld [vmem:[%s13 + $0x18] sm:$0xff]
  %1325 = vadd.xlane.f32.xlu0 %v1308
  %v1326 = vpop.xlane.xlu0 %1325
  %1327 = vadd.xlane.f32.xlu0 %v1310
  %v1328 = vpop.xlane.xlu0 %1327
  %1329 = vadd.xlane.f32.xlu0 %v1313
  %v1330 = vpop.xlane.xlu0 %1329
  %1331 = vadd.xlane.f32.xlu0 %v1315
  %v1332 = vpop.xlane.xlu0 %1331
  %v1333 = vmul.f32 %v1326, 0.0078125
  %v1334 = vmul.f32 %v1328, 0.0078125
  %v1335 = vmul.f32 %v1330, 0.0078125
  %v1336 = vmul.f32 %v1332, 0.0078125
  %v1337 = vmul.f32 %v1308, %v1308
  %v1338 = vmul.f32 %v1310, %v1310
  %v1339 = vmul.f32 %v1313, %v1313
  %v1340 = vmul.f32 %v1315, %v1315
  %1341 = vadd.xlane.f32.xlu0 %v1337
  %v1342 = vpop.xlane.xlu0 %1341
  %1343 = vadd.xlane.f32.xlu0 %v1338
  %v1344 = vpop.xlane.xlu0 %1343
  %1345 = vadd.xlane.f32.xlu0 %v1339
  %v1346 = vpop.xlane.xlu0 %1345
  %1347 = vadd.xlane.f32.xlu0 %v1340
  %v1348 = vpop.xlane.xlu0 %1347
  %v1349 = vmul.f32 %v1342, 0.0078125
  %v1350 = vmul.f32 %v1344, 0.0078125
  %v1351 = vmul.f32 %v1346, 0.0078125
  %v1352 = vmul.f32 %v1348, 0.0078125
  %v1353 = vmul.f32 %v1333, %v1333
  %v1354 = vmul.f32 %v1334, %v1334
  %v1355 = vmul.f32 %v1335, %v1335
  %v1356 = vmul.f32 %v1336, %v1336
  %v1357 = vsub.f32 %v1349, %v1353
  %v1358 = vsub.f32 %v1350, %v1354
  %v1359 = vsub.f32 %v1351, %v1355
  %v1360 = vsub.f32 %v1352, %v1356
  %v1361 = vmax.f32 %v1357, 0.0
  %v1362 = vmax.f32 %v1358, 0.0
  %v1363 = vmax.f32 %v1359, 0.0
  %v1364 = vmax.f32 %v1360, 0.0
  %v1365 = vsub.f32 %v1308, %v1333
  %v1366 = vsub.f32 %v1310, %v1334
  %v1367 = vsub.f32 %v1313, %v1335
  %v1368 = vsub.f32 %v1315, %v1336
  %1370 = vset.pattern.permute.xlu0 0
  %1371 = vperm.xlu0 %1370, %v1317
  %v1372 = vpop.permute.xlu0 %1371
  %1375 = vset.pattern.permute.xlu0 0
  %1376 = vperm.xlu0 %1375, %v1318
  %v1377 = vpop.permute.xlu0 %1376
  %1380 = vset.pattern.permute.xlu0 0
  %1381 = vperm.xlu0 %1380, %v1319
  %v1382 = vpop.permute.xlu0 %1381
  %1385 = vset.pattern.permute.xlu0 0
  %1386 = vperm.xlu0 %1385, %v1320
  %v1387 = vpop.permute.xlu0 %1386
  %v1389 = vmul.f32 %v1372, %v1365
  %v1390 = vmul.f32 %v1377, %v1366
  %v1391 = vmul.f32 %v1382, %v1367
  %v1392 = vmul.f32 %v1387, %v1368
  %v1393 = vadd.f32 %v1361, 1e-05
  %v1394 = vadd.f32 %v1362, 1e-05
  %v1395 = vadd.f32 %v1363, 1e-05
  %v1396 = vadd.f32 %v1364, 1e-05
  %v1397 = vrsqrt.pop %v1393
  %v1398 = vmul.f32 %v1397, %v1393
  %v1399 = vmul.f32 %v1398, %v1397
  %v1400 = vmul.f32 0.5, %v1399
  %v1401 = vsub.f32 1.5, %v1400
  %v1402 = vmul.f32 %v1397, %v1401
  %vm1403 = vweird.f32 %v1393
  %vm1404 = vweird.f32 %v1397
  %vm1405 = vmor %vm1403, %vm1404
  %v1406 = vsel %vm1405, %v1397, %v1402
  %v1407 = vrsqrt.pop %v1394
  %v1408 = vmul.f32 %v1407, %v1394
  %v1409 = vmul.f32 %v1408, %v1407
  %v1410 = vmul.f32 0.5, %v1409
  %v1411 = vsub.f32 1.5, %v1410
  %v1412 = vmul.f32 %v1407, %v1411
  %vm1413 = vweird.f32 %v1394
  %vm1414 = vweird.f32 %v1407
  %vm1415 = vmor %vm1413, %vm1414
  %v1416 = vsel %vm1415, %v1407, %v1412
  %v1417 = vrsqrt.pop %v1395
  %v1418 = vmul.f32 %v1417, %v1395
  %v1419 = vmul.f32 %v1418, %v1417
  %v1420 = vmul.f32 0.5, %v1419
  %v1421 = vsub.f32 1.5, %v1420
  %v1422 = vmul.f32 %v1417, %v1421
  %vm1423 = vweird.f32 %v1395
  %vm1424 = vweird.f32 %v1417
  %vm1425 = vmor %vm1423, %vm1424
  %v1426 = vsel %vm1425, %v1417, %v1422
  %v1427 = vrsqrt.pop %v1396
  %v1428 = vmul.f32 %v1427, %v1396
  %v1429 = vmul.f32 %v1428, %v1427
  %v1430 = vmul.f32 0.5, %v1429
  %v1431 = vsub.f32 1.5, %v1430
  %v1432 = vmul.f32 %v1427, %v1431
  %vm1433 = vweird.f32 %v1396
  %vm1434 = vweird.f32 %v1427
  %vm1435 = vmor %vm1433, %vm1434
  %v1436 = vsel %vm1435, %v1427, %v1432
  %v1437 = vmul.f32 %v1389, %v1406
  %v1438 = vmul.f32 %v1390, %v1416
  %v1439 = vmul.f32 %v1391, %v1426
  %v1440 = vmul.f32 %v1392, %v1436
  %1442 = vset.pattern.permute.xlu0 0
  %1443 = vperm.xlu0 %1442, %v1321
  %v1444 = vpop.permute.xlu0 %1443
  %1447 = vset.pattern.permute.xlu0 0
  %1448 = vperm.xlu0 %1447, %v1322
  %v1449 = vpop.permute.xlu0 %1448
  %1452 = vset.pattern.permute.xlu0 0
  %1453 = vperm.xlu0 %1452, %v1323
  %v1454 = vpop.permute.xlu0 %1453
  %1457 = vset.pattern.permute.xlu0 0
  %1458 = vperm.xlu0 %1457, %v1324
  %v1459 = vpop.permute.xlu0 %1458
  %v1461 = vadd.f32 %v1437, %v1444
  %v1462 = vadd.f32 %v1438, %v1449
  %v1463 = vadd.f32 %v1439, %v1454
  %v1464 = vadd.f32 %v1440, %v1459
  %v1465 = vmax.f32 %v1461, 0.0
  %v1466 = vmax.f32 %v1462, 0.0
  %v1467 = vmax.f32 %v1463, 0.0
  %v1468 = vmax.f32 %v1464, 0.0
  %v1469 = vld [vmem:[%s14] sm:$0xff]
  %v1470 = vld [vmem:[%s14 + $0x8] sm:$0xf]
  %v1471 = vld [vmem:[%s14 + $0xc] sm:$0xff]
  %v1472 = vld [vmem:[%s14 + $0x14] sm:$0xf]
  %v1473 = vld [vmem:[%s14 + $0x18] sm:$0xff]
  %v1474 = vld [vmem:[%s14 + $0x20] sm:$0xf]
  %v1475 = vld [vmem:[%s14 + $0x24] sm:$0xff]
  %v1476 = vld [vmem:[%s14 + $0x2c] sm:$0xf]
  %1477 = vrot.lane.b32.xlu0 %v1465, 9
  %v1478 = vpop.permute.xlu0 %1477
  %1479 = vrot.lane.b32.xlu0 %v1466, 9
  %v1480 = vpop.permute.xlu0 %1479
  %1481 = vrot.lane.b32.xlu0 %v1467, 9
  %v1482 = vpop.permute.xlu0 %1481
  %1483 = vrot.lane.b32.xlu0 %v1468, 9
  %v1484 = vpop.permute.xlu0 %1483
  %v1485 = vmul.f32 %v1478, %v93
  %v1486 = vmul.f32 %v1480, %v93
  %v1487 = vmul.f32 %v1482, %v93
  %v1488 = vmul.f32 %v1484, %v93
  %1489 = vrot.lane.b32.xlu0 %v1465, 8
  %v1490 = vpop.permute.xlu0 %1489
  %1491 = vrot.lane.b32.xlu0 %v1466, 8
  %v1492 = vpop.permute.xlu0 %1491
  %1493 = vrot.lane.b32.xlu0 %v1467, 8
  %v1494 = vpop.permute.xlu0 %1493
  %1495 = vrot.lane.b32.xlu0 %v1468, 8
  %v1496 = vpop.permute.xlu0 %1495
  %v1497 = vmul.f32 %v1490, %v101
  %v1498 = vmul.f32 %v1492, %v101
  %v1499 = vmul.f32 %v1494, %v101
  %v1500 = vmul.f32 %v1496, %v101
  %1501 = vrot.lane.b32.xlu0 %v1465, 7
  %v1502 = vpop.permute.xlu0 %1501
  %1503 = vrot.lane.b32.xlu0 %v1466, 7
  %v1504 = vpop.permute.xlu0 %1503
  %1505 = vrot.lane.b32.xlu0 %v1467, 7
  %v1506 = vpop.permute.xlu0 %1505
  %1507 = vrot.lane.b32.xlu0 %v1468, 7
  %v1508 = vpop.permute.xlu0 %1507
  %v1509 = vmul.f32 %v1502, %v109
  %v1510 = vmul.f32 %v1504, %v109
  %v1511 = vmul.f32 %v1506, %v109
  %v1512 = vmul.f32 %v1508, %v109
  %1513 = vrot.lane.b32.xlu0 %v1465, 1
  %v1514 = vpop.permute.xlu0 %1513
  %1515 = vrot.lane.b32.xlu0 %v1466, 1
  %v1516 = vpop.permute.xlu0 %1515
  %1517 = vrot.lane.b32.xlu0 %v1467, 1
  %v1518 = vpop.permute.xlu0 %1517
  %1519 = vrot.lane.b32.xlu0 %v1468, 1
  %v1520 = vpop.permute.xlu0 %1519
  %v1521 = vmul.f32 %v1514, %v117
  %v1522 = vmul.f32 %v1516, %v117
  %v1523 = vmul.f32 %v1518, %v117
  %v1524 = vmul.f32 %v1520, %v117
  %v1525 = vmul.f32 %v1465, %v123
  %v1526 = vmul.f32 %v1466, %v123
  %v1527 = vmul.f32 %v1467, %v123
  %v1528 = vmul.f32 %v1468, %v123
  %1529 = vrot.lane.b32.xlu0 %v1465, 127
  %v1530 = vpop.permute.xlu0 %1529
  %1531 = vrot.lane.b32.xlu0 %v1466, 127
  %v1532 = vpop.permute.xlu0 %1531
  %1533 = vrot.lane.b32.xlu0 %v1467, 127
  %v1534 = vpop.permute.xlu0 %1533
  %1535 = vrot.lane.b32.xlu0 %v1468, 127
  %v1536 = vpop.permute.xlu0 %1535
  %v1537 = vmul.f32 %v1530, %v131
  %v1538 = vmul.f32 %v1532, %v131
  %v1539 = vmul.f32 %v1534, %v131
  %v1540 = vmul.f32 %v1536, %v131
  %1541 = vrot.lane.b32.xlu0 %v1465, 121
  %v1542 = vpop.permute.xlu0 %1541
  %1543 = vrot.lane.b32.xlu0 %v1466, 121
  %v1544 = vpop.permute.xlu0 %1543
  %1545 = vrot.lane.b32.xlu0 %v1467, 121
  %v1546 = vpop.permute.xlu0 %1545
  %1547 = vrot.lane.b32.xlu0 %v1468, 121
  %v1548 = vpop.permute.xlu0 %1547
  %v1549 = vmul.f32 %v1542, %v139
  %v1550 = vmul.f32 %v1544, %v139
  %v1551 = vmul.f32 %v1546, %v139
  %v1552 = vmul.f32 %v1548, %v139
  %1553 = vrot.lane.b32.xlu0 %v1465, 120
  %v1554 = vpop.permute.xlu0 %1553
  %1555 = vrot.lane.b32.xlu0 %v1466, 120
  %v1556 = vpop.permute.xlu0 %1555
  %1557 = vrot.lane.b32.xlu0 %v1467, 120
  %v1558 = vpop.permute.xlu0 %1557
  %1559 = vrot.lane.b32.xlu0 %v1468, 120
  %v1560 = vpop.permute.xlu0 %1559
  %v1561 = vmul.f32 %v1554, %v147
  %v1562 = vmul.f32 %v1556, %v147
  %v1563 = vmul.f32 %v1558, %v147
  %v1564 = vmul.f32 %v1560, %v147
  %1565 = vrot.lane.b32.xlu0 %v1465, 119
  %v1566 = vpop.permute.xlu0 %1565
  %1567 = vrot.lane.b32.xlu0 %v1466, 119
  %v1568 = vpop.permute.xlu0 %1567
  %1569 = vrot.lane.b32.xlu0 %v1467, 119
  %v1570 = vpop.permute.xlu0 %1569
  %1571 = vrot.lane.b32.xlu0 %v1468, 119
  %v1572 = vpop.permute.xlu0 %1571
  %v1573 = vmul.f32 %v1566, %v155
  %v1574 = vmul.f32 %v1568, %v155
  %v1575 = vmul.f32 %v1570, %v155
  %v1576 = vmul.f32 %v1572, %v155
  %v1577 = vpack.c.bf16 %v1486, %v1485
  %v1578 = vpack.c.bf16 %v1488, %v1487
  %v1579 = vpack.c.bf16 %v1498, %v1497
  %v1580 = vpack.c.bf16 %v1500, %v1499
  %v1581 = vpack.c.bf16 %v1510, %v1509
  %v1582 = vpack.c.bf16 %v1512, %v1511
  %v1583 = vpack.c.bf16 %v1522, %v1521
  %v1584 = vpack.c.bf16 %v1524, %v1523
  %v1585 = vpack.c.bf16 %v1526, %v1525
  %v1586 = vpack.c.bf16 %v1528, %v1527
  %v1587 = vpack.c.bf16 %v1538, %v1537
  %v1588 = vpack.c.bf16 %v1540, %v1539
  %v1589 = vpack.c.bf16 %v1550, %v1549
  %v1590 = vpack.c.bf16 %v1552, %v1551
  %v1591 = vpack.c.bf16 %v1562, %v1561
  %v1592 = vpack.c.bf16 %v1564, %v1563
  %v1593 = vpack.c.bf16 %v1574, %v1573
  %v1594 = vpack.c.bf16 %v1576, %v1575
  %v1603 = vunpack.c.l.b16 %v1469
  %v1604 = vunpack.c.h.b16 %v1469
  %v1605 = vunpack.c.l.b16 %v1470
  %v1606 = vunpack.c.l.b16 %v1471
  %v1607 = vunpack.c.h.b16 %v1471
  %v1608 = vunpack.c.l.b16 %v1472
  %v1609 = vunpack.c.l.b16 %v1473
  %v1610 = vunpack.c.h.b16 %v1473
  %v1611 = vunpack.c.l.b16 %v1474
  %v1612 = vunpack.c.l.b16 %v1475
  %v1613 = vunpack.c.h.b16 %v1475
  %v1614 = vunpack.c.l.b16 %v1476
  %v1615 = vpack.c.b16 %v1606, %v1603
  %v1616 = vpack.c.b16 %v1607, %v1604
  %v1617 = vpack.c.b16 %v1608, %v1605
  %v1618 = vpack.c.b16 %v1612, %v1609
  %v1619 = vpack.c.b16 %v1613, %v1610
  %v1620 = vpack.c.b16 %v1614, %v1611
  %v1626 = vsel %vm511, %v1617, 0
  %v1629 = vsel %vm511, %v1620, 0
  %1631 = vmatpush.bf16.msra.mxu0 %v1584
  %1632 = vmatpush.bf16.msra.mxu0 %v1583
  %1633 = vmatpush.bf16.msra.mxu0 %v1582
  %1634 = vmatpush.bf16.msra.mxu0 %v1581
  %1635 = vmatpush.bf16.msra.mxu0 %v1580
  %1636 = vmatpush.bf16.msra.mxu0 %v1579
  %1637 = vmatpush.bf16.msra.mxu0 %v1578
  %1638 = vmatpush.bf16.msra.mxu0 %v1577
  %1639 = vmatmul.bf16.gmra.mxu0 %v1615
  %v1640 = vpop.f32.mrf.mxu0
  %v1641 = vadd.f32 0.0, %v1640
  %v1642 = vpop.f32.mrf.mxu0
  %v1643 = vadd.f32 0.0, %v1642
  %1644 = vmatmul.bf16.gmra.mxu0 %v1618
  %v1645 = vpop.f32.mrf.mxu0
  %v1646 = vadd.f32 0.0, %v1645
  %v1647 = vpop.f32.mrf.mxu0
  %v1648 = vadd.f32 0.0, %v1647
  %1649 = vdwg.mxu0
  %1650 = vmatpush.bf16.msra.mxu0 %v1592
  %1651 = vmatpush.bf16.msra.mxu0 %v1591
  %1652 = vmatpush.bf16.msra.mxu0 %v1590
  %1653 = vmatpush.bf16.msra.mxu0 %v1589
  %1654 = vmatpush.bf16.msra.mxu0 %v1588
  %1655 = vmatpush.bf16.msra.mxu0 %v1587
  %1656 = vmatpush.bf16.msra.mxu0 %v1586
  %1657 = vmatpush.bf16.msra.mxu0 %v1585
  %1658 = vmatmul.bf16.gmra.mxu0 %v1616
  %v1659 = vpop.f32.mrf.mxu0
  %v1660 = vadd.f32 %v1641, %v1659
  %v1661 = vpop.f32.mrf.mxu0
  %v1662 = vadd.f32 %v1643, %v1661
  %1663 = vmatmul.bf16.gmra.mxu0 %v1619
  %v1664 = vpop.f32.mrf.mxu0
  %v1665 = vadd.f32 %v1646, %v1664
  %v1666 = vpop.f32.mrf.mxu0
  %v1667 = vadd.f32 %v1648, %v1666
  %1668 = vdwg.mxu0
  %1669 = vmatpush.bf16.msra.mxu0 0
  %1670 = vmatpush.bf16.msra.mxu0 0
  %1671 = vmatpush.bf16.msra.mxu0 0
  %1672 = vmatpush.bf16.msra.mxu0 0
  %1673 = vmatpush.bf16.msra.mxu0 0
  %1674 = vmatpush.bf16.msra.mxu0 0
  %1675 = vmatpush.bf16.msra.mxu0 %v1594
  %1676 = vmatpush.bf16.msra.mxu0 %v1593
  %1677 = vmatmul.bf16.gmra.mxu0 %v1626
  %v1678 = vpop.f32.mrf.mxu0
  %v1679 = vadd.f32 %v1660, %v1678
  %v1680 = vpop.f32.mrf.mxu0
  %v1681 = vadd.f32 %v1662, %v1680
  %1682 = vmatmul.bf16.gmra.mxu0 %v1629
  %v1683 = vpop.f32.mrf.mxu0
  %v1684 = vadd.f32 %v1665, %v1683
  %v1685 = vpop.f32.mrf.mxu0
  %v1686 = vadd.f32 %v1667, %v1685
  %1687 = vdwg.mxu0
  %v1688 = vld [vmem:[%s15] sm:$0xff]
  %v1689 = vld [vmem:[%s15 + $0x8] sm:$0xff]
  %v1690 = vld [vmem:[%s15 + $0x10] sm:$0xff]
  %v1691 = vld [vmem:[%s15 + $0x18] sm:$0xff]
  %v1692 = vld [vmem:[%s16] sm:$0xff]
  %v1693 = vld [vmem:[%s16 + $0x8] sm:$0xff]
  %v1694 = vld [vmem:[%s16 + $0x10] sm:$0xff]
  %v1695 = vld [vmem:[%s16 + $0x18] sm:$0xff]
  %1696 = vadd.xlane.f32.xlu0 %v1679
  %v1697 = vpop.xlane.xlu0 %1696
  %1698 = vadd.xlane.f32.xlu0 %v1681
  %v1699 = vpop.xlane.xlu0 %1698
  %1700 = vadd.xlane.f32.xlu0 %v1684
  %v1701 = vpop.xlane.xlu0 %1700
  %1702 = vadd.xlane.f32.xlu0 %v1686
  %v1703 = vpop.xlane.xlu0 %1702
  %v1704 = vmul.f32 %v1697, 0.0078125
  %v1705 = vmul.f32 %v1699, 0.0078125
  %v1706 = vmul.f32 %v1701, 0.0078125
  %v1707 = vmul.f32 %v1703, 0.0078125
  %v1708 = vmul.f32 %v1679, %v1679
  %v1709 = vmul.f32 %v1681, %v1681
  %v1710 = vmul.f32 %v1684, %v1684
  %v1711 = vmul.f32 %v1686, %v1686
  %1712 = vadd.xlane.f32.xlu0 %v1708
  %v1713 = vpop.xlane.xlu0 %1712
  %1714 = vadd.xlane.f32.xlu0 %v1709
  %v1715 = vpop.xlane.xlu0 %1714
  %1716 = vadd.xlane.f32.xlu0 %v1710
  %v1717 = vpop.xlane.xlu0 %1716
  %1718 = vadd.xlane.f32.xlu0 %v1711
  %v1719 = vpop.xlane.xlu0 %1718
  %v1720 = vmul.f32 %v1713, 0.0078125
  %v1721 = vmul.f32 %v1715, 0.0078125
  %v1722 = vmul.f32 %v1717, 0.0078125
  %v1723 = vmul.f32 %v1719, 0.0078125
  %v1724 = vmul.f32 %v1704, %v1704
  %v1725 = vmul.f32 %v1705, %v1705
  %v1726 = vmul.f32 %v1706, %v1706
  %v1727 = vmul.f32 %v1707, %v1707
  %v1728 = vsub.f32 %v1720, %v1724
  %v1729 = vsub.f32 %v1721, %v1725
  %v1730 = vsub.f32 %v1722, %v1726
  %v1731 = vsub.f32 %v1723, %v1727
  %v1732 = vmax.f32 %v1728, 0.0
  %v1733 = vmax.f32 %v1729, 0.0
  %v1734 = vmax.f32 %v1730, 0.0
  %v1735 = vmax.f32 %v1731, 0.0
  %v1736 = vsub.f32 %v1679, %v1704
  %v1737 = vsub.f32 %v1681, %v1705
  %v1738 = vsub.f32 %v1684, %v1706
  %v1739 = vsub.f32 %v1686, %v1707
  %1741 = vset.pattern.permute.xlu0 0
  %1742 = vperm.xlu0 %1741, %v1688
  %v1743 = vpop.permute.xlu0 %1742
  %1746 = vset.pattern.permute.xlu0 0
  %1747 = vperm.xlu0 %1746, %v1689
  %v1748 = vpop.permute.xlu0 %1747
  %1751 = vset.pattern.permute.xlu0 0
  %1752 = vperm.xlu0 %1751, %v1690
  %v1753 = vpop.permute.xlu0 %1752
  %1756 = vset.pattern.permute.xlu0 0
  %1757 = vperm.xlu0 %1756, %v1691
  %v1758 = vpop.permute.xlu0 %1757
  %v1760 = vmul.f32 %v1743, %v1736
  %v1761 = vmul.f32 %v1748, %v1737
  %v1762 = vmul.f32 %v1753, %v1738
  %v1763 = vmul.f32 %v1758, %v1739
  %v1764 = vadd.f32 %v1732, 1e-05
  %v1765 = vadd.f32 %v1733, 1e-05
  %v1766 = vadd.f32 %v1734, 1e-05
  %v1767 = vadd.f32 %v1735, 1e-05
  %v1768 = vrsqrt.pop %v1764
  %v1769 = vmul.f32 %v1768, %v1764
  %v1770 = vmul.f32 %v1769, %v1768
  %v1771 = vmul.f32 0.5, %v1770
  %v1772 = vsub.f32 1.5, %v1771
  %v1773 = vmul.f32 %v1768, %v1772
  %vm1774 = vweird.f32 %v1764
  %vm1775 = vweird.f32 %v1768
  %vm1776 = vmor %vm1774, %vm1775
  %v1777 = vsel %vm1776, %v1768, %v1773
  %v1778 = vrsqrt.pop %v1765
  %v1779 = vmul.f32 %v1778, %v1765
  %v1780 = vmul.f32 %v1779, %v1778
  %v1781 = vmul.f32 0.5, %v1780
  %v1782 = vsub.f32 1.5, %v1781
  %v1783 = vmul.f32 %v1778, %v1782
  %vm1784 = vweird.f32 %v1765
  %vm1785 = vweird.f32 %v1778
  %vm1786 = vmor %vm1784, %vm1785
  %v1787 = vsel %vm1786, %v1778, %v1783
  %v1788 = vrsqrt.pop %v1766
  %v1789 = vmul.f32 %v1788, %v1766
  %v1790 = vmul.f32 %v1789, %v1788
  %v1791 = vmul.f32 0.5, %v1790
  %v1792 = vsub.f32 1.5, %v1791
  %v1793 = vmul.f32 %v1788, %v1792
  %vm1794 = vweird.f32 %v1766
  %vm1795 = vweird.f32 %v1788
  %vm1796 = vmor %vm1794, %vm1795
  %v1797 = vsel %vm1796, %v1788, %v1793
  %v1798 = vrsqrt.pop %v1767
  %v1799 = vmul.f32 %v1798, %v1767
  %v1800 = vmul.f32 %v1799, %v1798
  %v1801 = vmul.f32 0.5, %v1800
  %v1802 = vsub.f32 1.5, %v1801
  %v1803 = vmul.f32 %v1798, %v1802
  %vm1804 = vweird.f32 %v1767
  %vm1805 = vweird.f32 %v1798
  %vm1806 = vmor %vm1804, %vm1805
  %v1807 = vsel %vm1806, %v1798, %v1803
  %v1808 = vmul.f32 %v1760, %v1777
  %v1809 = vmul.f32 %v1761, %v1787
  %v1810 = vmul.f32 %v1762, %v1797
  %v1811 = vmul.f32 %v1763, %v1807
  %1813 = vset.pattern.permute.xlu0 0
  %1814 = vperm.xlu0 %1813, %v1692
  %v1815 = vpop.permute.xlu0 %1814
  %1818 = vset.pattern.permute.xlu0 0
  %1819 = vperm.xlu0 %1818, %v1693
  %v1820 = vpop.permute.xlu0 %1819
  %1823 = vset.pattern.permute.xlu0 0
  %1824 = vperm.xlu0 %1823, %v1694
  %v1825 = vpop.permute.xlu0 %1824
  %1828 = vset.pattern.permute.xlu0 0
  %1829 = vperm.xlu0 %1828, %v1695
  %v1830 = vpop.permute.xlu0 %1829
  %v1832 = vadd.f32 %v1808, %v1815
  %v1833 = vadd.f32 %v1809, %v1820
  %v1834 = vadd.f32 %v1810, %v1825
  %v1835 = vadd.f32 %v1811, %v1830
  %v1836 = vmax.f32 %v1832, 0.0
  %v1837 = vmax.f32 %v1833, 0.0
  %v1838 = vmax.f32 %v1834, 0.0
  %v1839 = vmax.f32 %v1835, 0.0
  %v1840 = vld [vmem:[%s17] sm:$0xff]
  %v1841 = vld [vmem:[%s17 + $0x8] sm:$0xf]
  %v1842 = vld [vmem:[%s17 + $0xc] sm:$0xff]
  %v1843 = vld [vmem:[%s17 + $0x14] sm:$0xf]
  %v1844 = vld [vmem:[%s17 + $0x18] sm:$0xff]
  %v1845 = vld [vmem:[%s17 + $0x20] sm:$0xf]
  %v1846 = vld [vmem:[%s17 + $0x24] sm:$0xff]
  %v1847 = vld [vmem:[%s17 + $0x2c] sm:$0xf]
  %1848 = vrot.lane.b32.xlu0 %v1836, 9
  %v1849 = vpop.permute.xlu0 %1848
  %1850 = vrot.lane.b32.xlu0 %v1837, 9
  %v1851 = vpop.permute.xlu0 %1850
  %1852 = vrot.lane.b32.xlu0 %v1838, 9
  %v1853 = vpop.permute.xlu0 %1852
  %1854 = vrot.lane.b32.xlu0 %v1839, 9
  %v1855 = vpop.permute.xlu0 %1854
  %v1856 = vmul.f32 %v1849, %v93
  %v1857 = vmul.f32 %v1851, %v93
  %v1858 = vmul.f32 %v1853, %v93
  %v1859 = vmul.f32 %v1855, %v93
  %1860 = vrot.lane.b32.xlu0 %v1836, 8
  %v1861 = vpop.permute.xlu0 %1860
  %1862 = vrot.lane.b32.xlu0 %v1837, 8
  %v1863 = vpop.permute.xlu0 %1862
  %1864 = vrot.lane.b32.xlu0 %v1838, 8
  %v1865 = vpop.permute.xlu0 %1864
  %1866 = vrot.lane.b32.xlu0 %v1839, 8
  %v1867 = vpop.permute.xlu0 %1866
  %v1868 = vmul.f32 %v1861, %v101
  %v1869 = vmul.f32 %v1863, %v101
  %v1870 = vmul.f32 %v1865, %v101
  %v1871 = vmul.f32 %v1867, %v101
  %1872 = vrot.lane.b32.xlu0 %v1836, 7
  %v1873 = vpop.permute.xlu0 %1872
  %1874 = vrot.lane.b32.xlu0 %v1837, 7
  %v1875 = vpop.permute.xlu0 %1874
  %1876 = vrot.lane.b32.xlu0 %v1838, 7
  %v1877 = vpop.permute.xlu0 %1876
  %1878 = vrot.lane.b32.xlu0 %v1839, 7
  %v1879 = vpop.permute.xlu0 %1878
  %v1880 = vmul.f32 %v1873, %v109
  %v1881 = vmul.f32 %v1875, %v109
  %v1882 = vmul.f32 %v1877, %v109
  %v1883 = vmul.f32 %v1879, %v109
  %1884 = vrot.lane.b32.xlu0 %v1836, 1
  %v1885 = vpop.permute.xlu0 %1884
  %1886 = vrot.lane.b32.xlu0 %v1837, 1
  %v1887 = vpop.permute.xlu0 %1886
  %1888 = vrot.lane.b32.xlu0 %v1838, 1
  %v1889 = vpop.permute.xlu0 %1888
  %1890 = vrot.lane.b32.xlu0 %v1839, 1
  %v1891 = vpop.permute.xlu0 %1890
  %v1892 = vmul.f32 %v1885, %v117
  %v1893 = vmul.f32 %v1887, %v117
  %v1894 = vmul.f32 %v1889, %v117
  %v1895 = vmul.f32 %v1891, %v117
  %v1896 = vmul.f32 %v1836, %v123
  %v1897 = vmul.f32 %v1837, %v123
  %v1898 = vmul.f32 %v1838, %v123
  %v1899 = vmul.f32 %v1839, %v123
  %1900 = vrot.lane.b32.xlu0 %v1836, 127
  %v1901 = vpop.permute.xlu0 %1900
  %1902 = vrot.lane.b32.xlu0 %v1837, 127
  %v1903 = vpop.permute.xlu0 %1902
  %1904 = vrot.lane.b32.xlu0 %v1838, 127
  %v1905 = vpop.permute.xlu0 %1904
  %1906 = vrot.lane.b32.xlu0 %v1839, 127
  %v1907 = vpop.permute.xlu0 %1906
  %v1908 = vmul.f32 %v1901, %v131
  %v1909 = vmul.f32 %v1903, %v131
  %v1910 = vmul.f32 %v1905, %v131
  %v1911 = vmul.f32 %v1907, %v131
  %1912 = vrot.lane.b32.xlu0 %v1836, 121
  %v1913 = vpop.permute.xlu0 %1912
  %1914 = vrot.lane.b32.xlu0 %v1837, 121
  %v1915 = vpop.permute.xlu0 %1914
  %1916 = vrot.lane.b32.xlu0 %v1838, 121
  %v1917 = vpop.permute.xlu0 %1916
  %1918 = vrot.lane.b32.xlu0 %v1839, 121
  %v1919 = vpop.permute.xlu0 %1918
  %v1920 = vmul.f32 %v1913, %v139
  %v1921 = vmul.f32 %v1915, %v139
  %v1922 = vmul.f32 %v1917, %v139
  %v1923 = vmul.f32 %v1919, %v139
  %1924 = vrot.lane.b32.xlu0 %v1836, 120
  %v1925 = vpop.permute.xlu0 %1924
  %1926 = vrot.lane.b32.xlu0 %v1837, 120
  %v1927 = vpop.permute.xlu0 %1926
  %1928 = vrot.lane.b32.xlu0 %v1838, 120
  %v1929 = vpop.permute.xlu0 %1928
  %1930 = vrot.lane.b32.xlu0 %v1839, 120
  %v1931 = vpop.permute.xlu0 %1930
  %v1932 = vmul.f32 %v1925, %v147
  %v1933 = vmul.f32 %v1927, %v147
  %v1934 = vmul.f32 %v1929, %v147
  %v1935 = vmul.f32 %v1931, %v147
  %1936 = vrot.lane.b32.xlu0 %v1836, 119
  %v1937 = vpop.permute.xlu0 %1936
  %1938 = vrot.lane.b32.xlu0 %v1837, 119
  %v1939 = vpop.permute.xlu0 %1938
  %1940 = vrot.lane.b32.xlu0 %v1838, 119
  %v1941 = vpop.permute.xlu0 %1940
  %1942 = vrot.lane.b32.xlu0 %v1839, 119
  %v1943 = vpop.permute.xlu0 %1942
  %v1944 = vmul.f32 %v1937, %v155
  %v1945 = vmul.f32 %v1939, %v155
  %v1946 = vmul.f32 %v1941, %v155
  %v1947 = vmul.f32 %v1943, %v155
  %v1948 = vpack.c.bf16 %v1857, %v1856
  %v1949 = vpack.c.bf16 %v1859, %v1858
  %v1950 = vpack.c.bf16 %v1869, %v1868
  %v1951 = vpack.c.bf16 %v1871, %v1870
  %v1952 = vpack.c.bf16 %v1881, %v1880
  %v1953 = vpack.c.bf16 %v1883, %v1882
  %v1954 = vpack.c.bf16 %v1893, %v1892
  %v1955 = vpack.c.bf16 %v1895, %v1894
  %v1956 = vpack.c.bf16 %v1897, %v1896
  %v1957 = vpack.c.bf16 %v1899, %v1898
  %v1958 = vpack.c.bf16 %v1909, %v1908
  %v1959 = vpack.c.bf16 %v1911, %v1910
  %v1960 = vpack.c.bf16 %v1921, %v1920
  %v1961 = vpack.c.bf16 %v1923, %v1922
  %v1962 = vpack.c.bf16 %v1933, %v1932
  %v1963 = vpack.c.bf16 %v1935, %v1934
  %v1964 = vpack.c.bf16 %v1945, %v1944
  %v1965 = vpack.c.bf16 %v1947, %v1946
  %v1974 = vunpack.c.l.b16 %v1840
  %v1975 = vunpack.c.h.b16 %v1840
  %v1976 = vunpack.c.l.b16 %v1841
  %v1977 = vunpack.c.l.b16 %v1842
  %v1978 = vunpack.c.h.b16 %v1842
  %v1979 = vunpack.c.l.b16 %v1843
  %v1980 = vunpack.c.l.b16 %v1844
  %v1981 = vunpack.c.h.b16 %v1844
  %v1982 = vunpack.c.l.b16 %v1845
  %v1983 = vunpack.c.l.b16 %v1846
  %v1984 = vunpack.c.h.b16 %v1846
  %v1985 = vunpack.c.l.b16 %v1847
  %v1986 = vpack.c.b16 %v1977, %v1974
  %v1987 = vpack.c.b16 %v1978, %v1975
  %v1988 = vpack.c.b16 %v1979, %v1976
  %v1989 = vpack.c.b16 %v1983, %v1980
  %v1990 = vpack.c.b16 %v1984, %v1981
  %v1991 = vpack.c.b16 %v1985, %v1982
  %v1997 = vsel %vm511, %v1988, 0
  %v2000 = vsel %vm511, %v1991, 0
  %2002 = vmatpush.bf16.msra.mxu0 %v1955
  %2003 = vmatpush.bf16.msra.mxu0 %v1954
  %2004 = vmatpush.bf16.msra.mxu0 %v1953
  %2005 = vmatpush.bf16.msra.mxu0 %v1952
  %2006 = vmatpush.bf16.msra.mxu0 %v1951
  %2007 = vmatpush.bf16.msra.mxu0 %v1950
  %2008 = vmatpush.bf16.msra.mxu0 %v1949
  %2009 = vmatpush.bf16.msra.mxu0 %v1948
  %2010 = vmatmul.bf16.gmra.mxu0 %v1986
  %v2011 = vpop.f32.mrf.mxu0
  %v2012 = vadd.f32 0.0, %v2011
  %v2013 = vpop.f32.mrf.mxu0
  %v2014 = vadd.f32 0.0, %v2013
  %2015 = vmatmul.bf16.gmra.mxu0 %v1989
  %v2016 = vpop.f32.mrf.mxu0
  %v2017 = vadd.f32 0.0, %v2016
  %v2018 = vpop.f32.mrf.mxu0
  %v2019 = vadd.f32 0.0, %v2018
  %2020 = vdwg.mxu0
  %2021 = vmatpush.bf16.msra.mxu0 %v1963
  %2022 = vmatpush.bf16.msra.mxu0 %v1962
  %2023 = vmatpush.bf16.msra.mxu0 %v1961
  %2024 = vmatpush.bf16.msra.mxu0 %v1960
  %2025 = vmatpush.bf16.msra.mxu0 %v1959
  %2026 = vmatpush.bf16.msra.mxu0 %v1958
  %2027 = vmatpush.bf16.msra.mxu0 %v1957
  %2028 = vmatpush.bf16.msra.mxu0 %v1956
  %2029 = vmatmul.bf16.gmra.mxu0 %v1987
  %v2030 = vpop.f32.mrf.mxu0
  %v2031 = vadd.f32 %v2012, %v2030
  %v2032 = vpop.f32.mrf.mxu0
  %v2033 = vadd.f32 %v2014, %v2032
  %2034 = vmatmul.bf16.gmra.mxu0 %v1990
  %v2035 = vpop.f32.mrf.mxu0
  %v2036 = vadd.f32 %v2017, %v2035
  %v2037 = vpop.f32.mrf.mxu0
  %v2038 = vadd.f32 %v2019, %v2037
  %2039 = vdwg.mxu0
  %2040 = vmatpush.bf16.msra.mxu0 0
  %2041 = vmatpush.bf16.msra.mxu0 0
  %2042 = vmatpush.bf16.msra.mxu0 0
  %2043 = vmatpush.bf16.msra.mxu0 0
  %2044 = vmatpush.bf16.msra.mxu0 0
  %2045 = vmatpush.bf16.msra.mxu0 0
  %2046 = vmatpush.bf16.msra.mxu0 %v1965
  %2047 = vmatpush.bf16.msra.mxu0 %v1964
  %2048 = vmatmul.bf16.gmra.mxu0 %v1997
  %v2049 = vpop.f32.mrf.mxu0
  %v2050 = vadd.f32 %v2031, %v2049
  %v2051 = vpop.f32.mrf.mxu0
  %v2052 = vadd.f32 %v2033, %v2051
  %2053 = vmatmul.bf16.gmra.mxu0 %v2000
  %v2054 = vpop.f32.mrf.mxu0
  %v2055 = vadd.f32 %v2036, %v2054
  %v2056 = vpop.f32.mrf.mxu0
  %v2057 = vadd.f32 %v2038, %v2056
  %2058 = vdwg.mxu0
  %v2059 = vld [vmem:[%s18] sm:$0xff]
  %v2060 = vld [vmem:[%s18 + $0x8] sm:$0xff]
  %v2061 = vld [vmem:[%s18 + $0x10] sm:$0xff]
  %v2062 = vld [vmem:[%s18 + $0x18] sm:$0xff]
  %v2063 = vld [vmem:[%s19] sm:$0xff]
  %v2064 = vld [vmem:[%s19 + $0x8] sm:$0xff]
  %v2065 = vld [vmem:[%s19 + $0x10] sm:$0xff]
  %v2066 = vld [vmem:[%s19 + $0x18] sm:$0xff]
  %2067 = vadd.xlane.f32.xlu0 %v2050
  %v2068 = vpop.xlane.xlu0 %2067
  %2069 = vadd.xlane.f32.xlu0 %v2052
  %v2070 = vpop.xlane.xlu0 %2069
  %2071 = vadd.xlane.f32.xlu0 %v2055
  %v2072 = vpop.xlane.xlu0 %2071
  %2073 = vadd.xlane.f32.xlu0 %v2057
  %v2074 = vpop.xlane.xlu0 %2073
  %v2075 = vmul.f32 %v2068, 0.0078125
  %v2076 = vmul.f32 %v2070, 0.0078125
  %v2077 = vmul.f32 %v2072, 0.0078125
  %v2078 = vmul.f32 %v2074, 0.0078125
  %v2079 = vmul.f32 %v2050, %v2050
  %v2080 = vmul.f32 %v2052, %v2052
  %v2081 = vmul.f32 %v2055, %v2055
  %v2082 = vmul.f32 %v2057, %v2057
  %2083 = vadd.xlane.f32.xlu0 %v2079
  %v2084 = vpop.xlane.xlu0 %2083
  %2085 = vadd.xlane.f32.xlu0 %v2080
  %v2086 = vpop.xlane.xlu0 %2085
  %2087 = vadd.xlane.f32.xlu0 %v2081
  %v2088 = vpop.xlane.xlu0 %2087
  %2089 = vadd.xlane.f32.xlu0 %v2082
  %v2090 = vpop.xlane.xlu0 %2089
  %v2091 = vmul.f32 %v2084, 0.0078125
  %v2092 = vmul.f32 %v2086, 0.0078125
  %v2093 = vmul.f32 %v2088, 0.0078125
  %v2094 = vmul.f32 %v2090, 0.0078125
  %v2095 = vmul.f32 %v2075, %v2075
  %v2096 = vmul.f32 %v2076, %v2076
  %v2097 = vmul.f32 %v2077, %v2077
  %v2098 = vmul.f32 %v2078, %v2078
  %v2099 = vsub.f32 %v2091, %v2095
  %v2100 = vsub.f32 %v2092, %v2096
  %v2101 = vsub.f32 %v2093, %v2097
  %v2102 = vsub.f32 %v2094, %v2098
  %v2103 = vmax.f32 %v2099, 0.0
  %v2104 = vmax.f32 %v2100, 0.0
  %v2105 = vmax.f32 %v2101, 0.0
  %v2106 = vmax.f32 %v2102, 0.0
  %v2107 = vsub.f32 %v2050, %v2075
  %v2108 = vsub.f32 %v2052, %v2076
  %v2109 = vsub.f32 %v2055, %v2077
  %v2110 = vsub.f32 %v2057, %v2078
  %2112 = vset.pattern.permute.xlu0 0
  %2113 = vperm.xlu0 %2112, %v2059
  %v2114 = vpop.permute.xlu0 %2113
  %2117 = vset.pattern.permute.xlu0 0
  %2118 = vperm.xlu0 %2117, %v2060
  %v2119 = vpop.permute.xlu0 %2118
  %2122 = vset.pattern.permute.xlu0 0
  %2123 = vperm.xlu0 %2122, %v2061
  %v2124 = vpop.permute.xlu0 %2123
  %2127 = vset.pattern.permute.xlu0 0
  %2128 = vperm.xlu0 %2127, %v2062
  %v2129 = vpop.permute.xlu0 %2128
  %v2131 = vmul.f32 %v2114, %v2107
  %v2132 = vmul.f32 %v2119, %v2108
  %v2133 = vmul.f32 %v2124, %v2109
  %v2134 = vmul.f32 %v2129, %v2110
  %v2135 = vadd.f32 %v2103, 1e-05
  %v2136 = vadd.f32 %v2104, 1e-05
  %v2137 = vadd.f32 %v2105, 1e-05
  %v2138 = vadd.f32 %v2106, 1e-05
  %v2139 = vrsqrt.pop %v2135
  %v2140 = vmul.f32 %v2139, %v2135
  %v2141 = vmul.f32 %v2140, %v2139
  %v2142 = vmul.f32 0.5, %v2141
  %v2143 = vsub.f32 1.5, %v2142
  %v2144 = vmul.f32 %v2139, %v2143
  %vm2145 = vweird.f32 %v2135
  %vm2146 = vweird.f32 %v2139
  %vm2147 = vmor %vm2145, %vm2146
  %v2148 = vsel %vm2147, %v2139, %v2144
  %v2149 = vrsqrt.pop %v2136
  %v2150 = vmul.f32 %v2149, %v2136
  %v2151 = vmul.f32 %v2150, %v2149
  %v2152 = vmul.f32 0.5, %v2151
  %v2153 = vsub.f32 1.5, %v2152
  %v2154 = vmul.f32 %v2149, %v2153
  %vm2155 = vweird.f32 %v2136
  %vm2156 = vweird.f32 %v2149
  %vm2157 = vmor %vm2155, %vm2156
  %v2158 = vsel %vm2157, %v2149, %v2154
  %v2159 = vrsqrt.pop %v2137
  %v2160 = vmul.f32 %v2159, %v2137
  %v2161 = vmul.f32 %v2160, %v2159
  %v2162 = vmul.f32 0.5, %v2161
  %v2163 = vsub.f32 1.5, %v2162
  %v2164 = vmul.f32 %v2159, %v2163
  %vm2165 = vweird.f32 %v2137
  %vm2166 = vweird.f32 %v2159
  %vm2167 = vmor %vm2165, %vm2166
  %v2168 = vsel %vm2167, %v2159, %v2164
  %v2169 = vrsqrt.pop %v2138
  %v2170 = vmul.f32 %v2169, %v2138
  %v2171 = vmul.f32 %v2170, %v2169
  %v2172 = vmul.f32 0.5, %v2171
  %v2173 = vsub.f32 1.5, %v2172
  %v2174 = vmul.f32 %v2169, %v2173
  %vm2175 = vweird.f32 %v2138
  %vm2176 = vweird.f32 %v2169
  %vm2177 = vmor %vm2175, %vm2176
  %v2178 = vsel %vm2177, %v2169, %v2174
  %v2179 = vmul.f32 %v2131, %v2148
  %v2180 = vmul.f32 %v2132, %v2158
  %v2181 = vmul.f32 %v2133, %v2168
  %v2182 = vmul.f32 %v2134, %v2178
  %2184 = vset.pattern.permute.xlu0 0
  %2185 = vperm.xlu0 %2184, %v2063
  %v2186 = vpop.permute.xlu0 %2185
  %2189 = vset.pattern.permute.xlu0 0
  %2190 = vperm.xlu0 %2189, %v2064
  %v2191 = vpop.permute.xlu0 %2190
  %2194 = vset.pattern.permute.xlu0 0
  %2195 = vperm.xlu0 %2194, %v2065
  %v2196 = vpop.permute.xlu0 %2195
  %2199 = vset.pattern.permute.xlu0 0
  %2200 = vperm.xlu0 %2199, %v2066
  %v2201 = vpop.permute.xlu0 %2200
  %v2203 = vadd.f32 %v2179, %v2186
  %v2204 = vadd.f32 %v2180, %v2191
  %v2205 = vadd.f32 %v2181, %v2196
  %v2206 = vadd.f32 %v2182, %v2201
  %v2207 = vadd.f32 %v2203, %v1465
  %v2208 = vadd.f32 %v2204, %v1466
  %v2209 = vadd.f32 %v2205, %v1467
  %v2210 = vadd.f32 %v2206, %v1468
  %v2211 = vld [vmem:[%s20] sm:$0xff]
  %v2212 = vld [vmem:[%s20 + $0x8] sm:$0xf]
  %v2213 = vld [vmem:[%s20 + $0xc] sm:$0xff]
  %v2214 = vld [vmem:[%s20 + $0x14] sm:$0xf]
  %v2215 = vld [vmem:[%s20 + $0x18] sm:$0xff]
  %v2216 = vld [vmem:[%s20 + $0x20] sm:$0xf]
  %v2217 = vld [vmem:[%s20 + $0x24] sm:$0xff]
  %v2218 = vld [vmem:[%s20 + $0x2c] sm:$0xf]
  %2219 = vrot.lane.b32.xlu0 %v2207, 9
  %v2220 = vpop.permute.xlu0 %2219
  %2221 = vrot.lane.b32.xlu0 %v2208, 9
  %v2222 = vpop.permute.xlu0 %2221
  %2223 = vrot.lane.b32.xlu0 %v2209, 9
  %v2224 = vpop.permute.xlu0 %2223
  %2225 = vrot.lane.b32.xlu0 %v2210, 9
  %v2226 = vpop.permute.xlu0 %2225
  %v2227 = vmul.f32 %v2220, %v93
  %v2228 = vmul.f32 %v2222, %v93
  %v2229 = vmul.f32 %v2224, %v93
  %v2230 = vmul.f32 %v2226, %v93
  %2231 = vrot.lane.b32.xlu0 %v2207, 8
  %v2232 = vpop.permute.xlu0 %2231
  %2233 = vrot.lane.b32.xlu0 %v2208, 8
  %v2234 = vpop.permute.xlu0 %2233
  %2235 = vrot.lane.b32.xlu0 %v2209, 8
  %v2236 = vpop.permute.xlu0 %2235
  %2237 = vrot.lane.b32.xlu0 %v2210, 8
  %v2238 = vpop.permute.xlu0 %2237
  %v2239 = vmul.f32 %v2232, %v101
  %v2240 = vmul.f32 %v2234, %v101
  %v2241 = vmul.f32 %v2236, %v101
  %v2242 = vmul.f32 %v2238, %v101
  %2243 = vrot.lane.b32.xlu0 %v2207, 7
  %v2244 = vpop.permute.xlu0 %2243
  %2245 = vrot.lane.b32.xlu0 %v2208, 7
  %v2246 = vpop.permute.xlu0 %2245
  %2247 = vrot.lane.b32.xlu0 %v2209, 7
  %v2248 = vpop.permute.xlu0 %2247
  %2249 = vrot.lane.b32.xlu0 %v2210, 7
  %v2250 = vpop.permute.xlu0 %2249
  %v2251 = vmul.f32 %v2244, %v109
  %v2252 = vmul.f32 %v2246, %v109
  %v2253 = vmul.f32 %v2248, %v109
  %v2254 = vmul.f32 %v2250, %v109
  %2255 = vrot.lane.b32.xlu0 %v2207, 1
  %v2256 = vpop.permute.xlu0 %2255
  %2257 = vrot.lane.b32.xlu0 %v2208, 1
  %v2258 = vpop.permute.xlu0 %2257
  %2259 = vrot.lane.b32.xlu0 %v2209, 1
  %v2260 = vpop.permute.xlu0 %2259
  %2261 = vrot.lane.b32.xlu0 %v2210, 1
  %v2262 = vpop.permute.xlu0 %2261
  %v2263 = vmul.f32 %v2256, %v117
  %v2264 = vmul.f32 %v2258, %v117
  %v2265 = vmul.f32 %v2260, %v117
  %v2266 = vmul.f32 %v2262, %v117
  %v2267 = vmul.f32 %v2207, %v123
  %v2268 = vmul.f32 %v2208, %v123
  %v2269 = vmul.f32 %v2209, %v123
  %v2270 = vmul.f32 %v2210, %v123
  %2271 = vrot.lane.b32.xlu0 %v2207, 127
  %v2272 = vpop.permute.xlu0 %2271
  %2273 = vrot.lane.b32.xlu0 %v2208, 127
  %v2274 = vpop.permute.xlu0 %2273
  %2275 = vrot.lane.b32.xlu0 %v2209, 127
  %v2276 = vpop.permute.xlu0 %2275
  %2277 = vrot.lane.b32.xlu0 %v2210, 127
  %v2278 = vpop.permute.xlu0 %2277
  %v2279 = vmul.f32 %v2272, %v131
  %v2280 = vmul.f32 %v2274, %v131
  %v2281 = vmul.f32 %v2276, %v131
  %v2282 = vmul.f32 %v2278, %v131
  %2283 = vrot.lane.b32.xlu0 %v2207, 121
  %v2284 = vpop.permute.xlu0 %2283
  %2285 = vrot.lane.b32.xlu0 %v2208, 121
  %v2286 = vpop.permute.xlu0 %2285
  %2287 = vrot.lane.b32.xlu0 %v2209, 121
  %v2288 = vpop.permute.xlu0 %2287
  %2289 = vrot.lane.b32.xlu0 %v2210, 121
  %v2290 = vpop.permute.xlu0 %2289
  %v2291 = vmul.f32 %v2284, %v139
  %v2292 = vmul.f32 %v2286, %v139
  %v2293 = vmul.f32 %v2288, %v139
  %v2294 = vmul.f32 %v2290, %v139
  %2295 = vrot.lane.b32.xlu0 %v2207, 120
  %v2296 = vpop.permute.xlu0 %2295
  %2297 = vrot.lane.b32.xlu0 %v2208, 120
  %v2298 = vpop.permute.xlu0 %2297
  %2299 = vrot.lane.b32.xlu0 %v2209, 120
  %v2300 = vpop.permute.xlu0 %2299
  %2301 = vrot.lane.b32.xlu0 %v2210, 120
  %v2302 = vpop.permute.xlu0 %2301
  %v2303 = vmul.f32 %v2296, %v147
  %v2304 = vmul.f32 %v2298, %v147
  %v2305 = vmul.f32 %v2300, %v147
  %v2306 = vmul.f32 %v2302, %v147
  %2307 = vrot.lane.b32.xlu0 %v2207, 119
  %v2308 = vpop.permute.xlu0 %2307
  %2309 = vrot.lane.b32.xlu0 %v2208, 119
  %v2310 = vpop.permute.xlu0 %2309
  %2311 = vrot.lane.b32.xlu0 %v2209, 119
  %v2312 = vpop.permute.xlu0 %2311
  %2313 = vrot.lane.b32.xlu0 %v2210, 119
  %v2314 = vpop.permute.xlu0 %2313
  %v2315 = vmul.f32 %v2308, %v155
  %v2316 = vmul.f32 %v2310, %v155
  %v2317 = vmul.f32 %v2312, %v155
  %v2318 = vmul.f32 %v2314, %v155
  %v2319 = vpack.c.bf16 %v2228, %v2227
  %v2320 = vpack.c.bf16 %v2230, %v2229
  %v2321 = vpack.c.bf16 %v2240, %v2239
  %v2322 = vpack.c.bf16 %v2242, %v2241
  %v2323 = vpack.c.bf16 %v2252, %v2251
  %v2324 = vpack.c.bf16 %v2254, %v2253
  %v2325 = vpack.c.bf16 %v2264, %v2263
  %v2326 = vpack.c.bf16 %v2266, %v2265
  %v2327 = vpack.c.bf16 %v2268, %v2267
  %v2328 = vpack.c.bf16 %v2270, %v2269
  %v2329 = vpack.c.bf16 %v2280, %v2279
  %v2330 = vpack.c.bf16 %v2282, %v2281
  %v2331 = vpack.c.bf16 %v2292, %v2291
  %v2332 = vpack.c.bf16 %v2294, %v2293
  %v2333 = vpack.c.bf16 %v2304, %v2303
  %v2334 = vpack.c.bf16 %v2306, %v2305
  %v2335 = vpack.c.bf16 %v2316, %v2315
  %v2336 = vpack.c.bf16 %v2318, %v2317
  %v2345 = vunpack.c.l.b16 %v2211
  %v2346 = vunpack.c.h.b16 %v2211
  %v2347 = vunpack.c.l.b16 %v2212
  %v2348 = vunpack.c.l.b16 %v2213
  %v2349 = vunpack.c.h.b16 %v2213
  %v2350 = vunpack.c.l.b16 %v2214
  %v2351 = vunpack.c.l.b16 %v2215
  %v2352 = vunpack.c.h.b16 %v2215
  %v2353 = vunpack.c.l.b16 %v2216
  %v2354 = vunpack.c.l.b16 %v2217
  %v2355 = vunpack.c.h.b16 %v2217
  %v2356 = vunpack.c.l.b16 %v2218
  %v2357 = vpack.c.b16 %v2348, %v2345
  %v2358 = vpack.c.b16 %v2349, %v2346
  %v2359 = vpack.c.b16 %v2350, %v2347
  %v2360 = vpack.c.b16 %v2354, %v2351
  %v2361 = vpack.c.b16 %v2355, %v2352
  %v2362 = vpack.c.b16 %v2356, %v2353
  %v2368 = vsel %vm511, %v2359, 0
  %v2371 = vsel %vm511, %v2362, 0
  %2373 = vmatpush.bf16.msra.mxu0 %v2326
  %2374 = vmatpush.bf16.msra.mxu0 %v2325
  %2375 = vmatpush.bf16.msra.mxu0 %v2324
  %2376 = vmatpush.bf16.msra.mxu0 %v2323
  %2377 = vmatpush.bf16.msra.mxu0 %v2322
  %2378 = vmatpush.bf16.msra.mxu0 %v2321
  %2379 = vmatpush.bf16.msra.mxu0 %v2320
  %2380 = vmatpush.bf16.msra.mxu0 %v2319
  %2381 = vmatmul.bf16.gmra.mxu0 %v2357
  %v2382 = vpop.f32.mrf.mxu0
  %v2383 = vadd.f32 0.0, %v2382
  %v2384 = vpop.f32.mrf.mxu0
  %v2385 = vadd.f32 0.0, %v2384
  %2386 = vmatmul.bf16.gmra.mxu0 %v2360
  %v2387 = vpop.f32.mrf.mxu0
  %v2388 = vadd.f32 0.0, %v2387
  %v2389 = vpop.f32.mrf.mxu0
  %v2390 = vadd.f32 0.0, %v2389
  %2391 = vdwg.mxu0
  %2392 = vmatpush.bf16.msra.mxu0 %v2334
  %2393 = vmatpush.bf16.msra.mxu0 %v2333
  %2394 = vmatpush.bf16.msra.mxu0 %v2332
  %2395 = vmatpush.bf16.msra.mxu0 %v2331
  %2396 = vmatpush.bf16.msra.mxu0 %v2330
  %2397 = vmatpush.bf16.msra.mxu0 %v2329
  %2398 = vmatpush.bf16.msra.mxu0 %v2328
  %2399 = vmatpush.bf16.msra.mxu0 %v2327
  %2400 = vmatmul.bf16.gmra.mxu0 %v2358
  %v2401 = vpop.f32.mrf.mxu0
  %v2402 = vadd.f32 %v2383, %v2401
  %v2403 = vpop.f32.mrf.mxu0
  %v2404 = vadd.f32 %v2385, %v2403
  %2405 = vmatmul.bf16.gmra.mxu0 %v2361
  %v2406 = vpop.f32.mrf.mxu0
  %v2407 = vadd.f32 %v2388, %v2406
  %v2408 = vpop.f32.mrf.mxu0
  %v2409 = vadd.f32 %v2390, %v2408
  %2410 = vdwg.mxu0
  %2411 = vmatpush.bf16.msra.mxu0 0
  %2412 = vmatpush.bf16.msra.mxu0 0
  %2413 = vmatpush.bf16.msra.mxu0 0
  %2414 = vmatpush.bf16.msra.mxu0 0
  %2415 = vmatpush.bf16.msra.mxu0 0
  %2416 = vmatpush.bf16.msra.mxu0 0
  %2417 = vmatpush.bf16.msra.mxu0 %v2336
  %2418 = vmatpush.bf16.msra.mxu0 %v2335
  %2419 = vmatmul.bf16.gmra.mxu0 %v2368
  %v2420 = vpop.f32.mrf.mxu0
  %v2421 = vadd.f32 %v2402, %v2420
  %v2422 = vpop.f32.mrf.mxu0
  %v2423 = vadd.f32 %v2404, %v2422
  %2424 = vmatmul.bf16.gmra.mxu0 %v2371
  %v2425 = vpop.f32.mrf.mxu0
  %v2426 = vadd.f32 %v2407, %v2425
  %v2427 = vpop.f32.mrf.mxu0
  %v2428 = vadd.f32 %v2409, %v2427
  %2429 = vdwg.mxu0
  %v2430 = vld [vmem:[%s21] sm:$0xff]
  %v2431 = vld [vmem:[%s21 + $0x8] sm:$0xff]
  %v2432 = vld [vmem:[%s21 + $0x10] sm:$0xff]
  %v2433 = vld [vmem:[%s21 + $0x18] sm:$0xff]
  %v2434 = vld [vmem:[%s22] sm:$0xff]
  %v2435 = vld [vmem:[%s22 + $0x8] sm:$0xff]
  %v2436 = vld [vmem:[%s22 + $0x10] sm:$0xff]
  %v2437 = vld [vmem:[%s22 + $0x18] sm:$0xff]
  %2438 = vadd.xlane.f32.xlu0 %v2421
  %v2439 = vpop.xlane.xlu0 %2438
  %2440 = vadd.xlane.f32.xlu0 %v2423
  %v2441 = vpop.xlane.xlu0 %2440
  %2442 = vadd.xlane.f32.xlu0 %v2426
  %v2443 = vpop.xlane.xlu0 %2442
  %2444 = vadd.xlane.f32.xlu0 %v2428
  %v2445 = vpop.xlane.xlu0 %2444
  %v2446 = vmul.f32 %v2439, 0.0078125
  %v2447 = vmul.f32 %v2441, 0.0078125
  %v2448 = vmul.f32 %v2443, 0.0078125
  %v2449 = vmul.f32 %v2445, 0.0078125
  %v2450 = vmul.f32 %v2421, %v2421
  %v2451 = vmul.f32 %v2423, %v2423
  %v2452 = vmul.f32 %v2426, %v2426
  %v2453 = vmul.f32 %v2428, %v2428
  %2454 = vadd.xlane.f32.xlu0 %v2450
  %v2455 = vpop.xlane.xlu0 %2454
  %2456 = vadd.xlane.f32.xlu0 %v2451
  %v2457 = vpop.xlane.xlu0 %2456
  %2458 = vadd.xlane.f32.xlu0 %v2452
  %v2459 = vpop.xlane.xlu0 %2458
  %2460 = vadd.xlane.f32.xlu0 %v2453
  %v2461 = vpop.xlane.xlu0 %2460
  %v2462 = vmul.f32 %v2455, 0.0078125
  %v2463 = vmul.f32 %v2457, 0.0078125
  %v2464 = vmul.f32 %v2459, 0.0078125
  %v2465 = vmul.f32 %v2461, 0.0078125
  %v2466 = vmul.f32 %v2446, %v2446
  %v2467 = vmul.f32 %v2447, %v2447
  %v2468 = vmul.f32 %v2448, %v2448
  %v2469 = vmul.f32 %v2449, %v2449
  %v2470 = vsub.f32 %v2462, %v2466
  %v2471 = vsub.f32 %v2463, %v2467
  %v2472 = vsub.f32 %v2464, %v2468
  %v2473 = vsub.f32 %v2465, %v2469
  %v2474 = vmax.f32 %v2470, 0.0
  %v2475 = vmax.f32 %v2471, 0.0
  %v2476 = vmax.f32 %v2472, 0.0
  %v2477 = vmax.f32 %v2473, 0.0
  %v2478 = vsub.f32 %v2421, %v2446
  %v2479 = vsub.f32 %v2423, %v2447
  %v2480 = vsub.f32 %v2426, %v2448
  %v2481 = vsub.f32 %v2428, %v2449
  %2483 = vset.pattern.permute.xlu0 0
  %2484 = vperm.xlu0 %2483, %v2430
  %v2485 = vpop.permute.xlu0 %2484
  %2488 = vset.pattern.permute.xlu0 0
  %2489 = vperm.xlu0 %2488, %v2431
  %v2490 = vpop.permute.xlu0 %2489
  %2493 = vset.pattern.permute.xlu0 0
  %2494 = vperm.xlu0 %2493, %v2432
  %v2495 = vpop.permute.xlu0 %2494
  %2498 = vset.pattern.permute.xlu0 0
  %2499 = vperm.xlu0 %2498, %v2433
  %v2500 = vpop.permute.xlu0 %2499
  %v2502 = vmul.f32 %v2485, %v2478
  %v2503 = vmul.f32 %v2490, %v2479
  %v2504 = vmul.f32 %v2495, %v2480
  %v2505 = vmul.f32 %v2500, %v2481
  %v2506 = vadd.f32 %v2474, 1e-05
  %v2507 = vadd.f32 %v2475, 1e-05
  %v2508 = vadd.f32 %v2476, 1e-05
  %v2509 = vadd.f32 %v2477, 1e-05
  %v2510 = vrsqrt.pop %v2506
  %v2511 = vmul.f32 %v2510, %v2506
  %v2512 = vmul.f32 %v2511, %v2510
  %v2513 = vmul.f32 0.5, %v2512
  %v2514 = vsub.f32 1.5, %v2513
  %v2515 = vmul.f32 %v2510, %v2514
  %vm2516 = vweird.f32 %v2506
  %vm2517 = vweird.f32 %v2510
  %vm2518 = vmor %vm2516, %vm2517
  %v2519 = vsel %vm2518, %v2510, %v2515
  %v2520 = vrsqrt.pop %v2507
  %v2521 = vmul.f32 %v2520, %v2507
  %v2522 = vmul.f32 %v2521, %v2520
  %v2523 = vmul.f32 0.5, %v2522
  %v2524 = vsub.f32 1.5, %v2523
  %v2525 = vmul.f32 %v2520, %v2524
  %vm2526 = vweird.f32 %v2507
  %vm2527 = vweird.f32 %v2520
  %vm2528 = vmor %vm2526, %vm2527
  %v2529 = vsel %vm2528, %v2520, %v2525
  %v2530 = vrsqrt.pop %v2508
  %v2531 = vmul.f32 %v2530, %v2508
  %v2532 = vmul.f32 %v2531, %v2530
  %v2533 = vmul.f32 0.5, %v2532
  %v2534 = vsub.f32 1.5, %v2533
  %v2535 = vmul.f32 %v2530, %v2534
  %vm2536 = vweird.f32 %v2508
  %vm2537 = vweird.f32 %v2530
  %vm2538 = vmor %vm2536, %vm2537
  %v2539 = vsel %vm2538, %v2530, %v2535
  %v2540 = vrsqrt.pop %v2509
  %v2541 = vmul.f32 %v2540, %v2509
  %v2542 = vmul.f32 %v2541, %v2540
  %v2543 = vmul.f32 0.5, %v2542
  %v2544 = vsub.f32 1.5, %v2543
  %v2545 = vmul.f32 %v2540, %v2544
  %vm2546 = vweird.f32 %v2509
  %vm2547 = vweird.f32 %v2540
  %vm2548 = vmor %vm2546, %vm2547
  %v2549 = vsel %vm2548, %v2540, %v2545
  %v2550 = vmul.f32 %v2502, %v2519
  %v2551 = vmul.f32 %v2503, %v2529
  %v2552 = vmul.f32 %v2504, %v2539
  %v2553 = vmul.f32 %v2505, %v2549
  %2555 = vset.pattern.permute.xlu0 0
  %2556 = vperm.xlu0 %2555, %v2434
  %v2557 = vpop.permute.xlu0 %2556
  %2560 = vset.pattern.permute.xlu0 0
  %2561 = vperm.xlu0 %2560, %v2435
  %v2562 = vpop.permute.xlu0 %2561
  %2565 = vset.pattern.permute.xlu0 0
  %2566 = vperm.xlu0 %2565, %v2436
  %v2567 = vpop.permute.xlu0 %2566
  %2570 = vset.pattern.permute.xlu0 0
  %2571 = vperm.xlu0 %2570, %v2437
  %v2572 = vpop.permute.xlu0 %2571
  %v2574 = vadd.f32 %v2550, %v2557
  %v2575 = vadd.f32 %v2551, %v2562
  %v2576 = vadd.f32 %v2552, %v2567
  %v2577 = vadd.f32 %v2553, %v2572
  %v2578 = vmax.f32 %v2574, 0.0
  %v2579 = vmax.f32 %v2575, 0.0
  %v2580 = vmax.f32 %v2576, 0.0
  %v2581 = vmax.f32 %v2577, 0.0
  %v2582 = vld [vmem:[%s23] sm:$0x3]
  %v2583 = vpack.c.bf16 %v2579, %v2578
  %v2584 = vpack.c.bf16 %v2581, %v2580
  %v2586 = vsel %vm511, %v2582, 0
  %2588 = vmatpush.bf16.msra.mxu0 0
  %2589 = vmatpush.bf16.msra.mxu0 0
  %2590 = vmatpush.bf16.msra.mxu0 0
  %2591 = vmatpush.bf16.msra.mxu0 0
  %2592 = vmatpush.bf16.msra.mxu0 0
  %2593 = vmatpush.bf16.msra.mxu0 0
  %2594 = vmatpush.bf16.msra.mxu0 %v2584
  %2595 = vmatpush.bf16.msra.mxu0 %v2583
  %2596 = vmatmul.bf16.gmra.mxu0 %v2586
  %v2597 = vpop.f32.mrf.mxu0
  %v2598 = vadd.f32 0.0, %v2597
  %v2599 = vpop.f32.mrf.mxu0
  %2600 = vdwg.mxu0
  %v2601 = vld [vmem:[%s24] sm:$0x7]
  %v2602 = vld [vmem:[%s25] sm:$0x7]
  %vm2603 = vcmask 1042432
  %v2604 = vsel %vm2603, %v2598, 0.0
  %2605 = vadd.xlane.f32.xlu0 %v2604
  %v2606 = vpop.xlane.xlu0 %2605
  %v2607 = vmul.f32 %v2606, 0.0078125
  %v2608 = vmul.f32 %v2598, %v2598
  %v2609 = vsel %vm2603, %v2608, 0.0
  %2610 = vadd.xlane.f32.xlu0 %v2609
  %v2611 = vpop.xlane.xlu0 %2610
  %v2612 = vmul.f32 %v2611, 0.0078125
  %v2613 = vmul.f32 %v2607, %v2607
  %v2614 = vsub.f32 %v2612, %v2613
  %v2615 = vmax.f32 %v2614, 0.0
  %v2616 = vsub.f32 %v2598, %v2607
  %2618 = vset.pattern.permute.xlu0 0
  %2619 = vperm.xlu0 %2618, %v2601
  %v2620 = vpop.permute.xlu0 %2619
  %v2622 = vmul.f32 %v2620, %v2616
  %v2623 = vadd.f32 %v2615, 1e-05
  %v2624 = vrsqrt.pop %v2623
  %v2625 = vmul.f32 %v2624, %v2623
  %v2626 = vmul.f32 %v2625, %v2624
  %v2627 = vmul.f32 0.5, %v2626
  %v2628 = vsub.f32 1.5, %v2627
  %v2629 = vmul.f32 %v2624, %v2628
  %vm2630 = vweird.f32 %v2623
  %vm2631 = vweird.f32 %v2624
  %vm2632 = vmor %vm2630, %vm2631
  %v2633 = vsel %vm2632, %v2624, %v2629
  %v2634 = vmul.f32 %v2622, %v2633
  %2636 = vset.pattern.permute.xlu0 0
  %2637 = vperm.xlu0 %2636, %v2602
  %v2638 = vpop.permute.xlu0 %2637
  %v2640 = vadd.f32 %v2634, %v2638
  %v2641 = vmax.f32 %v2640, 0.0
  %2642 = vst [vmem:[%s26] sm:$0x7] %v2641
  // Predicated region
  $region106: #{net_forward.2} parent=0 // pred_check
    _
  $region107: #{net_forward.2} parent=0 // pred_check_branch
    %2644 = sbr.rel (0) target = $region109
  $region108: #{net_forward.2} parent=0 // pred_region
    _
  $region109: #{net_forward.2} parent=0 // pred_fallthru
    _
  // Predicated region
  $region110: #{net_forward.2} parent=0 // pred_check
    _
  $region111: #{net_forward.2} parent=0 // pred_check_branch
    %2646 = sbr.rel (0) target = $region113
  $region112: #{net_forward.2} parent=0 // pred_region
    _
  $region113: #{net_forward.2} parent=0 // pred_fallthru
    _

</llo_original>
